<compile_context>
chip_gen: v7x
topology: tpu7x:2x2x1
jax: 0.10.0
libtpu: 0.0.40
codegen_flags: <defaults>
</compile_context>

<pallas_src>
import math

import jax
import jax.numpy as jnp
import numpy as np
from jax.experimental import pallas as pl
from jax.experimental.pallas import tpu as pltpu

# ---------------- configuration (small, consistent with the module) ----------------
SEQ_LEN = 8
NUM_FEATURE = 32
NUM_HEAD = 4
D_K = NUM_FEATURE // NUM_HEAD
NUM_HIDDEN = 32
ANCHOR_SCALES = (4, 8)          # even scales -> AvgPool1d output length = seq_len + 1
NUM_SCALES = len(ANCHOR_SCALES)
NPOS = SEQ_LEN * NUM_SCALES     # rows after cat+permute+[:-1], flattened (t, scale)
LN_EPS = 1e-5
LANES = 128

# Batch tile: sequences processed per grid step.  Keep >= 2 grid steps on v7x so
# both TensorCores get work.  VMEM use per step is tiny (a few tens of KiB), far
# below even v5e's 16 MiB scoped default, so no vmem_limit_bytes override needed.
B_TILE = 4

# -------- bf16 matmul-weight slab layout (rows x 128 lanes) --------
R_WQK = 0                           # (F, 2F)  [W_q / sqrt(d_k) | W_k]
R_WVFC = R_WQK + NUM_FEATURE        # (F, H*F) per-head W_v,h @ W_fc,h  (128 lanes)
R_W1 = R_WVFC + NUM_FEATURE         # (F, NUM_HIDDEN)
R_WHEAD = R_W1 + NUM_FEATURE        # (NUM_HIDDEN, 128) ln2-folded cls/loc head
WSLAB_ROWS = R_WHEAD + NUM_HIDDEN   # 128  (multiple of 16 -> clean bf16 sublane tiling)

# -------- f32 slab: block-diagonal pooling matrix + LN/bias vectors --------
R_PPOOL = 0                         # (B_TILE*NPOS, B_TILE*SEQ_LEN)
R_PTAIL = R_PPOOL + B_TILE * NPOS   # rows: ln1_g, ln1_b, b1, bhead_eff, pad
PSLAB_ROWS = R_PTAIL + 8            # 72 (multiple of 8 for f32)


def _pool_matrix(seq_len, scales):
    """P[(t*num_scales + i), s] implements AvgPool1d(scale_i, stride=1, pad=scale_i//2,
    count_include_pad=True) evaluated at output position t (the [:-1] crop keeps
    t in [0, seq_len))."""
    P = np.zeros((seq_len * len(scales), seq_len), dtype=np.float32)
    for t in range(seq_len):
        for i, sc in enumerate(scales):
            pad = sc // 2
            row = t * len(scales) + i
            for k in range(sc):
                idx = t - pad + k
                if 0 <= idx < seq_len:
                    P[row, idx] = 1.0 / sc
    return P


# ------------------------------- Pallas kernel --------------------------------------
def dsnet_kernel(x_ref, wslab_ref, pslab_ref, out_ref):
    BT, S, F, H, dk, Hh = B_TILE, SEQ_LEN, NUM_FEATURE, NUM_HEAD, D_K, NUM_HIDDEN

    x = x_ref[...]                                                # (BT, S, F) f32
    x2d_bf = x.reshape(BT * S, F).astype(jnp.bfloat16)

    # --- static views into the packed slabs (no per-parameter DMAs) ---
    w_qk = wslab_ref[R_WQK:R_WQK + F, 0:2 * F]                    # (F, 64) bf16
    w_vfc = wslab_ref[R_WVFC:R_WVFC + F, :]                       # (F, 128) bf16
    w1 = wslab_ref[R_W1:R_W1 + F, 0:Hh]                           # (F, Hh) bf16
    whead = wslab_ref[R_WHEAD:R_WHEAD + Hh, :]                    # (Hh, 128) bf16
    pool = pslab_ref[R_PPOOL:R_PPOOL + BT * NPOS, 0:BT * S]       # (BT*NPOS, BT*S) f32
    ln1_g = pslab_ref[R_PTAIL + 0:R_PTAIL + 1, 0:F]
    ln1_b = pslab_ref[R_PTAIL + 1:R_PTAIL + 2, 0:F]
    b1 = pslab_ref[R_PTAIL + 2:R_PTAIL + 3, 0:Hh]
    bhead = pslab_ref[R_PTAIL + 3:R_PTAIL + 4, :]                 # (1, 128)

    # --- fused projections: two lane-dense 2-D bf16 MXU matmuls (f32 accumulate) ---
    qk = jnp.dot(x2d_bf, w_qk, preferred_element_type=jnp.float32)    # (BT*S, 2F)
    vfc = jnp.dot(x2d_bf, w_vfc, preferred_element_type=jnp.float32)  # (BT*S, H*F)
    qk3 = qk.reshape(BT, S, 2 * F)
    vfc3 = vfc.reshape(BT, S, H * F)

    # --- per-head scaled-dot-product attention, batched over the B_TILE axis.
    # Head slices are static lane slices at multiples of d_k=8; the 1/sqrt(d_k)
    # scale is already folded into W_q.  y = sum_h attn_h @ (x @ Wv_h @ Wfc_h).
    y = jnp.zeros((BT, S, F), jnp.float32)
    for h in range(H):
        q_h = qk3[:, :, h * dk:(h + 1) * dk]                          # (BT, S, dk)
        k_h = qk3[:, :, F + h * dk:F + (h + 1) * dk]                  # (BT, S, dk)
        s = jnp.einsum('bqd,bkd->bqk', q_h, k_h,
                       preferred_element_type=jnp.float32)            # (BT, S, S)
        s = s - jnp.max(s, axis=-1, keepdims=True)
        p = jnp.exp(s)
        p = p * pl.reciprocal(jnp.sum(p, axis=-1, keepdims=True), approx=True)
        v_h = vfc3[:, :, h * F:(h + 1) * F]                           # (BT, S, F)
        y = y + jnp.einsum('bqk,bkg->bqg', p, v_h,
                           preferred_element_type=jnp.float32)

    # --- residual + LayerNorm(num_feature), f32 vector math ---
    out = y + x
    mu = jnp.mean(out, axis=-1, keepdims=True)
    var = jnp.mean(jnp.square(out - mu), axis=-1, keepdims=True)
    out = (out - mu) * jax.lax.rsqrt(var + LN_EPS) * ln1_g + ln1_b
    out2d = out.reshape(BT * S, F)

    # --- all AvgPool1d ROI poolings for the whole tile: one block-diagonal matmul ---
    pooled = jnp.dot(pool, out2d, preferred_element_type=jnp.float32)  # (BT*NPOS, F)

    # --- fc1: Linear -> Tanh -> (Dropout=id) -> LayerNorm (affine folded into head) ---
    h1 = jnp.tanh(jnp.dot(pooled.astype(jnp.bfloat16), w1,
                          preferred_element_type=jnp.float32) + b1)
    mu2 = jnp.mean(h1, axis=-1, keepdims=True)
    var2 = jnp.mean(jnp.square(h1 - mu2), axis=-1, keepdims=True)
    h1n = (h1 - mu2) * jax.lax.rsqrt(var2 + LN_EPS)

    # --- fused cls/loc heads (LN2 gamma/beta + biases folded), lane-dense store.
    # Sigmoid on the single cls lane is applied in the wrapper, not on 128 lanes.
    heads = jnp.dot(h1n.astype(jnp.bfloat16), whead,
                    preferred_element_type=jnp.float32) + bhead        # (BT*NPOS, 128)
    out_ref[...] = heads.reshape(BT, NPOS, LANES)


# ------------------------------- wrapper ---------------------------------------------
def dsnet_forward(x, wslab, pslab):
    """x: (B, seq_len, num_feature) -> (pred_cls (B,S,num_scales),
    pred_loc (B,S,num_scales,2)); each batch row matches the PyTorch DSNet.forward."""
    B = x.shape[0]
    n_blocks = -(-B // B_TILE)
    Bp = n_blocks * B_TILE
    if Bp != B:
        x = jnp.pad(x, ((0, Bp - B), (0, 0), (0, 0)))
    out = pl.pallas_call(
        dsnet_kernel,
        out_shape=jax.ShapeDtypeStruct((Bp, NPOS, LANES), jnp.float32),
        grid=(n_blocks,),
        in_specs=[
            pl.BlockSpec((B_TILE, SEQ_LEN, NUM_FEATURE), lambda b: (b, 0, 0)),
            pl.BlockSpec((WSLAB_ROWS, LANES), lambda b: (0, 0)),
            pl.BlockSpec((PSLAB_ROWS, LANES), lambda b: (0, 0)),
        ],
        out_specs=pl.BlockSpec((B_TILE, NPOS, LANES), lambda b: (b, 0, 0)),
        compiler_params=pltpu.CompilerParams(dimension_semantics=("parallel",)),
    )(x, wslab, pslab)
    out = out[:B]
    pred_cls = jax.nn.sigmoid(out[:, :, 0]).reshape(B, SEQ_LEN, NUM_SCALES)
    pred_loc = out[:, :, 1:3].reshape(B, SEQ_LEN, NUM_SCALES, 2)
    return pred_cls, pred_loc


# ------------------------ host-side parameter folding / packing -----------------------
def pack_params(p):
    F, H, dk, Hh = NUM_FEATURE, NUM_HEAD, D_K, NUM_HIDDEN
    wq = np.asarray(p["wq_t"], np.float32)
    wk = np.asarray(p["wk_t"], np.float32)
    wv = np.asarray(p["wv_t"], np.float32)
    wfc = np.asarray(p["wfc_t"], np.float32)
    w1 = np.asarray(p["w1_t"], np.float32)
    ln1_g = np.asarray(p["ln1_g"], np.float32)
    ln1_b = np.asarray(p["ln1_b"], np.float32)
    b1 = np.asarray(p["b1"], np.float32)
    ln2_g = np.asarray(p["ln2_g"], np.float32)
    ln2_b = np.asarray(p["ln2_b"], np.float32)
    wcls = np.asarray(p["wcls_t"], np.float32)
    bcls = np.asarray(p["bcls"], np.float32)
    wloc = np.asarray(p["wloc_t"], np.float32)
    bloc = np.asarray(p["bloc"], np.float32)

    # W_qk = [ W_q / sqrt(d_k)  |  W_k ]   (softmax scale folded into W_q)
    w_qk = np.concatenate([wq / math.sqrt(dk), wk], axis=1)            # (F, 2F)

    # W_vfc: per-head fold W_v,h @ W_fc,h -> (F, H*F) = 128 lanes (lane-dense)
    w_vfc = np.zeros((F, H * F), np.float32)
    for h in range(H):
        sl = slice(h * dk, (h + 1) * dk)
        w_vfc[:, h * F:(h + 1) * F] = wv[:, sl] @ wfc[sl, :]

    # LayerNorm-2 affine + head biases folded into one fused head matrix
    whead_cat = np.concatenate([wcls, wloc], axis=1)                   # (Hh, 3)
    whead_eff = ln2_g[:, None] * whead_cat                             # (Hh, 3)
    bhead_eff = ln2_b[None, :] @ whead_cat + np.concatenate([bcls, bloc])[None, :]

    wslab = np.zeros((WSLAB_ROWS, LANES), np.float32)
    wslab[R_WQK:R_WQK + F, 0:2 * F] = w_qk
    wslab[R_WVFC:R_WVFC + F, :] = w_vfc
    wslab[R_W1:R_W1 + F, 0:Hh] = w1
    wslab[R_WHEAD:R_WHEAD + Hh, 0:3] = whead_eff

    # f32 slab: block-diagonal pooling matrix for one B_TILE block + vector params
    pool_big = np.kron(np.eye(B_TILE, dtype=np.float32),
                       _pool_matrix(SEQ_LEN, ANCHOR_SCALES))           # (BT*NPOS, BT*S)
    pslab = np.zeros((PSLAB_ROWS, LANES), np.float32)
    pslab[R_PPOOL:R_PPOOL + B_TILE * NPOS, 0:B_TILE * SEQ_LEN] = pool_big
    pslab[R_PTAIL + 0, 0:F] = ln1_g
    pslab[R_PTAIL + 1, 0:F] = ln1_b
    pslab[R_PTAIL + 2, 0:Hh] = b1
    pslab[R_PTAIL + 3, 0:3] = bhead_eff[0]
    return jnp.asarray(wslab, dtype=jnp.bfloat16), jnp.asarray(pslab)


# ------------------------ pure-JAX reference (raw, unfolded params, f32) --------------
def dsnet_reference_single(x2d, p):
    q = x2d @ p["wq_t"]; k = x2d @ p["wk_t"]; v = x2d @ p["wv_t"]
    outs = []
    for h in range(NUM_HEAD):
        sl = slice(h * D_K, (h + 1) * D_K)
        a = (q[:, sl] @ k[:, sl].T) / math.sqrt(D_K)
        a = jax.nn.softmax(a, axis=-1)
        outs.append(a @ v[:, sl])
    y = jnp.concatenate(outs, axis=-1) @ p["wfc_t"]
    out = y + x2d
    mu = out.mean(-1, keepdims=True); var = ((out - mu) ** 2).mean(-1, keepdims=True)
    out = (out - mu) / jnp.sqrt(var + LN_EPS) * p["ln1_g"] + p["ln1_b"]
    pooled = jnp.asarray(_pool_matrix(SEQ_LEN, ANCHOR_SCALES)) @ out
    h1 = jnp.tanh(pooled @ p["w1_t"] + p["b1"])
    mu2 = h1.mean(-1, keepdims=True); var2 = ((h1 - mu2) ** 2).mean(-1, keepdims=True)
    h1 = (h1 - mu2) / jnp.sqrt(var2 + LN_EPS) * p["ln2_g"] + p["ln2_b"]
    cls = jax.nn.sigmoid(h1 @ p["wcls_t"] + p["bcls"]).reshape(SEQ_LEN, NUM_SCALES)
    loc = (h1 @ p["wloc_t"] + p["bloc"]).reshape(SEQ_LEN, NUM_SCALES, 2)
    return cls, loc


def init_params(key):
    ks = jax.random.split(key, 8)
    s = 0.05
    return {
        "wq_t": jax.random.normal(ks[0], (NUM_FEATURE, NUM_FEATURE), jnp.float32) * s,
        "wk_t": jax.random.normal(ks[1], (NUM_FEATURE, NUM_FEATURE), jnp.float32) * s,
        "wv_t": jax.random.normal(ks[2], (NUM_FEATURE, NUM_FEATURE), jnp.float32) * s,
        "wfc_t": jax.random.normal(ks[3], (NUM_FEATURE, NUM_FEATURE), jnp.float32) * s,
        "ln1_g": jnp.ones((NUM_FEATURE,), jnp.float32),
        "ln1_b": jnp.zeros((NUM_FEATURE,), jnp.float32),
        "w1_t": jax.random.normal(ks[4], (NUM_FEATURE, NUM_HIDDEN), jnp.float32) * s,
        "b1": jax.random.normal(ks[5], (NUM_HIDDEN,), jnp.float32) * s,
        "ln2_g": jnp.ones((NUM_HIDDEN,), jnp.float32),
        "ln2_b": jnp.zeros((NUM_HIDDEN,), jnp.float32),
        "wcls_t": jax.random.normal(ks[6], (NUM_HIDDEN, 1), jnp.float32) * s,
        "bcls": jnp.zeros((1,), jnp.float32),
        "wloc_t": jax.random.normal(ks[7], (NUM_HIDDEN, 2), jnp.float32) * s,
        "bloc": jnp.zeros((2,), jnp.float32),
    }


if __name__ == "__main__":
    key = jax.random.PRNGKey(0)
    kx, kp = jax.random.split(key)
    B = 8                                     # 8 sequences -> 2 grid steps of B_TILE=4
    x = jax.random.normal(kx, (B, SEQ_LEN, NUM_FEATURE), jnp.float32)
    params = init_params(kp)
    wslab, pslab = pack_params(params)        # one-time host-side fold + pack

    fwd = jax.jit(dsnet_forward)
    pred_cls, pred_loc = fwd(x, wslab, pslab)
    jax.block_until_ready((pred_cls, pred_loc))

    assert pred_cls.shape == (B, SEQ_LEN, NUM_SCALES)
    assert pred_loc.shape == (B, SEQ_LEN, NUM_SCALES, 2)
    for b in range(B):
        ref_cls, ref_loc = dsnet_reference_single(x[b], params)
        # tolerance accounts for bf16 matmul operands + approx softmax reciprocal
        np.testing.assert_allclose(np.asarray(pred_cls[b]), np.asarray(ref_cls),
                                   rtol=1e-2, atol=1e-2)
        np.testing.assert_allclose(np.asarray(pred_loc[b]), np.asarray(ref_loc),
                                   rtol=1e-2, atol=1e-2)

    print("KERNEL_OK")
</pallas_src>

<mosaic_0001>
module attributes {stable_mosaic.version = 11 : i64} {
  func.func @dsnet_kernel(%arg0: i32, %arg1: memref<4x8x32xf32, #tpu.memory_space<vmem>>, %arg2: memref<128x128xbf16, #tpu.memory_space<vmem>>, %arg3: memref<72x128xf32, #tpu.memory_space<vmem>>, %arg4: memref<4x16x128xf32, #tpu.memory_space<vmem>>) attributes {dimension_semantics = [#tpu.dimension_semantics<parallel>], iteration_bounds = array<i64: 2>, scalar_prefetch = 0 : i64, scratch_operands = 0 : i64, tpu.core_type = #tpu.core_type<tc>, window_params = [{transform_indices = @transform_0, window_bounds = array<i64: 4, 8, 32>}, {pipeline_mode = #tpu.pipeline_mode<synchronous>, transform_indices = @transform_1, window_bounds = array<i64: 128, 128>}, {pipeline_mode = #tpu.pipeline_mode<synchronous>, transform_indices = @transform_2, window_bounds = array<i64: 72, 128>}, {transform_indices = @transform_3, window_bounds = array<i64: 4, 16, 128>}]} {
    %c0 = arith.constant 0 : index
    %c0_0 = arith.constant 0 : index
    %c0_1 = arith.constant 0 : index
    %0 = vector.load %arg1[%c0, %c0_0, %c0_1] : memref<4x8x32xf32, #tpu.memory_space<vmem>>, vector<4x8x32xf32>
    %1 = vector.shape_cast %0 : vector<4x8x32xf32> to vector<32x32xf32>
    %2 = arith.truncf %1 : vector<32x32xf32> to vector<32x32xbf16>
    %c0_2 = arith.constant 0 : index
    %c0_3 = arith.constant 0 : index
    %3 = vector.load %arg2[%c0_2, %c0_3] : memref<128x128xbf16, #tpu.memory_space<vmem>>, vector<32x64xbf16>
    %c32 = arith.constant 32 : index
    %c0_4 = arith.constant 0 : index
    %4 = vector.load %arg2[%c32, %c0_4] : memref<128x128xbf16, #tpu.memory_space<vmem>>, vector<32x128xbf16>
    %c64 = arith.constant 64 : index
    %c0_5 = arith.constant 0 : index
    %5 = vector.load %arg2[%c64, %c0_5] : memref<128x128xbf16, #tpu.memory_space<vmem>>, vector<32x32xbf16>
    %c96 = arith.constant 96 : index
    %c0_6 = arith.constant 0 : index
    %6 = vector.load %arg2[%c96, %c0_6] : memref<128x128xbf16, #tpu.memory_space<vmem>>, vector<32x128xbf16>
    %c0_7 = arith.constant 0 : index
    %c0_8 = arith.constant 0 : index
    %7 = vector.load %arg3[%c0_7, %c0_8] : memref<72x128xf32, #tpu.memory_space<vmem>>, vector<64x32xf32>
    %c64_9 = arith.constant 64 : index
    %c0_10 = arith.constant 0 : index
    %8 = vector.load %arg3[%c64_9, %c0_10] : memref<72x128xf32, #tpu.memory_space<vmem>>, vector<1x32xf32>
    %c65 = arith.constant 65 : index
    %c0_11 = arith.constant 0 : index
    %9 = vector.load %arg3[%c65, %c0_11] : memref<72x128xf32, #tpu.memory_space<vmem>>, vector<1x32xf32>
    %c66 = arith.constant 66 : index
    %c0_12 = arith.constant 0 : index
    %10 = vector.load %arg3[%c66, %c0_12] : memref<72x128xf32, #tpu.memory_space<vmem>>, vector<1x32xf32>
    %c67 = arith.constant 67 : index
    %c0_13 = arith.constant 0 : index
    %11 = vector.load %arg3[%c67, %c0_13] : memref<72x128xf32, #tpu.memory_space<vmem>>, vector<1x128xf32>
    %cst = arith.constant dense<0.000000e+00> : vector<32x64xf32>
    %12 = tpu.matmul %2, %3, %cst {dimension_numbers = #tpu.dot_dimension_numbers<[1], [0], [0], [1], [0, 0, 1, 1], [], []>} : vector<32x32xbf16>, vector<32x64xbf16>, vector<32x64xf32> -> vector<32x64xf32>
    %cst_14 = arith.constant dense<0.000000e+00> : vector<32x128xf32>
    %13 = tpu.matmul %2, %4, %cst_14 {dimension_numbers = #tpu.dot_dimension_numbers<[1], [0], [0], [1], [0, 0, 1, 1], [], []>} : vector<32x32xbf16>, vector<32x128xbf16>, vector<32x128xf32> -> vector<32x128xf32>
    %14 = vector.shape_cast %12 : vector<32x64xf32> to vector<4x8x64xf32>
    %15 = vector.shape_cast %13 : vector<32x128xf32> to vector<4x8x128xf32>
    %cst_15 = arith.constant 0.000000e+00 : f32
    %16 = vector.broadcast %cst_15 : f32 to vector<4x8x32xf32>
    %17 = vector.extract_strided_slice %14 {offsets = [0, 0, 0], sizes = [4, 8, 8], strides = [1, 1, 1]} : vector<4x8x64xf32> to vector<4x8x8xf32>
    %18 = vector.extract_strided_slice %14 {offsets = [0, 0, 32], sizes = [4, 8, 8], strides = [1, 1, 1]} : vector<4x8x64xf32> to vector<4x8x8xf32>
    "tpu.trace_start"() <{level = 10 : i32, message = "bqd,bkd->bqk"}> : () -> ()
    %cst_16 = arith.constant dense<0.000000e+00> : vector<4x8x8xf32>
    %19 = tpu.matmul %17, %18, %cst_16 {dimension_numbers = #tpu.dot_dimension_numbers<[2], [2], [1], [1], [0, 0, 0, 1, 1, 1], [0], [0]>} : vector<4x8x8xf32>, vector<4x8x8xf32>, vector<4x8x8xf32> -> vector<4x8x8xf32>
    "tpu.trace_stop"() : () -> ()
    %cst_17 = arith.constant dense<0xFF800000> : vector<4x8xf32>
    %20 = vector.multi_reduction <maximumf>, %19, %cst_17 [2] : vector<4x8x8xf32> to vector<4x8xf32>
    %21 = vector.shape_cast %20 : vector<4x8xf32> to vector<4x8x1xf32>
    %22 = vector.broadcast %21 : vector<4x8x1xf32> to vector<4x8x8xf32>
    %23 = arith.subf %19, %22 : vector<4x8x8xf32>
    %24 = math.exp %23 : vector<4x8x8xf32>
    %cst_18 = arith.constant dense<0.000000e+00> : vector<4x8xf32>
    %25 = vector.multi_reduction <add>, %24, %cst_18 [2] : vector<4x8x8xf32> to vector<4x8xf32>
    %26 = vector.shape_cast %25 : vector<4x8xf32> to vector<4x8x1xf32>
    %27 = tpu.reciprocal %26 {approx = true} : vector<4x8x1xf32> -> vector<4x8x1xf32>
    %28 = vector.broadcast %27 : vector<4x8x1xf32> to vector<4x8x8xf32>
    %29 = arith.mulf %24, %28 : vector<4x8x8xf32>
    %30 = vector.extract_strided_slice %15 {offsets = [0, 0, 0], sizes = [4, 8, 32], strides = [1, 1, 1]} : vector<4x8x128xf32> to vector<4x8x32xf32>
    "tpu.trace_start"() <{level = 10 : i32, message = "bqk,bkg->bqg"}> : () -> ()
    %cst_19 = arith.constant dense<0.000000e+00> : vector<4x8x32xf32>
    %31 = tpu.matmul %29, %30, %cst_19 {dimension_numbers = #tpu.dot_dimension_numbers<[2], [1], [1], [2], [0, 0, 0, 1, 1, 2], [0], [0]>} : vector<4x8x8xf32>, vector<4x8x32xf32>, vector<4x8x32xf32> -> vector<4x8x32xf32>
    "tpu.trace_stop"() : () -> ()
    %32 = arith.addf %16, %31 : vector<4x8x32xf32>
    %33 = vector.extract_strided_slice %14 {offsets = [0, 0, 8], sizes = [4, 8, 8], strides = [1, 1, 1]} : vector<4x8x64xf32> to vector<4x8x8xf32>
    %34 = vector.extract_strided_slice %14 {offsets = [0, 0, 40], sizes = [4, 8, 8], strides = [1, 1, 1]} : vector<4x8x64xf32> to vector<4x8x8xf32>
    "tpu.trace_start"() <{level = 10 : i32, message = "bqd,bkd->bqk"}> : () -> ()
    %cst_20 = arith.constant dense<0.000000e+00> : vector<4x8x8xf32>
    %35 = tpu.matmul %33, %34, %cst_20 {dimension_numbers = #tpu.dot_dimension_numbers<[2], [2], [1], [1], [0, 0, 0, 1, 1, 1], [0], [0]>} : vector<4x8x8xf32>, vector<4x8x8xf32>, vector<4x8x8xf32> -> vector<4x8x8xf32>
    "tpu.trace_stop"() : () -> ()
    %cst_21 = arith.constant dense<0xFF800000> : vector<4x8xf32>
    %36 = vector.multi_reduction <maximumf>, %35, %cst_21 [2] : vector<4x8x8xf32> to vector<4x8xf32>
    %37 = vector.shape_cast %36 : vector<4x8xf32> to vector<4x8x1xf32>
    %38 = vector.broadcast %37 : vector<4x8x1xf32> to vector<4x8x8xf32>
    %39 = arith.subf %35, %38 : vector<4x8x8xf32>
    %40 = math.exp %39 : vector<4x8x8xf32>
    %cst_22 = arith.constant dense<0.000000e+00> : vector<4x8xf32>
    %41 = vector.multi_reduction <add>, %40, %cst_22 [2] : vector<4x8x8xf32> to vector<4x8xf32>
    %42 = vector.shape_cast %41 : vector<4x8xf32> to vector<4x8x1xf32>
    %43 = tpu.reciprocal %42 {approx = true} : vector<4x8x1xf32> -> vector<4x8x1xf32>
    %44 = vector.broadcast %43 : vector<4x8x1xf32> to vector<4x8x8xf32>
    %45 = arith.mulf %40, %44 : vector<4x8x8xf32>
    %46 = vector.extract_strided_slice %15 {offsets = [0, 0, 32], sizes = [4, 8, 32], strides = [1, 1, 1]} : vector<4x8x128xf32> to vector<4x8x32xf32>
    "tpu.trace_start"() <{level = 10 : i32, message = "bqk,bkg->bqg"}> : () -> ()
    %cst_23 = arith.constant dense<0.000000e+00> : vector<4x8x32xf32>
    %47 = tpu.matmul %45, %46, %cst_23 {dimension_numbers = #tpu.dot_dimension_numbers<[2], [1], [1], [2], [0, 0, 0, 1, 1, 2], [0], [0]>} : vector<4x8x8xf32>, vector<4x8x32xf32>, vector<4x8x32xf32> -> vector<4x8x32xf32>
    "tpu.trace_stop"() : () -> ()
    %48 = arith.addf %32, %47 : vector<4x8x32xf32>
    %49 = vector.extract_strided_slice %14 {offsets = [0, 0, 16], sizes = [4, 8, 8], strides = [1, 1, 1]} : vector<4x8x64xf32> to vector<4x8x8xf32>
    %50 = vector.extract_strided_slice %14 {offsets = [0, 0, 48], sizes = [4, 8, 8], strides = [1, 1, 1]} : vector<4x8x64xf32> to vector<4x8x8xf32>
    "tpu.trace_start"() <{level = 10 : i32, message = "bqd,bkd->bqk"}> : () -> ()
    %cst_24 = arith.constant dense<0.000000e+00> : vector<4x8x8xf32>
    %51 = tpu.matmul %49, %50, %cst_24 {dimension_numbers = #tpu.dot_dimension_numbers<[2], [2], [1], [1], [0, 0, 0, 1, 1, 1], [0], [0]>} : vector<4x8x8xf32>, vector<4x8x8xf32>, vector<4x8x8xf32> -> vector<4x8x8xf32>
    "tpu.trace_stop"() : () -> ()
    %cst_25 = arith.constant dense<0xFF800000> : vector<4x8xf32>
    %52 = vector.multi_reduction <maximumf>, %51, %cst_25 [2] : vector<4x8x8xf32> to vector<4x8xf32>
    %53 = vector.shape_cast %52 : vector<4x8xf32> to vector<4x8x1xf32>
    %54 = vector.broadcast %53 : vector<4x8x1xf32> to vector<4x8x8xf32>
    %55 = arith.subf %51, %54 : vector<4x8x8xf32>
    %56 = math.exp %55 : vector<4x8x8xf32>
    %cst_26 = arith.constant dense<0.000000e+00> : vector<4x8xf32>
    %57 = vector.multi_reduction <add>, %56, %cst_26 [2] : vector<4x8x8xf32> to vector<4x8xf32>
    %58 = vector.shape_cast %57 : vector<4x8xf32> to vector<4x8x1xf32>
    %59 = tpu.reciprocal %58 {approx = true} : vector<4x8x1xf32> -> vector<4x8x1xf32>
    %60 = vector.broadcast %59 : vector<4x8x1xf32> to vector<4x8x8xf32>
    %61 = arith.mulf %56, %60 : vector<4x8x8xf32>
    %62 = vector.extract_strided_slice %15 {offsets = [0, 0, 64], sizes = [4, 8, 32], strides = [1, 1, 1]} : vector<4x8x128xf32> to vector<4x8x32xf32>
    "tpu.trace_start"() <{level = 10 : i32, message = "bqk,bkg->bqg"}> : () -> ()
    %cst_27 = arith.constant dense<0.000000e+00> : vector<4x8x32xf32>
    %63 = tpu.matmul %61, %62, %cst_27 {dimension_numbers = #tpu.dot_dimension_numbers<[2], [1], [1], [2], [0, 0, 0, 1, 1, 2], [0], [0]>} : vector<4x8x8xf32>, vector<4x8x32xf32>, vector<4x8x32xf32> -> vector<4x8x32xf32>
    "tpu.trace_stop"() : () -> ()
    %64 = arith.addf %48, %63 : vector<4x8x32xf32>
    %65 = vector.extract_strided_slice %14 {offsets = [0, 0, 24], sizes = [4, 8, 8], strides = [1, 1, 1]} : vector<4x8x64xf32> to vector<4x8x8xf32>
    %66 = vector.extract_strided_slice %14 {offsets = [0, 0, 56], sizes = [4, 8, 8], strides = [1, 1, 1]} : vector<4x8x64xf32> to vector<4x8x8xf32>
    "tpu.trace_start"() <{level = 10 : i32, message = "bqd,bkd->bqk"}> : () -> ()
    %cst_28 = arith.constant dense<0.000000e+00> : vector<4x8x8xf32>
    %67 = tpu.matmul %65, %66, %cst_28 {dimension_numbers = #tpu.dot_dimension_numbers<[2], [2], [1], [1], [0, 0, 0, 1, 1, 1], [0], [0]>} : vector<4x8x8xf32>, vector<4x8x8xf32>, vector<4x8x8xf32> -> vector<4x8x8xf32>
    "tpu.trace_stop"() : () -> ()
    %cst_29 = arith.constant dense<0xFF800000> : vector<4x8xf32>
    %68 = vector.multi_reduction <maximumf>, %67, %cst_29 [2] : vector<4x8x8xf32> to vector<4x8xf32>
    %69 = vector.shape_cast %68 : vector<4x8xf32> to vector<4x8x1xf32>
    %70 = vector.broadcast %69 : vector<4x8x1xf32> to vector<4x8x8xf32>
    %71 = arith.subf %67, %70 : vector<4x8x8xf32>
    %72 = math.exp %71 : vector<4x8x8xf32>
    %cst_30 = arith.constant dense<0.000000e+00> : vector<4x8xf32>
    %73 = vector.multi_reduction <add>, %72, %cst_30 [2] : vector<4x8x8xf32> to vector<4x8xf32>
    %74 = vector.shape_cast %73 : vector<4x8xf32> to vector<4x8x1xf32>
    %75 = tpu.reciprocal %74 {approx = true} : vector<4x8x1xf32> -> vector<4x8x1xf32>
    %76 = vector.broadcast %75 : vector<4x8x1xf32> to vector<4x8x8xf32>
    %77 = arith.mulf %72, %76 : vector<4x8x8xf32>
    %78 = vector.extract_strided_slice %15 {offsets = [0, 0, 96], sizes = [4, 8, 32], strides = [1, 1, 1]} : vector<4x8x128xf32> to vector<4x8x32xf32>
    "tpu.trace_start"() <{level = 10 : i32, message = "bqk,bkg->bqg"}> : () -> ()
    %cst_31 = arith.constant dense<0.000000e+00> : vector<4x8x32xf32>
    %79 = tpu.matmul %77, %78, %cst_31 {dimension_numbers = #tpu.dot_dimension_numbers<[2], [1], [1], [2], [0, 0, 0, 1, 1, 2], [0], [0]>} : vector<4x8x8xf32>, vector<4x8x32xf32>, vector<4x8x32xf32> -> vector<4x8x32xf32>
    "tpu.trace_stop"() : () -> ()
    %80 = arith.addf %64, %79 : vector<4x8x32xf32>
    %81 = arith.addf %80, %0 : vector<4x8x32xf32>
    %cst_32 = arith.constant dense<0.000000e+00> : vector<4x8xf32>
    %82 = vector.multi_reduction <add>, %81, %cst_32 [2] : vector<4x8x32xf32> to vector<4x8xf32>
    %83 = vector.shape_cast %82 : vector<4x8xf32> to vector<4x8x1xf32>
    %cst_33 = arith.constant 3.200000e+01 : f32
    %84 = vector.broadcast %cst_33 : f32 to vector<4x8x1xf32>
    %85 = arith.divf %83, %84 : vector<4x8x1xf32>
    %86 = vector.broadcast %85 : vector<4x8x1xf32> to vector<4x8x32xf32>
    %87 = arith.subf %81, %86 : vector<4x8x32xf32>
    %88 = arith.mulf %87, %87 : vector<4x8x32xf32>
    %cst_34 = arith.constant dense<0.000000e+00> : vector<4x8xf32>
    %89 = vector.multi_reduction <add>, %88, %cst_34 [2] : vector<4x8x32xf32> to vector<4x8xf32>
    %90 = vector.shape_cast %89 : vector<4x8xf32> to vector<4x8x1xf32>
    %cst_35 = arith.constant 3.200000e+01 : f32
    %91 = vector.broadcast %cst_35 : f32 to vector<4x8x1xf32>
    %92 = arith.divf %90, %91 : vector<4x8x1xf32>
    %93 = vector.broadcast %85 : vector<4x8x1xf32> to vector<4x8x32xf32>
    %94 = arith.subf %81, %93 : vector<4x8x32xf32>
    %cst_36 = arith.constant 9.99999974E-6 : f32
    %95 = vector.broadcast %cst_36 : f32 to vector<4x8x1xf32>
    %96 = arith.addf %92, %95 : vector<4x8x1xf32>
    %97 = math.rsqrt %96 : vector<4x8x1xf32>
    %98 = vector.broadcast %97 : vector<4x8x1xf32> to vector<4x8x32xf32>
    %99 = arith.mulf %94, %98 : vector<4x8x32xf32>
    %100 = vector.shape_cast %8 : vector<1x32xf32> to vector<1x1x32xf32>
    %101 = vector.broadcast %100 : vector<1x1x32xf32> to vector<4x8x32xf32>
    %102 = arith.mulf %99, %101 : vector<4x8x32xf32>
    %103 = vector.shape_cast %9 : vector<1x32xf32> to vector<1x1x32xf32>
    %104 = vector.broadcast %103 : vector<1x1x32xf32> to vector<4x8x32xf32>
    %105 = arith.addf %102, %104 : vector<4x8x32xf32>
    %106 = vector.shape_cast %105 : vector<4x8x32xf32> to vector<32x32xf32>
    %cst_37 = arith.constant dense<0.000000e+00> : vector<64x32xf32>
    %107 = tpu.matmul %7, %106, %cst_37 {dimension_numbers = #tpu.dot_dimension_numbers<[1], [0], [0], [1], [0, 0, 1, 1], [], []>} : vector<64x32xf32>, vector<32x32xf32>, vector<64x32xf32> -> vector<64x32xf32>
    %108 = arith.truncf %107 : vector<64x32xf32> to vector<64x32xbf16>
    %cst_38 = arith.constant dense<0.000000e+00> : vector<64x32xf32>
    %109 = tpu.matmul %108, %5, %cst_38 {dimension_numbers = #tpu.dot_dimension_numbers<[1], [0], [0], [1], [0, 0, 1, 1], [], []>} : vector<64x32xbf16>, vector<32x32xbf16>, vector<64x32xf32> -> vector<64x32xf32>
    %110 = vector.broadcast %10 : vector<1x32xf32> to vector<64x32xf32>
    %111 = arith.addf %109, %110 : vector<64x32xf32>
    %112 = math.tanh %111 : vector<64x32xf32>
    %cst_39 = arith.constant dense<0.000000e+00> : vector<64xf32>
    %113 = vector.multi_reduction <add>, %112, %cst_39 [1] : vector<64x32xf32> to vector<64xf32>
    %114 = vector.shape_cast %113 : vector<64xf32> to vector<64x1xf32>
    %cst_40 = arith.constant 3.200000e+01 : f32
    %115 = vector.broadcast %cst_40 : f32 to vector<64x1xf32>
    %116 = arith.divf %114, %115 : vector<64x1xf32>
    %117 = vector.broadcast %116 : vector<64x1xf32> to vector<64x32xf32>
    %118 = arith.subf %112, %117 : vector<64x32xf32>
    %119 = arith.mulf %118, %118 : vector<64x32xf32>
    %cst_41 = arith.constant dense<0.000000e+00> : vector<64xf32>
    %120 = vector.multi_reduction <add>, %119, %cst_41 [1] : vector<64x32xf32> to vector<64xf32>
    %121 = vector.shape_cast %120 : vector<64xf32> to vector<64x1xf32>
    %cst_42 = arith.constant 3.200000e+01 : f32
    %122 = vector.broadcast %cst_42 : f32 to vector<64x1xf32>
    %123 = arith.divf %121, %122 : vector<64x1xf32>
    %124 = vector.broadcast %116 : vector<64x1xf32> to vector<64x32xf32>
    %125 = arith.subf %112, %124 : vector<64x32xf32>
    %cst_43 = arith.constant 9.99999974E-6 : f32
    %126 = vector.broadcast %cst_43 : f32 to vector<64x1xf32>
    %127 = arith.addf %123, %126 : vector<64x1xf32>
    %128 = math.rsqrt %127 : vector<64x1xf32>
    %129 = vector.broadcast %128 : vector<64x1xf32> to vector<64x32xf32>
    %130 = arith.mulf %125, %129 : vector<64x32xf32>
    %131 = arith.truncf %130 : vector<64x32xf32> to vector<64x32xbf16>
    %cst_44 = arith.constant dense<0.000000e+00> : vector<64x128xf32>
    %132 = tpu.matmul %131, %6, %cst_44 {dimension_numbers = #tpu.dot_dimension_numbers<[1], [0], [0], [1], [0, 0, 1, 1], [], []>} : vector<64x32xbf16>, vector<32x128xbf16>, vector<64x128xf32> -> vector<64x128xf32>
    %133 = vector.broadcast %11 : vector<1x128xf32> to vector<64x128xf32>
    %134 = arith.addf %132, %133 : vector<64x128xf32>
    %135 = vector.shape_cast %134 : vector<64x128xf32> to vector<4x16x128xf32>
    %c0_45 = arith.constant 0 : index
    %c0_46 = arith.constant 0 : index
    %c0_47 = arith.constant 0 : index
    %136 = vector.load %arg4[%c0_45, %c0_46, %c0_47] : memref<4x16x128xf32, #tpu.memory_space<vmem>>, vector<4x16x128xf32>
    tpu.vector_store %arg4[%c0_45, %c0_46, %c0_47], %135 {strides = array<i32>} : memref<4x16x128xf32, #tpu.memory_space<vmem>>, vector<4x16x128xf32>,
    return
  }
  func.func @transform_0(%arg0: i32) -> (i32, i32, i32) {
    %c0_i32 = arith.constant 0 : i32
    %c0_i32_0 = arith.constant 0 : i32
    %c0_i32_1 = arith.constant 0 : i32
    return %arg0, %c0_i32, %c0_i32_0 : i32, i32, i32
  }
  func.func @transform_1(%arg0: i32) -> (i32, i32) {
    %c0_i32 = arith.constant 0 : i32
    %c0_i32_0 = arith.constant 0 : i32
    %c0_i32_1 = arith.constant 0 : i32
    return %c0_i32, %c0_i32_0 : i32, i32
  }
  func.func @transform_2(%arg0: i32) -> (i32, i32) {
    %c0_i32 = arith.constant 0 : i32
    %c0_i32_0 = arith.constant 0 : i32
    %c0_i32_1 = arith.constant 0 : i32
    return %c0_i32, %c0_i32_0 : i32, i32
  }
  func.func @transform_3(%arg0: i32) -> (i32, i32, i32) {
    %c0_i32 = arith.constant 0 : i32
    %c0_i32_0 = arith.constant 0 : i32
    %c0_i32_1 = arith.constant 0 : i32
    return %arg0, %c0_i32, %c0_i32_0 : i32, i32, i32
  }
}

</mosaic_0001>

<llo_original>
// kernel: dsnet_forward.1
$region0: #{dsnet_forward.1}
  #allocation0 [shape = 'u32[]', space=smem, size = 0x4, offset = 0x4, fixed_abs, tag = 'smem constant byte address 0x4 - core index']
  #allocation1 [shape = 'u32[144,128]{1,0:T(1,128)}', space=vmem, size = 0x12000, scoped, tag = 'internal scratch']
  %s0 = inlined_call_operand.hbm [shape: f32[8,8,32], index: 0, kind: input, shape index: {}]
  %s1 = inlined_call_operand.hbm [shape: bf16[128,128], index: 1, kind: input, shape index: {}]
  %s2 = inlined_call_operand.hbm [shape: f32[72,128], index: 2, kind: input, shape index: {}]
  %s3 = inlined_call_operand.vmem [shape: f32[8,16,128], index: 3, kind: output, shape index: {}]
  %s4 = sld [smem:[#allocation0]]
  $region57: #{dsnet_forward.1} parent=0
    _
  %s6 = ssub.s32 1, %s4
  %s7 = scalar_select 0, %s6, %s4
  $region1: #{dsnet_forward.1} parent=0
    #allocation2 [shape = 'u8[32768]{0}', space=vmem, size = 0x8000, scoped, tag = 'input window, operand 0']
    #allocation3 [shape = 's32[2]{0}', space=sflag, size = 0x8, scoped, tag = 'scoped memory for dsnet_forward.1']
    #allocation4 [shape = 'u8[32768]{0}', space=vmem, size = 0x8000, scoped, tag = 'input window, operand 1, single buffered']
    #allocation5 [shape = 's32[1]{0}', space=sflag, size = 0x4, scoped, tag = 'scoped memory for dsnet_forward.1']
    #allocation6 [shape = 'u8[36864]{0}', space=vmem, size = 0x9000, scoped, tag = 'input window, operand 2, single buffered']
    %8 = vsyncpa [#allocation3], 0
    %s9 = scalar_lea.sflag [#allocation3], 1
    %10 = vsyncpa %s9, 0
    %11 = vsyncpa [#allocation5], 0
    loop: start=0, step=1, limit=4
    $region2: #{dsnet_forward.1} parent=1 // loop_pre_header
      _
    $region3: #{dsnet_forward.1} parent=1 // loop_header
      %s13 = sphi 0, %s17
      %p14 = scmp.ge.s32.totalorder %s13, 4
      %s23 = sphi 0, %s25
      %s26 = sphi 0, %s23
      %s27 = sphi 0, %s26
      %s43 = sphi 0, %s27
      %s47 = sphi 0, %s47
      %s49 = sphi 0, %s47
      %s50 = sphi 0, %s49
      %s64 = sphi 0, %s50
      %s68 = sphi 0, %s68
      %s70 = sphi 0, %s68
      %s71 = sphi 0, %s70
      %s85 = sphi 0, %s71
      %s91 = sphi 0, %s93
      %s94 = sphi 0, %s91
      %s95 = sphi 0, %s94
      %s111 = sphi 0, %s95
    $region4: #{dsnet_forward.1} parent=1 // loop_header_branch
      %16 = sbr.rel (%p14) target = $region8
    $region5: #{dsnet_forward.1} parent=1 // loop_body
      %s18 = ssub.s32 %s13, 1
      %s19 = ssub.s32 %s13, 2
      %s20 = sadd.s32 %s13, 1
      %s21 = ssub.s32 %s13, %s20
      %p22 = scmp.eq.s32.totalorder %s21, 0
      %s24 = sadd.s32 %s23, 1
      %s25 = scalar_select %p22, %s23, %s24
      %p28 = pneg %p22
      %p29 = scmp.eq.s32.totalorder %s13, 1
      %p30 = por %p28, %p29
      %p31 = scmp.ne.s32.totalorder %s23, %s26
      %p32 = scmp.eq.s32.totalorder %s13, 0
      %p33 = por %p31, %p32
      %p34 = scmp.ne.s32.totalorder %s23, %s26
      %p35 = scmp.eq.s32.totalorder %s18, 1
      %p36 = por %p34, %p35
      %p37 = scmp.ne.s32.totalorder %s26, %s27
      %p38 = scmp.eq.s32.totalorder %s18, 0
      %p39 = por %p37, %p38
      %p40 = scmp.ne.s32.totalorder %s26, %s27
      %p41 = scmp.eq.s32.totalorder %s19, 1
      %p42 = por %p40, %p41
      %p44 = scmp.ne.s32.totalorder %s27, %s43
      %p45 = scmp.eq.s32.totalorder %s19, 0
      %p46 = por %p44, %p45
      %s48 = sadd.s32 %s47, 1
      %p51 = scmp.eq.s32.totalorder %s13, 1
      %p52 = scmp.ne.s32.totalorder %s47, %s49
      %p53 = scmp.eq.s32.totalorder %s13, 0
      %p54 = por %p52, %p53
      %p55 = scmp.ne.s32.totalorder %s47, %s49
      %p56 = scmp.eq.s32.totalorder %s18, 1
      %p57 = por %p55, %p56
      %p58 = scmp.ne.s32.totalorder %s49, %s50
      %p59 = scmp.eq.s32.totalorder %s18, 0
      %p60 = por %p58, %p59
      %p61 = scmp.ne.s32.totalorder %s49, %s50
      %p62 = scmp.eq.s32.totalorder %s19, 1
      %p63 = por %p61, %p62
      %p65 = scmp.ne.s32.totalorder %s50, %s64
      %p66 = scmp.eq.s32.totalorder %s19, 0
      %p67 = por %p65, %p66
      %s69 = sadd.s32 %s68, 1
      %p72 = scmp.eq.s32.totalorder %s13, 1
      %p73 = scmp.ne.s32.totalorder %s68, %s70
      %p74 = scmp.eq.s32.totalorder %s13, 0
      %p75 = por %p73, %p74
      %p76 = scmp.ne.s32.totalorder %s68, %s70
      %p77 = scmp.eq.s32.totalorder %s18, 1
      %p78 = por %p76, %p77
      %p79 = scmp.ne.s32.totalorder %s70, %s71
      %p80 = scmp.eq.s32.totalorder %s18, 0
      %p81 = por %p79, %p80
      %p82 = scmp.ne.s32.totalorder %s70, %s71
      %p83 = scmp.eq.s32.totalorder %s19, 1
      %p84 = por %p82, %p83
      %p86 = scmp.ne.s32.totalorder %s71, %s85
      %p87 = scmp.eq.s32.totalorder %s19, 0
      %p88 = por %p86, %p87
      %s89 = ssub.s32 %s13, %s20
      %p90 = scmp.eq.s32.totalorder %s89, 0
      %s92 = sadd.s32 %s91, 1
      %s93 = scalar_select %p90, %s91, %s92
      %p96 = pneg %p90
      %p97 = scmp.eq.s32.totalorder %s13, 1
      %p98 = por %p96, %p97
      %p99 = scmp.ne.s32.totalorder %s91, %s94
      %p100 = scmp.eq.s32.totalorder %s13, 0
      %p101 = por %p99, %p100
      %p102 = scmp.ne.s32.totalorder %s91, %s94
      %p103 = scmp.eq.s32.totalorder %s18, 1
      %p104 = por %p102, %p103
      %p105 = scmp.ne.s32.totalorder %s94, %s95
      %p106 = scmp.eq.s32.totalorder %s18, 0
      %p107 = por %p105, %p106
      %p108 = scmp.ne.s32.totalorder %s94, %s95
      %p109 = scmp.eq.s32.totalorder %s19, 1
      %p110 = por %p108, %p109
      %p112 = scmp.ne.s32.totalorder %s95, %s111
      %p113 = scmp.eq.s32.totalorder %s19, 0
      %p114 = por %p112, %p113
      %p115 = scmp.le.s32.totalorder 1, %s13
      %p116 = scmp.lt.s32.totalorder %s13, 3
      %p117 = pnand %p115, %p116
      %p118 = pneg %p117
      // Predicated region
      $region9: #{dsnet_forward.1} parent=5 // pred_check
        _
      $region10: #{dsnet_forward.1} parent=5 // pred_check_branch
        %120 = sbr.rel (%p117) target = $region12
      $region11: #{dsnet_forward.1} parent=5 // pred_region
        %s121 = ssub.s32 %s13, 1
        // Predicated region
        $region13: #{dsnet_forward.1} parent=11 // pred_check
          %p122 = pneg %p60
        $region14: #{dsnet_forward.1} parent=11 // pred_check_branch
          %124 = sbr.rel (%p122) target = $region16
        $region15: #{dsnet_forward.1} parent=11 // pred_region
          %s126 = ssub.s32 1024, 1024
          %127 = vsyncadd [#allocation5], %s126
          %s128 = sshll.u32 [#allocation4], 4
          %s129 = int_to_ptr.vmem [resolvable:$true] %s128
          %134 = dma.hbm_to_vmem [thread:$0]  %s1, 1024, %s129, [#allocation5], 64, 64, 4
        $region16: #{dsnet_forward.1} parent=11 // pred_fallthru
          _
        // Predicated region
        $region17: #{dsnet_forward.1} parent=11 // pred_check
          %p135 = pneg %p81
        $region18: #{dsnet_forward.1} parent=11 // pred_check_branch
          %137 = sbr.rel (%p135) target = $region20
        $region19: #{dsnet_forward.1} parent=11 // pred_region
          %s139 = ssub.s32 1152, 1152
          %140 = vsyncadd [#allocation5], %s139
          %s141 = sshll.u32 [#allocation6], 4
          %s142 = int_to_ptr.vmem [resolvable:$true] %s141
          %147 = dma.hbm_to_vmem [thread:$0]  %s2, 1152, %s142, [#allocation5], 128, 128, 8
        $region20: #{dsnet_forward.1} parent=11 // pred_fallthru
          _
      $region12: #{dsnet_forward.1} parent=5 // pred_fallthru
        _
      %p148 = scmp.lt.s32.totalorder %s13, 2
      // Predicated region
      $region21: #{dsnet_forward.1} parent=5 // pred_check
        %p149 = pneg %p148
      $region22: #{dsnet_forward.1} parent=5 // pred_check_branch
        %151 = sbr.rel (%p149) target = $region24
      $region23: #{dsnet_forward.1} parent=5 // pred_region
        // Predicated region
        $region25: #{dsnet_forward.1} parent=23 // pred_check
          %p152 = pneg %p33
        $region26: #{dsnet_forward.1} parent=23 // pred_check_branch
          %154 = sbr.rel (%p152) target = $region28
        $region27: #{dsnet_forward.1} parent=23 // pred_region
          %s155 = sand.u32 %s23, 1
          %s156 = scalar_lea.sflag [#allocation3], %s155
          %s157 = sand.u32 %s23, 1
          %s158 = smul.addr %s157, 32
          %s159 = scalar_lea.vmem [#allocation2], %s158
          %s160 = smul.u32 4, %s13
          %s162 = ssub.s32 512, 512
          %163 = vsyncadd %s156, %s162
          %s164 = smul.addr %s160, 128
          %s165 = scalar_lea.hbm %s0, %s164
          %s166 = sshll.u32 %s159, 4
          %s167 = int_to_ptr.vmem [resolvable:$true] %s166
          %172 = dma.hbm_to_vmem [thread:$0]  %s165, 512, %s167, %s156, 128, 128, 8
        $region28: #{dsnet_forward.1} parent=23 // pred_fallthru
          _
      $region24: #{dsnet_forward.1} parent=5 // pred_fallthru
        _
      %p173 = scmp.le.s32.totalorder 1, %s13
      %p174 = scmp.lt.s32.totalorder %s13, 3
      %p175 = pnand %p173, %p174
      %p176 = pneg %p175
      // Predicated region
      $region29: #{dsnet_forward.1} parent=5 // pred_check
        _
      $region30: #{dsnet_forward.1} parent=5 // pred_check_branch
        %178 = sbr.rel (%p175) target = $region32
      $region31: #{dsnet_forward.1} parent=5 // pred_region
        %s179 = ssub.s32 %s13, 1
        %s180 = sand.u32 %s26, 1
        %s181 = scalar_lea.sflag [#allocation3], %s180
        %s182 = sand.u32 %s26, 1
        %s183 = smul.addr %s182, 32
        %s184 = scalar_lea.vmem [#allocation2], %s183
        // Predicated region
        $region33: #{dsnet_forward.1} parent=31 // pred_check
          %p185 = pneg %p39
        $region34: #{dsnet_forward.1} parent=31 // pred_check_branch
          %187 = sbr.rel (%p185) target = $region36
        $region35: #{dsnet_forward.1} parent=31 // pred_region
          %188 = dma.done %s181, 512
        $region36: #{dsnet_forward.1} parent=31 // pred_fallthru
          _
        // Predicated region
        $region37: #{dsnet_forward.1} parent=31 // pred_check
          %p189 = pneg %p60
        $region38: #{dsnet_forward.1} parent=31 // pred_check_branch
          %191 = sbr.rel (%p189) target = $region40
        $region39: #{dsnet_forward.1} parent=31 // pred_region
          %192 = dma.done [#allocation5], 1024
        $region40: #{dsnet_forward.1} parent=31 // pred_fallthru
          _
        // Predicated region
        $region41: #{dsnet_forward.1} parent=31 // pred_check
          %p193 = pneg %p81
        $region42: #{dsnet_forward.1} parent=31 // pred_check_branch
          %195 = sbr.rel (%p193) target = $region44
        $region43: #{dsnet_forward.1} parent=31 // pred_region
          %196 = dma.done [#allocation5], 1152
        $region44: #{dsnet_forward.1} parent=31 // pred_fallthru
          _
        %s197 = sand.u32 %s26, 1
        %s198 = scalar_lea.sflag [#allocation3], %s197
        %s199 = sand.u32 %s26, 1
        %s200 = smul.addr %s199, 32
        %s201 = scalar_lea.vmem [#allocation2], %s200
        %p202 = pneg %p39
        %p203 = pneg %p36
        %p204 = pneg %p60
        %p205 = pneg %p57
        %p206 = pneg %p81
        %p207 = pneg %p78
        %p208 = pneg %p107
        %p209 = pneg %p104
        %s210 = smul.u32 4, %s18
        %p211 = scmp.lt.s32.totalorder %s210, 7
        %s212 = scalar_select %p211, %s210, 7
        %s213 = smul.addr %s212, 2
        %s214 = smul.addr %s213, 8
        %s215 = scalar_lea.vmem %s3, %s214
        %s216 = smul.u32 4, %s18
        %s217 = smul.u32 4, %s18
        %p218 = scmp.lt.s32.totalorder %s217, 7
        %s219 = scalar_select %p218, %s217, 7
        %s220 = smul.addr %s219, 2
        %s221 = smul.addr %s220, 8
        %s222 = scalar_lea.vmem %s3, %s221
        %s223 = smul.u32 4, %s18
        %v225 = vld [vmem:[%s184] sm:$0xff]
        %v226 = vld [vmem:[%s184 + $0x8] sm:$0xff]
        %v227 = vld [vmem:[%s184 + $0x10] sm:$0xff]
        %v228 = vld [vmem:[%s184 + $0x18] sm:$0xff]
        %v229 = vpack.c.bf16 %v226, %v225
        %v230 = vpack.c.bf16 %v228, %v227
        %v231 = vld [vmem:[#allocation4] sm:$0xf]
        %v232 = vld [vmem:[#allocation4 + $0x4] sm:$0xf]
        %v233 = vld [vmem:[#allocation4 + $0x8] sm:$0xf]
        %v234 = vld [vmem:[#allocation4 + $0xc] sm:$0xf]
        %v235 = vld [vmem:[#allocation4 + $0x10] sm:$0xf]
        %v236 = vld [vmem:[#allocation4 + $0x14] sm:$0xf]
        %v237 = vld [vmem:[#allocation4 + $0x18] sm:$0xf]
        %v238 = vld [vmem:[#allocation4 + $0x1c] sm:$0xf]
        %v239 = vld [vmem:[#allocation4 + $0x20] sm:$0xf]
        %v240 = vld [vmem:[#allocation4 + $0x24] sm:$0xf]
        %v241 = vld [vmem:[#allocation4 + $0x28] sm:$0xf]
        %v242 = vld [vmem:[#allocation4 + $0x2c] sm:$0xf]
        %v243 = vld [vmem:[#allocation4 + $0x30] sm:$0xf]
        %v244 = vld [vmem:[#allocation4 + $0x34] sm:$0xf]
        %v245 = vld [vmem:[#allocation4 + $0x38] sm:$0xf]
        %v246 = vld [vmem:[#allocation4 + $0x3c] sm:$0xf]
        %v247 = vld [vmem:[#allocation6] sm:$0xff]
        %v248 = vld [vmem:[#allocation6 + $0x8] sm:$0xff]
        %v249 = vld [vmem:[#allocation6 + $0x10] sm:$0xff]
        %v250 = vld [vmem:[#allocation6 + $0x18] sm:$0xff]
        %v251 = vld [vmem:[#allocation6 + $0x20] sm:$0xff]
        %v252 = vld [vmem:[#allocation6 + $0x28] sm:$0xff]
        %v253 = vld [vmem:[#allocation6 + $0x30] sm:$0xff]
        %v254 = vld [vmem:[#allocation6 + $0x38] sm:$0xff]
        %v255 = vld [vmem:[#allocation6 + $0x40] sm:$0x1]
        %v256 = vld [vmem:[#allocation6 + $0x41] sm:$0x1]
        %v257 = vld [vmem:[#allocation6 + $0x42] sm:$0x1]
        %v258 = vld [vmem:[#allocation6 + $0x43] sm:$0x1]
        %v263 = vunpack.c.l.b16 %v231
        %v264 = vunpack.c.l.b16 %v232
        %v265 = vunpack.c.l.b16 %v233
        %v266 = vunpack.c.l.b16 %v234
        %v267 = vpack.c.b16 %v264, %v263
        %v268 = vpack.c.b16 %v266, %v265
        %vm271 = vcmask 261120
        %v273 = vsel %vm271, %v229, 0
        %v276 = vsel %vm271, %v230, 0
        %278 = vmatprep.subr.bf16.mxu0 0
        %279 = vmatpush1.bf16.msra.mxu0 %v267
        %280 = vmatprep.subr.bf16.mxu0 0
        %281 = vmatpush1.bf16.msra.mxu0 %v268
        %282 = vmatprep.subr.bf16.mxu0 0
        %283 = vmatpush1.bf16.msra.mxu0 0
        %284 = vmatprep.subr.bf16.mxu0 0
        %285 = vmatpush1.bf16.msra.mxu0 0
        %286 = vmatprep.subr.bf16.mxu0 0
        %287 = vmatpush1.bf16.msra.mxu0 0
        %288 = vmatprep.subr.bf16.mxu0 0
        %289 = vmatpush1.bf16.msra.mxu0 0
        %290 = vmatprep.subr.bf16.mxu0 0
        %291 = vmatpush1.bf16.msra.mxu0 0
        %292 = vmatprep.subr.bf16.mxu0 0
        %293 = vmatpush1.bf16.msra.mxu0 0
        %294 = vmatprep.subr.bf16.mxu0 0
        %295 = vmatpush1.bf16.msra.mxu0 0
        %296 = vmatprep.subr.bf16.mxu0 0
        %297 = vmatpush1.bf16.msra.mxu0 0
        %298 = vmatprep.subr.bf16.mxu0 0
        %299 = vmatpush1.bf16.msra.mxu0 0
        %300 = vmatprep.subr.bf16.mxu0 0
        %301 = vmatpush1.bf16.msra.mxu0 0
        %302 = vmatprep.subr.bf16.mxu0 0
        %303 = vmatpush1.bf16.msra.mxu0 0
        %304 = vmatprep.subr.bf16.mxu0 0
        %305 = vmatpush1.bf16.msra.mxu0 0
        %306 = vmatprep.subr.bf16.mxu0 0
        %307 = vmatpush1.bf16.msra.mxu0 0
        %308 = vmatprep.subr.bf16.mxu0 0
        %309 = vmatpush1.bf16.msra.mxu0 0
        %310 = vmatprep.mubr.bf16.mxu0 0
        %311 = vmatmul.mubr.bf16.gmra.mrb[0].mxu0 %v273
        %v312 = vpop.f32.mrb[0].mxu0
        %v313 = vadd.f32 0.0, %v312
        %v314 = vpop.f32.mrb[0].mxu0
        %v315 = vpop.f32.mrb[0].mxu0
        %v316 = vadd.f32 0.0, %v315
        %v317 = vpop.f32.mrb[0].mxu0
        %318 = vmatprep.mubr.bf16.mxu0 0
        %319 = vmatmul.mubr.bf16.gmra.mrb[0].mxu0 %v276
        %v320 = vpop.f32.mrb[0].mxu0
        %v321 = vadd.f32 0.0, %v320
        %v322 = vpop.f32.mrb[0].mxu0
        %v323 = vpop.f32.mrb[0].mxu0
        %v324 = vadd.f32 0.0, %v323
        %v325 = vpop.f32.mrb[0].mxu0
        %326 = vdwg.mxu0
        %v331 = vunpack.c.l.b16 %v235
        %v332 = vunpack.c.l.b16 %v236
        %v333 = vunpack.c.l.b16 %v237
        %v334 = vunpack.c.l.b16 %v238
        %v335 = vpack.c.b16 %v332, %v331
        %v336 = vpack.c.b16 %v334, %v333
        %339 = vmatprep.subr.bf16.mxu0 0
        %340 = vmatpush1.bf16.msra.mxu0 %v335
        %341 = vmatprep.subr.bf16.mxu0 0
        %342 = vmatpush1.bf16.msra.mxu0 %v336
        %343 = vmatprep.subr.bf16.mxu0 0
        %344 = vmatpush1.bf16.msra.mxu0 0
        %345 = vmatprep.subr.bf16.mxu0 0
        %346 = vmatpush1.bf16.msra.mxu0 0
        %347 = vmatprep.subr.bf16.mxu0 0
        %348 = vmatpush1.bf16.msra.mxu0 0
        %349 = vmatprep.subr.bf16.mxu0 0
        %350 = vmatpush1.bf16.msra.mxu0 0
        %351 = vmatprep.subr.bf16.mxu0 0
        %352 = vmatpush1.bf16.msra.mxu0 0
        %353 = vmatprep.subr.bf16.mxu0 0
        %354 = vmatpush1.bf16.msra.mxu0 0
        %355 = vmatprep.subr.bf16.mxu0 0
        %356 = vmatpush1.bf16.msra.mxu0 0
        %357 = vmatprep.subr.bf16.mxu0 0
        %358 = vmatpush1.bf16.msra.mxu0 0
        %359 = vmatprep.subr.bf16.mxu0 0
        %360 = vmatpush1.bf16.msra.mxu0 0
        %361 = vmatprep.subr.bf16.mxu0 0
        %362 = vmatpush1.bf16.msra.mxu0 0
        %363 = vmatprep.subr.bf16.mxu0 0
        %364 = vmatpush1.bf16.msra.mxu0 0
        %365 = vmatprep.subr.bf16.mxu0 0
        %366 = vmatpush1.bf16.msra.mxu0 0
        %367 = vmatprep.subr.bf16.mxu0 0
        %368 = vmatpush1.bf16.msra.mxu0 0
        %369 = vmatprep.subr.bf16.mxu0 0
        %370 = vmatpush1.bf16.msra.mxu0 0
        %371 = vmatprep.mubr.bf16.mxu0 0
        %372 = vmatmul.mubr.bf16.gmra.mrb[0].mxu0 %v273
        %v373 = vpop.f32.mrb[0].mxu0
        %v374 = vadd.f32 0.0, %v373
        %v375 = vpop.f32.mrb[0].mxu0
        %v376 = vpop.f32.mrb[0].mxu0
        %v377 = vadd.f32 0.0, %v376
        %v378 = vpop.f32.mrb[0].mxu0
        %379 = vmatprep.mubr.bf16.mxu0 0
        %380 = vmatmul.mubr.bf16.gmra.mrb[0].mxu0 %v276
        %v381 = vpop.f32.mrb[0].mxu0
        %v382 = vadd.f32 0.0, %v381
        %v383 = vpop.f32.mrb[0].mxu0
        %v384 = vpop.f32.mrb[0].mxu0
        %v385 = vadd.f32 0.0, %v384
        %v386 = vpop.f32.mrb[0].mxu0
        %387 = vdwg.mxu0
        %389 = vrot.lane.b32.xlu0 %v313, 96
        %v390 = vpop.permute.xlu0 %389
        %vm391 = vcmask 64512
        %v392 = vsel %vm391, %v313, 0
        %v394 = vsel %vm391, %v390, 0
        %396 = vmatprep.subr.mxu0 0.0
        %397 = vmatpush1.xpose.msra.mxu0 %v394
        %398 = vmatprep.subr.mxu0 0.0
        %399 = vmatpush1.xpose.msra.mxu0 0.0
        %400 = vmatprep.subr.mxu0 0.0
        %401 = vmatpush1.xpose.msra.mxu0 0.0
        %402 = vmatprep.subr.mxu0 0.0
        %403 = vmatpush1.xpose.msra.mxu0 0.0
        %404 = vmatprep.subr.mxu0 0.0
        %405 = vmatpush1.xpose.msra.mxu0 0.0
        %406 = vmatprep.subr.mxu0 0.0
        %407 = vmatpush1.xpose.msra.mxu0 0.0
        %408 = vmatprep.subr.mxu0 0.0
        %409 = vmatpush1.xpose.msra.mxu0 0.0
        %410 = vmatprep.subr.mxu0 0.0
        %411 = vmatpush1.xpose.msra.mxu0 0.0
        %412 = vmatprep.subr.mxu0 0.0
        %413 = vmatpush1.xpose.msra.mxu0 0.0
        %414 = vmatprep.subr.mxu0 0.0
        %415 = vmatpush1.xpose.msra.mxu0 0.0
        %416 = vmatprep.subr.mxu0 0.0
        %417 = vmatpush1.xpose.msra.mxu0 0.0
        %418 = vmatprep.subr.mxu0 0.0
        %419 = vmatpush1.xpose.msra.mxu0 0.0
        %420 = vmatprep.subr.mxu0 0.0
        %421 = vmatpush1.xpose.msra.mxu0 0.0
        %422 = vmatprep.subr.mxu0 0.0
        %423 = vmatpush1.xpose.msra.mxu0 0.0
        %424 = vmatprep.subr.mxu0 0.0
        %425 = vmatpush1.xpose.msra.mxu0 0.0
        %426 = vmatprep.subr.mxu0 0.0
        %427 = vmatpush1.xpose.msra.mxu0 0.0
        %428 = vmatprep.subr.mxu0 0.0
        %429 = vmatpush1.xpose.msra.mxu0 0.0
        %430 = vmatprep.subr.mxu0 0.0
        %431 = vmatpush1.xpose.msra.mxu0 0.0
        %432 = vmatprep.subr.mxu0 0.0
        %433 = vmatpush1.xpose.msra.mxu0 0.0
        %434 = vmatprep.subr.mxu0 0.0
        %435 = vmatpush1.xpose.msra.mxu0 0.0
        %436 = vmatprep.subr.mxu0 0.0
        %437 = vmatpush1.xpose.msra.mxu0 0.0
        %438 = vmatprep.subr.mxu0 0.0
        %439 = vmatpush1.xpose.msra.mxu0 0.0
        %440 = vmatprep.subr.mxu0 0.0
        %441 = vmatpush1.xpose.msra.mxu0 0.0
        %442 = vmatprep.subr.mxu0 0.0
        %443 = vmatpush1.xpose.msra.mxu0 0.0
        %444 = vmatprep.subr.mxu0 0.0
        %445 = vmatpush1.xpose.msra.mxu0 0.0
        %446 = vmatprep.subr.mxu0 0.0
        %447 = vmatpush1.xpose.msra.mxu0 0.0
        %448 = vmatprep.subr.mxu0 0.0
        %449 = vmatpush1.xpose.msra.mxu0 0.0
        %450 = vmatprep.subr.mxu0 0.0
        %451 = vmatpush1.xpose.msra.mxu0 0.0
        %452 = vmatprep.subr.mxu0 0.0
        %453 = vmatpush1.xpose.msra.mxu0 0.0
        %454 = vmatprep.subr.mxu0 0.0
        %455 = vmatpush1.xpose.msra.mxu0 0.0
        %456 = vmatprep.subr.mxu0 0.0
        %457 = vmatpush1.xpose.msra.mxu0 0.0
        %458 = vmatprep.subr.mxu0 0.0
        %459 = vmatpush1.xpose.msra.mxu0 0.0
        %460 = vmatprep.mubr.f32.mxu0 0.0
        %461 = vmatmul.mubr.f32.gmra.mrb[0].mxu0 %v392
        %v462 = vpop.f32.mrb[0].mxu0
        %v463 = vadd.f32 0.0, %v462
        %v464 = vpop.f32.mrb[0].mxu0
        %465 = vdwg.mxu0
        %467 = vrot.lane.b32.xlu0 %v316, 96
        %v468 = vpop.permute.xlu0 %467
        %v469 = vsel %vm391, %v316, 0
        %v471 = vsel %vm391, %v468, 0
        %473 = vmatprep.subr.mxu0 0.0
        %474 = vmatpush1.xpose.msra.mxu0 %v471
        %475 = vmatprep.subr.mxu0 0.0
        %476 = vmatpush1.xpose.msra.mxu0 0.0
        %477 = vmatprep.subr.mxu0 0.0
        %478 = vmatpush1.xpose.msra.mxu0 0.0
        %479 = vmatprep.subr.mxu0 0.0
        %480 = vmatpush1.xpose.msra.mxu0 0.0
        %481 = vmatprep.subr.mxu0 0.0
        %482 = vmatpush1.xpose.msra.mxu0 0.0
        %483 = vmatprep.subr.mxu0 0.0
        %484 = vmatpush1.xpose.msra.mxu0 0.0
        %485 = vmatprep.subr.mxu0 0.0
        %486 = vmatpush1.xpose.msra.mxu0 0.0
        %487 = vmatprep.subr.mxu0 0.0
        %488 = vmatpush1.xpose.msra.mxu0 0.0
        %489 = vmatprep.subr.mxu0 0.0
        %490 = vmatpush1.xpose.msra.mxu0 0.0
        %491 = vmatprep.subr.mxu0 0.0
        %492 = vmatpush1.xpose.msra.mxu0 0.0
        %493 = vmatprep.subr.mxu0 0.0
        %494 = vmatpush1.xpose.msra.mxu0 0.0
        %495 = vmatprep.subr.mxu0 0.0
        %496 = vmatpush1.xpose.msra.mxu0 0.0
        %497 = vmatprep.subr.mxu0 0.0
        %498 = vmatpush1.xpose.msra.mxu0 0.0
        %499 = vmatprep.subr.mxu0 0.0
        %500 = vmatpush1.xpose.msra.mxu0 0.0
        %501 = vmatprep.subr.mxu0 0.0
        %502 = vmatpush1.xpose.msra.mxu0 0.0
        %503 = vmatprep.subr.mxu0 0.0
        %504 = vmatpush1.xpose.msra.mxu0 0.0
        %505 = vmatprep.subr.mxu0 0.0
        %506 = vmatpush1.xpose.msra.mxu0 0.0
        %507 = vmatprep.subr.mxu0 0.0
        %508 = vmatpush1.xpose.msra.mxu0 0.0
        %509 = vmatprep.subr.mxu0 0.0
        %510 = vmatpush1.xpose.msra.mxu0 0.0
        %511 = vmatprep.subr.mxu0 0.0
        %512 = vmatpush1.xpose.msra.mxu0 0.0
        %513 = vmatprep.subr.mxu0 0.0
        %514 = vmatpush1.xpose.msra.mxu0 0.0
        %515 = vmatprep.subr.mxu0 0.0
        %516 = vmatpush1.xpose.msra.mxu0 0.0
        %517 = vmatprep.subr.mxu0 0.0
        %518 = vmatpush1.xpose.msra.mxu0 0.0
        %519 = vmatprep.subr.mxu0 0.0
        %520 = vmatpush1.xpose.msra.mxu0 0.0
        %521 = vmatprep.subr.mxu0 0.0
        %522 = vmatpush1.xpose.msra.mxu0 0.0
        %523 = vmatprep.subr.mxu0 0.0
        %524 = vmatpush1.xpose.msra.mxu0 0.0
        %525 = vmatprep.subr.mxu0 0.0
        %526 = vmatpush1.xpose.msra.mxu0 0.0
        %527 = vmatprep.subr.mxu0 0.0
        %528 = vmatpush1.xpose.msra.mxu0 0.0
        %529 = vmatprep.subr.mxu0 0.0
        %530 = vmatpush1.xpose.msra.mxu0 0.0
        %531 = vmatprep.subr.mxu0 0.0
        %532 = vmatpush1.xpose.msra.mxu0 0.0
        %533 = vmatprep.subr.mxu0 0.0
        %534 = vmatpush1.xpose.msra.mxu0 0.0
        %535 = vmatprep.subr.mxu0 0.0
        %536 = vmatpush1.xpose.msra.mxu0 0.0
        %537 = vmatprep.mubr.f32.mxu0 0.0
        %538 = vmatmul.mubr.f32.gmra.mrb[0].mxu0 %v469
        %v539 = vpop.f32.mrb[0].mxu0
        %v540 = vadd.f32 0.0, %v539
        %v541 = vpop.f32.mrb[0].mxu0
        %542 = vdwg.mxu0
        %544 = vrot.lane.b32.xlu0 %v321, 96
        %v545 = vpop.permute.xlu0 %544
        %v546 = vsel %vm391, %v321, 0
        %v548 = vsel %vm391, %v545, 0
        %550 = vmatprep.subr.mxu0 0.0
        %551 = vmatpush1.xpose.msra.mxu0 %v548
        %552 = vmatprep.subr.mxu0 0.0
        %553 = vmatpush1.xpose.msra.mxu0 0.0
        %554 = vmatprep.subr.mxu0 0.0
        %555 = vmatpush1.xpose.msra.mxu0 0.0
        %556 = vmatprep.subr.mxu0 0.0
        %557 = vmatpush1.xpose.msra.mxu0 0.0
        %558 = vmatprep.subr.mxu0 0.0
        %559 = vmatpush1.xpose.msra.mxu0 0.0
        %560 = vmatprep.subr.mxu0 0.0
        %561 = vmatpush1.xpose.msra.mxu0 0.0
        %562 = vmatprep.subr.mxu0 0.0
        %563 = vmatpush1.xpose.msra.mxu0 0.0
        %564 = vmatprep.subr.mxu0 0.0
        %565 = vmatpush1.xpose.msra.mxu0 0.0
        %566 = vmatprep.subr.mxu0 0.0
        %567 = vmatpush1.xpose.msra.mxu0 0.0
        %568 = vmatprep.subr.mxu0 0.0
        %569 = vmatpush1.xpose.msra.mxu0 0.0
        %570 = vmatprep.subr.mxu0 0.0
        %571 = vmatpush1.xpose.msra.mxu0 0.0
        %572 = vmatprep.subr.mxu0 0.0
        %573 = vmatpush1.xpose.msra.mxu0 0.0
        %574 = vmatprep.subr.mxu0 0.0
        %575 = vmatpush1.xpose.msra.mxu0 0.0
        %576 = vmatprep.subr.mxu0 0.0
        %577 = vmatpush1.xpose.msra.mxu0 0.0
        %578 = vmatprep.subr.mxu0 0.0
        %579 = vmatpush1.xpose.msra.mxu0 0.0
        %580 = vmatprep.subr.mxu0 0.0
        %581 = vmatpush1.xpose.msra.mxu0 0.0
        %582 = vmatprep.subr.mxu0 0.0
        %583 = vmatpush1.xpose.msra.mxu0 0.0
        %584 = vmatprep.subr.mxu0 0.0
        %585 = vmatpush1.xpose.msra.mxu0 0.0
        %586 = vmatprep.subr.mxu0 0.0
        %587 = vmatpush1.xpose.msra.mxu0 0.0
        %588 = vmatprep.subr.mxu0 0.0
        %589 = vmatpush1.xpose.msra.mxu0 0.0
        %590 = vmatprep.subr.mxu0 0.0
        %591 = vmatpush1.xpose.msra.mxu0 0.0
        %592 = vmatprep.subr.mxu0 0.0
        %593 = vmatpush1.xpose.msra.mxu0 0.0
        %594 = vmatprep.subr.mxu0 0.0
        %595 = vmatpush1.xpose.msra.mxu0 0.0
        %596 = vmatprep.subr.mxu0 0.0
        %597 = vmatpush1.xpose.msra.mxu0 0.0
        %598 = vmatprep.subr.mxu0 0.0
        %599 = vmatpush1.xpose.msra.mxu0 0.0
        %600 = vmatprep.subr.mxu0 0.0
        %601 = vmatpush1.xpose.msra.mxu0 0.0
        %602 = vmatprep.subr.mxu0 0.0
        %603 = vmatpush1.xpose.msra.mxu0 0.0
        %604 = vmatprep.subr.mxu0 0.0
        %605 = vmatpush1.xpose.msra.mxu0 0.0
        %606 = vmatprep.subr.mxu0 0.0
        %607 = vmatpush1.xpose.msra.mxu0 0.0
        %608 = vmatprep.subr.mxu0 0.0
        %609 = vmatpush1.xpose.msra.mxu0 0.0
        %610 = vmatprep.subr.mxu0 0.0
        %611 = vmatpush1.xpose.msra.mxu0 0.0
        %612 = vmatprep.subr.mxu0 0.0
        %613 = vmatpush1.xpose.msra.mxu0 0.0
        %614 = vmatprep.mubr.f32.mxu0 0.0
        %615 = vmatmul.mubr.f32.gmra.mrb[0].mxu0 %v546
        %v616 = vpop.f32.mrb[0].mxu0
        %v617 = vadd.f32 0.0, %v616
        %v618 = vpop.f32.mrb[0].mxu0
        %619 = vdwg.mxu0
        %621 = vrot.lane.b32.xlu0 %v324, 96
        %v622 = vpop.permute.xlu0 %621
        %v623 = vsel %vm391, %v324, 0
        %v625 = vsel %vm391, %v622, 0
        %627 = vmatprep.subr.mxu0 0.0
        %628 = vmatpush1.xpose.msra.mxu0 %v625
        %629 = vmatprep.subr.mxu0 0.0
        %630 = vmatpush1.xpose.msra.mxu0 0.0
        %631 = vmatprep.subr.mxu0 0.0
        %632 = vmatpush1.xpose.msra.mxu0 0.0
        %633 = vmatprep.subr.mxu0 0.0
        %634 = vmatpush1.xpose.msra.mxu0 0.0
        %635 = vmatprep.subr.mxu0 0.0
        %636 = vmatpush1.xpose.msra.mxu0 0.0
        %637 = vmatprep.subr.mxu0 0.0
        %638 = vmatpush1.xpose.msra.mxu0 0.0
        %639 = vmatprep.subr.mxu0 0.0
        %640 = vmatpush1.xpose.msra.mxu0 0.0
        %641 = vmatprep.subr.mxu0 0.0
        %642 = vmatpush1.xpose.msra.mxu0 0.0
        %643 = vmatprep.subr.mxu0 0.0
        %644 = vmatpush1.xpose.msra.mxu0 0.0
        %645 = vmatprep.subr.mxu0 0.0
        %646 = vmatpush1.xpose.msra.mxu0 0.0
        %647 = vmatprep.subr.mxu0 0.0
        %648 = vmatpush1.xpose.msra.mxu0 0.0
        %649 = vmatprep.subr.mxu0 0.0
        %650 = vmatpush1.xpose.msra.mxu0 0.0
        %651 = vmatprep.subr.mxu0 0.0
        %652 = vmatpush1.xpose.msra.mxu0 0.0
        %653 = vmatprep.subr.mxu0 0.0
        %654 = vmatpush1.xpose.msra.mxu0 0.0
        %655 = vmatprep.subr.mxu0 0.0
        %656 = vmatpush1.xpose.msra.mxu0 0.0
        %657 = vmatprep.subr.mxu0 0.0
        %658 = vmatpush1.xpose.msra.mxu0 0.0
        %659 = vmatprep.subr.mxu0 0.0
        %660 = vmatpush1.xpose.msra.mxu0 0.0
        %661 = vmatprep.subr.mxu0 0.0
        %662 = vmatpush1.xpose.msra.mxu0 0.0
        %663 = vmatprep.subr.mxu0 0.0
        %664 = vmatpush1.xpose.msra.mxu0 0.0
        %665 = vmatprep.subr.mxu0 0.0
        %666 = vmatpush1.xpose.msra.mxu0 0.0
        %667 = vmatprep.subr.mxu0 0.0
        %668 = vmatpush1.xpose.msra.mxu0 0.0
        %669 = vmatprep.subr.mxu0 0.0
        %670 = vmatpush1.xpose.msra.mxu0 0.0
        %671 = vmatprep.subr.mxu0 0.0
        %672 = vmatpush1.xpose.msra.mxu0 0.0
        %673 = vmatprep.subr.mxu0 0.0
        %674 = vmatpush1.xpose.msra.mxu0 0.0
        %675 = vmatprep.subr.mxu0 0.0
        %676 = vmatpush1.xpose.msra.mxu0 0.0
        %677 = vmatprep.subr.mxu0 0.0
        %678 = vmatpush1.xpose.msra.mxu0 0.0
        %679 = vmatprep.subr.mxu0 0.0
        %680 = vmatpush1.xpose.msra.mxu0 0.0
        %681 = vmatprep.subr.mxu0 0.0
        %682 = vmatpush1.xpose.msra.mxu0 0.0
        %683 = vmatprep.subr.mxu0 0.0
        %684 = vmatpush1.xpose.msra.mxu0 0.0
        %685 = vmatprep.subr.mxu0 0.0
        %686 = vmatpush1.xpose.msra.mxu0 0.0
        %687 = vmatprep.subr.mxu0 0.0
        %688 = vmatpush1.xpose.msra.mxu0 0.0
        %689 = vmatprep.subr.mxu0 0.0
        %690 = vmatpush1.xpose.msra.mxu0 0.0
        %691 = vmatprep.mubr.f32.mxu0 0.0
        %692 = vmatmul.mubr.f32.gmra.mrb[0].mxu0 %v623
        %v693 = vpop.f32.mrb[0].mxu0
        %v694 = vadd.f32 0.0, %v693
        %v695 = vpop.f32.mrb[0].mxu0
        %696 = vdwg.mxu0
        %v697 = vsel %vm391, %v463, -inf
        %698 = vmax.xlane.f32.xlu0 %v697
        %v699 = vpop.xlane.xlu0 %698
        %v700 = vsel %vm391, %v540, -inf
        %701 = vmax.xlane.f32.xlu0 %v700
        %v702 = vpop.xlane.xlu0 %701
        %v703 = vsel %vm391, %v617, -inf
        %704 = vmax.xlane.f32.xlu0 %v703
        %v705 = vpop.xlane.xlu0 %704
        %v706 = vsel %vm391, %v694, -inf
        %707 = vmax.xlane.f32.xlu0 %v706
        %v708 = vpop.xlane.xlu0 %707
        %v709 = vsub.f32 %v463, %v699
        %v710 = vsub.f32 %v540, %v702
        %v711 = vsub.f32 %v617, %v705
        %v712 = vsub.f32 %v694, %v708
        %v713 = vmul.f32 %v709, 1.442695
        %v714 = vpow.pop %v713
        %v715 = vmul.f32 %v710, 1.442695
        %v716 = vpow.pop %v715
        %v717 = vmul.f32 %v711, 1.442695
        %v718 = vpow.pop %v717
        %v719 = vmul.f32 %v712, 1.442695
        %v720 = vpow.pop %v719
        %v721 = vsel %vm391, %v714, 0.0
        %722 = vadd.xlane.f32.xlu0 %v721
        %v723 = vpop.xlane.xlu0 %722
        %v724 = vsel %vm391, %v716, 0.0
        %725 = vadd.xlane.f32.xlu0 %v724
        %v726 = vpop.xlane.xlu0 %725
        %v727 = vsel %vm391, %v718, 0.0
        %728 = vadd.xlane.f32.xlu0 %v727
        %v729 = vpop.xlane.xlu0 %728
        %v730 = vsel %vm391, %v720, 0.0
        %731 = vadd.xlane.f32.xlu0 %v730
        %v732 = vpop.xlane.xlu0 %731
        %v733 = vrcp.pop %v723
        %v734 = vrcp.pop %v726
        %v735 = vrcp.pop %v729
        %v736 = vrcp.pop %v732
        %v737 = vmul.f32 %v714, %v733
        %v738 = vmul.f32 %v716, %v734
        %v739 = vmul.f32 %v718, %v735
        %v740 = vmul.f32 %v720, %v736
        %741 = vrot.lane.b32.xlu0 %v313, 120
        %v742 = vpop.permute.xlu0 %741
        %743 = vrot.lane.b32.xlu0 %v313, 88
        %v744 = vpop.permute.xlu0 %743
        %v745 = vsel %vm391, %v742, 0
        %v747 = vsel %vm391, %v744, 0
        %749 = vmatprep.subr.mxu0 0.0
        %750 = vmatpush1.xpose.msra.mxu0 %v747
        %751 = vmatprep.subr.mxu0 0.0
        %752 = vmatpush1.xpose.msra.mxu0 0.0
        %753 = vmatprep.subr.mxu0 0.0
        %754 = vmatpush1.xpose.msra.mxu0 0.0
        %755 = vmatprep.subr.mxu0 0.0
        %756 = vmatpush1.xpose.msra.mxu0 0.0
        %757 = vmatprep.subr.mxu0 0.0
        %758 = vmatpush1.xpose.msra.mxu0 0.0
        %759 = vmatprep.subr.mxu0 0.0
        %760 = vmatpush1.xpose.msra.mxu0 0.0
        %761 = vmatprep.subr.mxu0 0.0
        %762 = vmatpush1.xpose.msra.mxu0 0.0
        %763 = vmatprep.subr.mxu0 0.0
        %764 = vmatpush1.xpose.msra.mxu0 0.0
        %765 = vmatprep.subr.mxu0 0.0
        %766 = vmatpush1.xpose.msra.mxu0 0.0
        %767 = vmatprep.subr.mxu0 0.0
        %768 = vmatpush1.xpose.msra.mxu0 0.0
        %769 = vmatprep.subr.mxu0 0.0
        %770 = vmatpush1.xpose.msra.mxu0 0.0
        %771 = vmatprep.subr.mxu0 0.0
        %772 = vmatpush1.xpose.msra.mxu0 0.0
        %773 = vmatprep.subr.mxu0 0.0
        %774 = vmatpush1.xpose.msra.mxu0 0.0
        %775 = vmatprep.subr.mxu0 0.0
        %776 = vmatpush1.xpose.msra.mxu0 0.0
        %777 = vmatprep.subr.mxu0 0.0
        %778 = vmatpush1.xpose.msra.mxu0 0.0
        %779 = vmatprep.subr.mxu0 0.0
        %780 = vmatpush1.xpose.msra.mxu0 0.0
        %781 = vmatprep.subr.mxu0 0.0
        %782 = vmatpush1.xpose.msra.mxu0 0.0
        %783 = vmatprep.subr.mxu0 0.0
        %784 = vmatpush1.xpose.msra.mxu0 0.0
        %785 = vmatprep.subr.mxu0 0.0
        %786 = vmatpush1.xpose.msra.mxu0 0.0
        %787 = vmatprep.subr.mxu0 0.0
        %788 = vmatpush1.xpose.msra.mxu0 0.0
        %789 = vmatprep.subr.mxu0 0.0
        %790 = vmatpush1.xpose.msra.mxu0 0.0
        %791 = vmatprep.subr.mxu0 0.0
        %792 = vmatpush1.xpose.msra.mxu0 0.0
        %793 = vmatprep.subr.mxu0 0.0
        %794 = vmatpush1.xpose.msra.mxu0 0.0
        %795 = vmatprep.subr.mxu0 0.0
        %796 = vmatpush1.xpose.msra.mxu0 0.0
        %797 = vmatprep.subr.mxu0 0.0
        %798 = vmatpush1.xpose.msra.mxu0 0.0
        %799 = vmatprep.subr.mxu0 0.0
        %800 = vmatpush1.xpose.msra.mxu0 0.0
        %801 = vmatprep.subr.mxu0 0.0
        %802 = vmatpush1.xpose.msra.mxu0 0.0
        %803 = vmatprep.subr.mxu0 0.0
        %804 = vmatpush1.xpose.msra.mxu0 0.0
        %805 = vmatprep.subr.mxu0 0.0
        %806 = vmatpush1.xpose.msra.mxu0 0.0
        %807 = vmatprep.subr.mxu0 0.0
        %808 = vmatpush1.xpose.msra.mxu0 0.0
        %809 = vmatprep.subr.mxu0 0.0
        %810 = vmatpush1.xpose.msra.mxu0 0.0
        %811 = vmatprep.subr.mxu0 0.0
        %812 = vmatpush1.xpose.msra.mxu0 0.0
        %813 = vmatprep.mubr.f32.mxu0 0.0
        %814 = vmatmul.mubr.f32.gmra.mrb[0].mxu0 %v745
        %v815 = vpop.f32.mrb[0].mxu0
        %v816 = vadd.f32 0.0, %v815
        %v817 = vpop.f32.mrb[0].mxu0
        %818 = vdwg.mxu0
        %819 = vrot.lane.b32.xlu0 %v316, 120
        %v820 = vpop.permute.xlu0 %819
        %821 = vrot.lane.b32.xlu0 %v316, 88
        %v822 = vpop.permute.xlu0 %821
        %v823 = vsel %vm391, %v820, 0
        %v825 = vsel %vm391, %v822, 0
        %827 = vmatprep.subr.mxu0 0.0
        %828 = vmatpush1.xpose.msra.mxu0 %v825
        %829 = vmatprep.subr.mxu0 0.0
        %830 = vmatpush1.xpose.msra.mxu0 0.0
        %831 = vmatprep.subr.mxu0 0.0
        %832 = vmatpush1.xpose.msra.mxu0 0.0
        %833 = vmatprep.subr.mxu0 0.0
        %834 = vmatpush1.xpose.msra.mxu0 0.0
        %835 = vmatprep.subr.mxu0 0.0
        %836 = vmatpush1.xpose.msra.mxu0 0.0
        %837 = vmatprep.subr.mxu0 0.0
        %838 = vmatpush1.xpose.msra.mxu0 0.0
        %839 = vmatprep.subr.mxu0 0.0
        %840 = vmatpush1.xpose.msra.mxu0 0.0
        %841 = vmatprep.subr.mxu0 0.0
        %842 = vmatpush1.xpose.msra.mxu0 0.0
        %843 = vmatprep.subr.mxu0 0.0
        %844 = vmatpush1.xpose.msra.mxu0 0.0
        %845 = vmatprep.subr.mxu0 0.0
        %846 = vmatpush1.xpose.msra.mxu0 0.0
        %847 = vmatprep.subr.mxu0 0.0
        %848 = vmatpush1.xpose.msra.mxu0 0.0
        %849 = vmatprep.subr.mxu0 0.0
        %850 = vmatpush1.xpose.msra.mxu0 0.0
        %851 = vmatprep.subr.mxu0 0.0
        %852 = vmatpush1.xpose.msra.mxu0 0.0
        %853 = vmatprep.subr.mxu0 0.0
        %854 = vmatpush1.xpose.msra.mxu0 0.0
        %855 = vmatprep.subr.mxu0 0.0
        %856 = vmatpush1.xpose.msra.mxu0 0.0
        %857 = vmatprep.subr.mxu0 0.0
        %858 = vmatpush1.xpose.msra.mxu0 0.0
        %859 = vmatprep.subr.mxu0 0.0
        %860 = vmatpush1.xpose.msra.mxu0 0.0
        %861 = vmatprep.subr.mxu0 0.0
        %862 = vmatpush1.xpose.msra.mxu0 0.0
        %863 = vmatprep.subr.mxu0 0.0
        %864 = vmatpush1.xpose.msra.mxu0 0.0
        %865 = vmatprep.subr.mxu0 0.0
        %866 = vmatpush1.xpose.msra.mxu0 0.0
        %867 = vmatprep.subr.mxu0 0.0
        %868 = vmatpush1.xpose.msra.mxu0 0.0
        %869 = vmatprep.subr.mxu0 0.0
        %870 = vmatpush1.xpose.msra.mxu0 0.0
        %871 = vmatprep.subr.mxu0 0.0
        %872 = vmatpush1.xpose.msra.mxu0 0.0
        %873 = vmatprep.subr.mxu0 0.0
        %874 = vmatpush1.xpose.msra.mxu0 0.0
        %875 = vmatprep.subr.mxu0 0.0
        %876 = vmatpush1.xpose.msra.mxu0 0.0
        %877 = vmatprep.subr.mxu0 0.0
        %878 = vmatpush1.xpose.msra.mxu0 0.0
        %879 = vmatprep.subr.mxu0 0.0
        %880 = vmatpush1.xpose.msra.mxu0 0.0
        %881 = vmatprep.subr.mxu0 0.0
        %882 = vmatpush1.xpose.msra.mxu0 0.0
        %883 = vmatprep.subr.mxu0 0.0
        %884 = vmatpush1.xpose.msra.mxu0 0.0
        %885 = vmatprep.subr.mxu0 0.0
        %886 = vmatpush1.xpose.msra.mxu0 0.0
        %887 = vmatprep.subr.mxu0 0.0
        %888 = vmatpush1.xpose.msra.mxu0 0.0
        %889 = vmatprep.subr.mxu0 0.0
        %890 = vmatpush1.xpose.msra.mxu0 0.0
        %891 = vmatprep.mubr.f32.mxu0 0.0
        %892 = vmatmul.mubr.f32.gmra.mrb[0].mxu0 %v823
        %v893 = vpop.f32.mrb[0].mxu0
        %v894 = vadd.f32 0.0, %v893
        %v895 = vpop.f32.mrb[0].mxu0
        %896 = vdwg.mxu0
        %897 = vrot.lane.b32.xlu0 %v321, 120
        %v898 = vpop.permute.xlu0 %897
        %899 = vrot.lane.b32.xlu0 %v321, 88
        %v900 = vpop.permute.xlu0 %899
        %v901 = vsel %vm391, %v898, 0
        %v903 = vsel %vm391, %v900, 0
        %905 = vmatprep.subr.mxu0 0.0
        %906 = vmatpush1.xpose.msra.mxu0 %v903
        %907 = vmatprep.subr.mxu0 0.0
        %908 = vmatpush1.xpose.msra.mxu0 0.0
        %909 = vmatprep.subr.mxu0 0.0
        %910 = vmatpush1.xpose.msra.mxu0 0.0
        %911 = vmatprep.subr.mxu0 0.0
        %912 = vmatpush1.xpose.msra.mxu0 0.0
        %913 = vmatprep.subr.mxu0 0.0
        %914 = vmatpush1.xpose.msra.mxu0 0.0
        %915 = vmatprep.subr.mxu0 0.0
        %916 = vmatpush1.xpose.msra.mxu0 0.0
        %917 = vmatprep.subr.mxu0 0.0
        %918 = vmatpush1.xpose.msra.mxu0 0.0
        %919 = vmatprep.subr.mxu0 0.0
        %920 = vmatpush1.xpose.msra.mxu0 0.0
        %921 = vmatprep.subr.mxu0 0.0
        %922 = vmatpush1.xpose.msra.mxu0 0.0
        %923 = vmatprep.subr.mxu0 0.0
        %924 = vmatpush1.xpose.msra.mxu0 0.0
        %925 = vmatprep.subr.mxu0 0.0
        %926 = vmatpush1.xpose.msra.mxu0 0.0
        %927 = vmatprep.subr.mxu0 0.0
        %928 = vmatpush1.xpose.msra.mxu0 0.0
        %929 = vmatprep.subr.mxu0 0.0
        %930 = vmatpush1.xpose.msra.mxu0 0.0
        %931 = vmatprep.subr.mxu0 0.0
        %932 = vmatpush1.xpose.msra.mxu0 0.0
        %933 = vmatprep.subr.mxu0 0.0
        %934 = vmatpush1.xpose.msra.mxu0 0.0
        %935 = vmatprep.subr.mxu0 0.0
        %936 = vmatpush1.xpose.msra.mxu0 0.0
        %937 = vmatprep.subr.mxu0 0.0
        %938 = vmatpush1.xpose.msra.mxu0 0.0
        %939 = vmatprep.subr.mxu0 0.0
        %940 = vmatpush1.xpose.msra.mxu0 0.0
        %941 = vmatprep.subr.mxu0 0.0
        %942 = vmatpush1.xpose.msra.mxu0 0.0
        %943 = vmatprep.subr.mxu0 0.0
        %944 = vmatpush1.xpose.msra.mxu0 0.0
        %945 = vmatprep.subr.mxu0 0.0
        %946 = vmatpush1.xpose.msra.mxu0 0.0
        %947 = vmatprep.subr.mxu0 0.0
        %948 = vmatpush1.xpose.msra.mxu0 0.0
        %949 = vmatprep.subr.mxu0 0.0
        %950 = vmatpush1.xpose.msra.mxu0 0.0
        %951 = vmatprep.subr.mxu0 0.0
        %952 = vmatpush1.xpose.msra.mxu0 0.0
        %953 = vmatprep.subr.mxu0 0.0
        %954 = vmatpush1.xpose.msra.mxu0 0.0
        %955 = vmatprep.subr.mxu0 0.0
        %956 = vmatpush1.xpose.msra.mxu0 0.0
        %957 = vmatprep.subr.mxu0 0.0
        %958 = vmatpush1.xpose.msra.mxu0 0.0
        %959 = vmatprep.subr.mxu0 0.0
        %960 = vmatpush1.xpose.msra.mxu0 0.0
        %961 = vmatprep.subr.mxu0 0.0
        %962 = vmatpush1.xpose.msra.mxu0 0.0
        %963 = vmatprep.subr.mxu0 0.0
        %964 = vmatpush1.xpose.msra.mxu0 0.0
        %965 = vmatprep.subr.mxu0 0.0
        %966 = vmatpush1.xpose.msra.mxu0 0.0
        %967 = vmatprep.subr.mxu0 0.0
        %968 = vmatpush1.xpose.msra.mxu0 0.0
        %969 = vmatprep.mubr.f32.mxu0 0.0
        %970 = vmatmul.mubr.f32.gmra.mrb[0].mxu0 %v901
        %v971 = vpop.f32.mrb[0].mxu0
        %v972 = vadd.f32 0.0, %v971
        %v973 = vpop.f32.mrb[0].mxu0
        %974 = vdwg.mxu0
        %975 = vrot.lane.b32.xlu0 %v324, 120
        %v976 = vpop.permute.xlu0 %975
        %977 = vrot.lane.b32.xlu0 %v324, 88
        %v978 = vpop.permute.xlu0 %977
        %v979 = vsel %vm391, %v976, 0
        %v981 = vsel %vm391, %v978, 0
        %983 = vmatprep.subr.mxu0 0.0
        %984 = vmatpush1.xpose.msra.mxu0 %v981
        %985 = vmatprep.subr.mxu0 0.0
        %986 = vmatpush1.xpose.msra.mxu0 0.0
        %987 = vmatprep.subr.mxu0 0.0
        %988 = vmatpush1.xpose.msra.mxu0 0.0
        %989 = vmatprep.subr.mxu0 0.0
        %990 = vmatpush1.xpose.msra.mxu0 0.0
        %991 = vmatprep.subr.mxu0 0.0
        %992 = vmatpush1.xpose.msra.mxu0 0.0
        %993 = vmatprep.subr.mxu0 0.0
        %994 = vmatpush1.xpose.msra.mxu0 0.0
        %995 = vmatprep.subr.mxu0 0.0
        %996 = vmatpush1.xpose.msra.mxu0 0.0
        %997 = vmatprep.subr.mxu0 0.0
        %998 = vmatpush1.xpose.msra.mxu0 0.0
        %999 = vmatprep.subr.mxu0 0.0
        %1000 = vmatpush1.xpose.msra.mxu0 0.0
        %1001 = vmatprep.subr.mxu0 0.0
        %1002 = vmatpush1.xpose.msra.mxu0 0.0
        %1003 = vmatprep.subr.mxu0 0.0
        %1004 = vmatpush1.xpose.msra.mxu0 0.0
        %1005 = vmatprep.subr.mxu0 0.0
        %1006 = vmatpush1.xpose.msra.mxu0 0.0
        %1007 = vmatprep.subr.mxu0 0.0
        %1008 = vmatpush1.xpose.msra.mxu0 0.0
        %1009 = vmatprep.subr.mxu0 0.0
        %1010 = vmatpush1.xpose.msra.mxu0 0.0
        %1011 = vmatprep.subr.mxu0 0.0
        %1012 = vmatpush1.xpose.msra.mxu0 0.0
        %1013 = vmatprep.subr.mxu0 0.0
        %1014 = vmatpush1.xpose.msra.mxu0 0.0
        %1015 = vmatprep.subr.mxu0 0.0
        %1016 = vmatpush1.xpose.msra.mxu0 0.0
        %1017 = vmatprep.subr.mxu0 0.0
        %1018 = vmatpush1.xpose.msra.mxu0 0.0
        %1019 = vmatprep.subr.mxu0 0.0
        %1020 = vmatpush1.xpose.msra.mxu0 0.0
        %1021 = vmatprep.subr.mxu0 0.0
        %1022 = vmatpush1.xpose.msra.mxu0 0.0
        %1023 = vmatprep.subr.mxu0 0.0
        %1024 = vmatpush1.xpose.msra.mxu0 0.0
        %1025 = vmatprep.subr.mxu0 0.0
        %1026 = vmatpush1.xpose.msra.mxu0 0.0
        %1027 = vmatprep.subr.mxu0 0.0
        %1028 = vmatpush1.xpose.msra.mxu0 0.0
        %1029 = vmatprep.subr.mxu0 0.0
        %1030 = vmatpush1.xpose.msra.mxu0 0.0
        %1031 = vmatprep.subr.mxu0 0.0
        %1032 = vmatpush1.xpose.msra.mxu0 0.0
        %1033 = vmatprep.subr.mxu0 0.0
        %1034 = vmatpush1.xpose.msra.mxu0 0.0
        %1035 = vmatprep.subr.mxu0 0.0
        %1036 = vmatpush1.xpose.msra.mxu0 0.0
        %1037 = vmatprep.subr.mxu0 0.0
        %1038 = vmatpush1.xpose.msra.mxu0 0.0
        %1039 = vmatprep.subr.mxu0 0.0
        %1040 = vmatpush1.xpose.msra.mxu0 0.0
        %1041 = vmatprep.subr.mxu0 0.0
        %1042 = vmatpush1.xpose.msra.mxu0 0.0
        %1043 = vmatprep.subr.mxu0 0.0
        %1044 = vmatpush1.xpose.msra.mxu0 0.0
        %1045 = vmatprep.subr.mxu0 0.0
        %1046 = vmatpush1.xpose.msra.mxu0 0.0
        %1047 = vmatprep.mubr.f32.mxu0 0.0
        %1048 = vmatmul.mubr.f32.gmra.mrb[0].mxu0 %v979
        %v1049 = vpop.f32.mrb[0].mxu0
        %v1050 = vadd.f32 0.0, %v1049
        %v1051 = vpop.f32.mrb[0].mxu0
        %1052 = vdwg.mxu0
        %v1053 = vsel %vm391, %v816, -inf
        %1054 = vmax.xlane.f32.xlu0 %v1053
        %v1055 = vpop.xlane.xlu0 %1054
        %v1056 = vsel %vm391, %v894, -inf
        %1057 = vmax.xlane.f32.xlu0 %v1056
        %v1058 = vpop.xlane.xlu0 %1057
        %v1059 = vsel %vm391, %v972, -inf
        %1060 = vmax.xlane.f32.xlu0 %v1059
        %v1061 = vpop.xlane.xlu0 %1060
        %v1062 = vsel %vm391, %v1050, -inf
        %1063 = vmax.xlane.f32.xlu0 %v1062
        %v1064 = vpop.xlane.xlu0 %1063
        %v1065 = vsub.f32 %v816, %v1055
        %v1066 = vsub.f32 %v894, %v1058
        %v1067 = vsub.f32 %v972, %v1061
        %v1068 = vsub.f32 %v1050, %v1064
        %v1069 = vmul.f32 %v1065, 1.442695
        %v1070 = vpow.pop %v1069
        %v1071 = vmul.f32 %v1066, 1.442695
        %v1072 = vpow.pop %v1071
        %v1073 = vmul.f32 %v1067, 1.442695
        %v1074 = vpow.pop %v1073
        %v1075 = vmul.f32 %v1068, 1.442695
        %v1076 = vpow.pop %v1075
        %v1077 = vsel %vm391, %v1070, 0.0
        %1078 = vadd.xlane.f32.xlu0 %v1077
        %v1079 = vpop.xlane.xlu0 %1078
        %v1080 = vsel %vm391, %v1072, 0.0
        %1081 = vadd.xlane.f32.xlu0 %v1080
        %v1082 = vpop.xlane.xlu0 %1081
        %v1083 = vsel %vm391, %v1074, 0.0
        %1084 = vadd.xlane.f32.xlu0 %v1083
        %v1085 = vpop.xlane.xlu0 %1084
        %v1086 = vsel %vm391, %v1076, 0.0
        %1087 = vadd.xlane.f32.xlu0 %v1086
        %v1088 = vpop.xlane.xlu0 %1087
        %v1089 = vrcp.pop %v1079
        %v1090 = vrcp.pop %v1082
        %v1091 = vrcp.pop %v1085
        %v1092 = vrcp.pop %v1088
        %v1093 = vmul.f32 %v1070, %v1089
        %v1094 = vmul.f32 %v1072, %v1090
        %v1095 = vmul.f32 %v1074, %v1091
        %v1096 = vmul.f32 %v1076, %v1092
        %1098 = vrot.lane.b32.xlu0 %v374, 96
        %v1099 = vpop.permute.xlu0 %1098
        %v1102 = vsel %vm391, %v1093, 0
        %1104 = vmatprep.subr.mxu0 0.0
        %1105 = vmatpush1.msra.mxu0 %v1099
        %1106 = vmatprep.subr.mxu0 0.0
        %1107 = vmatpush1.msra.mxu0 0.0
        %1108 = vmatprep.subr.mxu0 0.0
        %1109 = vmatpush1.msra.mxu0 0.0
        %1110 = vmatprep.subr.mxu0 0.0
        %1111 = vmatpush1.msra.mxu0 0.0
        %1112 = vmatprep.subr.mxu0 0.0
        %1113 = vmatpush1.msra.mxu0 0.0
        %1114 = vmatprep.subr.mxu0 0.0
        %1115 = vmatpush1.msra.mxu0 0.0
        %1116 = vmatprep.subr.mxu0 0.0
        %1117 = vmatpush1.msra.mxu0 0.0
        %1118 = vmatprep.subr.mxu0 0.0
        %1119 = vmatpush1.msra.mxu0 0.0
        %1120 = vmatprep.subr.mxu0 0.0
        %1121 = vmatpush1.msra.mxu0 0.0
        %1122 = vmatprep.subr.mxu0 0.0
        %1123 = vmatpush1.msra.mxu0 0.0
        %1124 = vmatprep.subr.mxu0 0.0
        %1125 = vmatpush1.msra.mxu0 0.0
        %1126 = vmatprep.subr.mxu0 0.0
        %1127 = vmatpush1.msra.mxu0 0.0
        %1128 = vmatprep.subr.mxu0 0.0
        %1129 = vmatpush1.msra.mxu0 0.0
        %1130 = vmatprep.subr.mxu0 0.0
        %1131 = vmatpush1.msra.mxu0 0.0
        %1132 = vmatprep.subr.mxu0 0.0
        %1133 = vmatpush1.msra.mxu0 0.0
        %1134 = vmatprep.subr.mxu0 0.0
        %1135 = vmatpush1.msra.mxu0 0.0
        %1136 = vmatprep.subr.mxu0 0.0
        %1137 = vmatpush1.msra.mxu0 0.0
        %1138 = vmatprep.subr.mxu0 0.0
        %1139 = vmatpush1.msra.mxu0 0.0
        %1140 = vmatprep.subr.mxu0 0.0
        %1141 = vmatpush1.msra.mxu0 0.0
        %1142 = vmatprep.subr.mxu0 0.0
        %1143 = vmatpush1.msra.mxu0 0.0
        %1144 = vmatprep.subr.mxu0 0.0
        %1145 = vmatpush1.msra.mxu0 0.0
        %1146 = vmatprep.subr.mxu0 0.0
        %1147 = vmatpush1.msra.mxu0 0.0
        %1148 = vmatprep.subr.mxu0 0.0
        %1149 = vmatpush1.msra.mxu0 0.0
        %1150 = vmatprep.subr.mxu0 0.0
        %1151 = vmatpush1.msra.mxu0 0.0
        %1152 = vmatprep.subr.mxu0 0.0
        %1153 = vmatpush1.msra.mxu0 0.0
        %1154 = vmatprep.subr.mxu0 0.0
        %1155 = vmatpush1.msra.mxu0 0.0
        %1156 = vmatprep.subr.mxu0 0.0
        %1157 = vmatpush1.msra.mxu0 0.0
        %1158 = vmatprep.subr.mxu0 0.0
        %1159 = vmatpush1.msra.mxu0 0.0
        %1160 = vmatprep.subr.mxu0 0.0
        %1161 = vmatpush1.msra.mxu0 0.0
        %1162 = vmatprep.subr.mxu0 0.0
        %1163 = vmatpush1.msra.mxu0 0.0
        %1164 = vmatprep.subr.mxu0 0.0
        %1165 = vmatpush1.msra.mxu0 0.0
        %1166 = vmatprep.subr.mxu0 0.0
        %1167 = vmatpush1.msra.mxu0 0.0
        %1168 = vmatprep.mubr.f32.mxu0 0.0
        %1169 = vmatmul.mubr.f32.gmra.mrb[0].mxu0 %v1102
        %v1170 = vpop.f32.mrb[0].mxu0
        %v1171 = vadd.f32 0.0, %v1170
        %v1172 = vpop.f32.mrb[0].mxu0
        %1173 = vdwg.mxu0
        %1175 = vrot.lane.b32.xlu0 %v377, 96
        %v1176 = vpop.permute.xlu0 %1175
        %v1179 = vsel %vm391, %v1094, 0
        %1181 = vmatprep.subr.mxu0 0.0
        %1182 = vmatpush1.msra.mxu0 %v1176
        %1183 = vmatprep.subr.mxu0 0.0
        %1184 = vmatpush1.msra.mxu0 0.0
        %1185 = vmatprep.subr.mxu0 0.0
        %1186 = vmatpush1.msra.mxu0 0.0
        %1187 = vmatprep.subr.mxu0 0.0
        %1188 = vmatpush1.msra.mxu0 0.0
        %1189 = vmatprep.subr.mxu0 0.0
        %1190 = vmatpush1.msra.mxu0 0.0
        %1191 = vmatprep.subr.mxu0 0.0
        %1192 = vmatpush1.msra.mxu0 0.0
        %1193 = vmatprep.subr.mxu0 0.0
        %1194 = vmatpush1.msra.mxu0 0.0
        %1195 = vmatprep.subr.mxu0 0.0
        %1196 = vmatpush1.msra.mxu0 0.0
        %1197 = vmatprep.subr.mxu0 0.0
        %1198 = vmatpush1.msra.mxu0 0.0
        %1199 = vmatprep.subr.mxu0 0.0
        %1200 = vmatpush1.msra.mxu0 0.0
        %1201 = vmatprep.subr.mxu0 0.0
        %1202 = vmatpush1.msra.mxu0 0.0
        %1203 = vmatprep.subr.mxu0 0.0
        %1204 = vmatpush1.msra.mxu0 0.0
        %1205 = vmatprep.subr.mxu0 0.0
        %1206 = vmatpush1.msra.mxu0 0.0
        %1207 = vmatprep.subr.mxu0 0.0
        %1208 = vmatpush1.msra.mxu0 0.0
        %1209 = vmatprep.subr.mxu0 0.0
        %1210 = vmatpush1.msra.mxu0 0.0
        %1211 = vmatprep.subr.mxu0 0.0
        %1212 = vmatpush1.msra.mxu0 0.0
        %1213 = vmatprep.subr.mxu0 0.0
        %1214 = vmatpush1.msra.mxu0 0.0
        %1215 = vmatprep.subr.mxu0 0.0
        %1216 = vmatpush1.msra.mxu0 0.0
        %1217 = vmatprep.subr.mxu0 0.0
        %1218 = vmatpush1.msra.mxu0 0.0
        %1219 = vmatprep.subr.mxu0 0.0
        %1220 = vmatpush1.msra.mxu0 0.0
        %1221 = vmatprep.subr.mxu0 0.0
        %1222 = vmatpush1.msra.mxu0 0.0
        %1223 = vmatprep.subr.mxu0 0.0
        %1224 = vmatpush1.msra.mxu0 0.0
        %1225 = vmatprep.subr.mxu0 0.0
        %1226 = vmatpush1.msra.mxu0 0.0
        %1227 = vmatprep.subr.mxu0 0.0
        %1228 = vmatpush1.msra.mxu0 0.0
        %1229 = vmatprep.subr.mxu0 0.0
        %1230 = vmatpush1.msra.mxu0 0.0
        %1231 = vmatprep.subr.mxu0 0.0
        %1232 = vmatpush1.msra.mxu0 0.0
        %1233 = vmatprep.subr.mxu0 0.0
        %1234 = vmatpush1.msra.mxu0 0.0
        %1235 = vmatprep.subr.mxu0 0.0
        %1236 = vmatpush1.msra.mxu0 0.0
        %1237 = vmatprep.subr.mxu0 0.0
        %1238 = vmatpush1.msra.mxu0 0.0
        %1239 = vmatprep.subr.mxu0 0.0
        %1240 = vmatpush1.msra.mxu0 0.0
        %1241 = vmatprep.subr.mxu0 0.0
        %1242 = vmatpush1.msra.mxu0 0.0
        %1243 = vmatprep.subr.mxu0 0.0
        %1244 = vmatpush1.msra.mxu0 0.0
        %1245 = vmatprep.mubr.f32.mxu0 0.0
        %1246 = vmatmul.mubr.f32.gmra.mrb[0].mxu0 %v1179
        %v1247 = vpop.f32.mrb[0].mxu0
        %v1248 = vadd.f32 0.0, %v1247
        %v1249 = vpop.f32.mrb[0].mxu0
        %1250 = vdwg.mxu0
        %1252 = vrot.lane.b32.xlu0 %v382, 96
        %v1253 = vpop.permute.xlu0 %1252
        %v1256 = vsel %vm391, %v1095, 0
        %1258 = vmatprep.subr.mxu0 0.0
        %1259 = vmatpush1.msra.mxu0 %v1253
        %1260 = vmatprep.subr.mxu0 0.0
        %1261 = vmatpush1.msra.mxu0 0.0
        %1262 = vmatprep.subr.mxu0 0.0
        %1263 = vmatpush1.msra.mxu0 0.0
        %1264 = vmatprep.subr.mxu0 0.0
        %1265 = vmatpush1.msra.mxu0 0.0
        %1266 = vmatprep.subr.mxu0 0.0
        %1267 = vmatpush1.msra.mxu0 0.0
        %1268 = vmatprep.subr.mxu0 0.0
        %1269 = vmatpush1.msra.mxu0 0.0
        %1270 = vmatprep.subr.mxu0 0.0
        %1271 = vmatpush1.msra.mxu0 0.0
        %1272 = vmatprep.subr.mxu0 0.0
        %1273 = vmatpush1.msra.mxu0 0.0
        %1274 = vmatprep.subr.mxu0 0.0
        %1275 = vmatpush1.msra.mxu0 0.0
        %1276 = vmatprep.subr.mxu0 0.0
        %1277 = vmatpush1.msra.mxu0 0.0
        %1278 = vmatprep.subr.mxu0 0.0
        %1279 = vmatpush1.msra.mxu0 0.0
        %1280 = vmatprep.subr.mxu0 0.0
        %1281 = vmatpush1.msra.mxu0 0.0
        %1282 = vmatprep.subr.mxu0 0.0
        %1283 = vmatpush1.msra.mxu0 0.0
        %1284 = vmatprep.subr.mxu0 0.0
        %1285 = vmatpush1.msra.mxu0 0.0
        %1286 = vmatprep.subr.mxu0 0.0
        %1287 = vmatpush1.msra.mxu0 0.0
        %1288 = vmatprep.subr.mxu0 0.0
        %1289 = vmatpush1.msra.mxu0 0.0
        %1290 = vmatprep.subr.mxu0 0.0
        %1291 = vmatpush1.msra.mxu0 0.0
        %1292 = vmatprep.subr.mxu0 0.0
        %1293 = vmatpush1.msra.mxu0 0.0
        %1294 = vmatprep.subr.mxu0 0.0
        %1295 = vmatpush1.msra.mxu0 0.0
        %1296 = vmatprep.subr.mxu0 0.0
        %1297 = vmatpush1.msra.mxu0 0.0
        %1298 = vmatprep.subr.mxu0 0.0
        %1299 = vmatpush1.msra.mxu0 0.0
        %1300 = vmatprep.subr.mxu0 0.0
        %1301 = vmatpush1.msra.mxu0 0.0
        %1302 = vmatprep.subr.mxu0 0.0
        %1303 = vmatpush1.msra.mxu0 0.0
        %1304 = vmatprep.subr.mxu0 0.0
        %1305 = vmatpush1.msra.mxu0 0.0
        %1306 = vmatprep.subr.mxu0 0.0
        %1307 = vmatpush1.msra.mxu0 0.0
        %1308 = vmatprep.subr.mxu0 0.0
        %1309 = vmatpush1.msra.mxu0 0.0
        %1310 = vmatprep.subr.mxu0 0.0
        %1311 = vmatpush1.msra.mxu0 0.0
        %1312 = vmatprep.subr.mxu0 0.0
        %1313 = vmatpush1.msra.mxu0 0.0
        %1314 = vmatprep.subr.mxu0 0.0
        %1315 = vmatpush1.msra.mxu0 0.0
        %1316 = vmatprep.subr.mxu0 0.0
        %1317 = vmatpush1.msra.mxu0 0.0
        %1318 = vmatprep.subr.mxu0 0.0
        %1319 = vmatpush1.msra.mxu0 0.0
        %1320 = vmatprep.subr.mxu0 0.0
        %1321 = vmatpush1.msra.mxu0 0.0
        %1322 = vmatprep.mubr.f32.mxu0 0.0
        %1323 = vmatmul.mubr.f32.gmra.mrb[0].mxu0 %v1256
        %v1324 = vpop.f32.mrb[0].mxu0
        %v1325 = vadd.f32 0.0, %v1324
        %v1326 = vpop.f32.mrb[0].mxu0
        %1327 = vdwg.mxu0
        %1329 = vrot.lane.b32.xlu0 %v385, 96
        %v1330 = vpop.permute.xlu0 %1329
        %v1333 = vsel %vm391, %v1096, 0
        %1335 = vmatprep.subr.mxu0 0.0
        %1336 = vmatpush1.msra.mxu0 %v1330
        %1337 = vmatprep.subr.mxu0 0.0
        %1338 = vmatpush1.msra.mxu0 0.0
        %1339 = vmatprep.subr.mxu0 0.0
        %1340 = vmatpush1.msra.mxu0 0.0
        %1341 = vmatprep.subr.mxu0 0.0
        %1342 = vmatpush1.msra.mxu0 0.0
        %1343 = vmatprep.subr.mxu0 0.0
        %1344 = vmatpush1.msra.mxu0 0.0
        %1345 = vmatprep.subr.mxu0 0.0
        %1346 = vmatpush1.msra.mxu0 0.0
        %1347 = vmatprep.subr.mxu0 0.0
        %1348 = vmatpush1.msra.mxu0 0.0
        %1349 = vmatprep.subr.mxu0 0.0
        %1350 = vmatpush1.msra.mxu0 0.0
        %1351 = vmatprep.subr.mxu0 0.0
        %1352 = vmatpush1.msra.mxu0 0.0
        %1353 = vmatprep.subr.mxu0 0.0
        %1354 = vmatpush1.msra.mxu0 0.0
        %1355 = vmatprep.subr.mxu0 0.0
        %1356 = vmatpush1.msra.mxu0 0.0
        %1357 = vmatprep.subr.mxu0 0.0
        %1358 = vmatpush1.msra.mxu0 0.0
        %1359 = vmatprep.subr.mxu0 0.0
        %1360 = vmatpush1.msra.mxu0 0.0
        %1361 = vmatprep.subr.mxu0 0.0
        %1362 = vmatpush1.msra.mxu0 0.0
        %1363 = vmatprep.subr.mxu0 0.0
        %1364 = vmatpush1.msra.mxu0 0.0
        %1365 = vmatprep.subr.mxu0 0.0
        %1366 = vmatpush1.msra.mxu0 0.0
        %1367 = vmatprep.subr.mxu0 0.0
        %1368 = vmatpush1.msra.mxu0 0.0
        %1369 = vmatprep.subr.mxu0 0.0
        %1370 = vmatpush1.msra.mxu0 0.0
        %1371 = vmatprep.subr.mxu0 0.0
        %1372 = vmatpush1.msra.mxu0 0.0
        %1373 = vmatprep.subr.mxu0 0.0
        %1374 = vmatpush1.msra.mxu0 0.0
        %1375 = vmatprep.subr.mxu0 0.0
        %1376 = vmatpush1.msra.mxu0 0.0
        %1377 = vmatprep.subr.mxu0 0.0
        %1378 = vmatpush1.msra.mxu0 0.0
        %1379 = vmatprep.subr.mxu0 0.0
        %1380 = vmatpush1.msra.mxu0 0.0
        %1381 = vmatprep.subr.mxu0 0.0
        %1382 = vmatpush1.msra.mxu0 0.0
        %1383 = vmatprep.subr.mxu0 0.0
        %1384 = vmatpush1.msra.mxu0 0.0
        %1385 = vmatprep.subr.mxu0 0.0
        %1386 = vmatpush1.msra.mxu0 0.0
        %1387 = vmatprep.subr.mxu0 0.0
        %1388 = vmatpush1.msra.mxu0 0.0
        %1389 = vmatprep.subr.mxu0 0.0
        %1390 = vmatpush1.msra.mxu0 0.0
        %1391 = vmatprep.subr.mxu0 0.0
        %1392 = vmatpush1.msra.mxu0 0.0
        %1393 = vmatprep.subr.mxu0 0.0
        %1394 = vmatpush1.msra.mxu0 0.0
        %1395 = vmatprep.subr.mxu0 0.0
        %1396 = vmatpush1.msra.mxu0 0.0
        %1397 = vmatprep.subr.mxu0 0.0
        %1398 = vmatpush1.msra.mxu0 0.0
        %1399 = vmatprep.mubr.f32.mxu0 0.0
        %1400 = vmatmul.mubr.f32.gmra.mrb[0].mxu0 %v1333
        %v1401 = vpop.f32.mrb[0].mxu0
        %v1402 = vadd.f32 0.0, %v1401
        %v1403 = vpop.f32.mrb[0].mxu0
        %1404 = vdwg.mxu0
        %v1406 = vsel %vm391, %v737, 0
        %1408 = vmatprep.subr.mxu0 0.0
        %1409 = vmatpush1.msra.mxu0 %v374
        %1410 = vmatprep.subr.mxu0 0.0
        %1411 = vmatpush1.msra.mxu0 0.0
        %1412 = vmatprep.subr.mxu0 0.0
        %1413 = vmatpush1.msra.mxu0 0.0
        %1414 = vmatprep.subr.mxu0 0.0
        %1415 = vmatpush1.msra.mxu0 0.0
        %1416 = vmatprep.subr.mxu0 0.0
        %1417 = vmatpush1.msra.mxu0 0.0
        %1418 = vmatprep.subr.mxu0 0.0
        %1419 = vmatpush1.msra.mxu0 0.0
        %1420 = vmatprep.subr.mxu0 0.0
        %1421 = vmatpush1.msra.mxu0 0.0
        %1422 = vmatprep.subr.mxu0 0.0
        %1423 = vmatpush1.msra.mxu0 0.0
        %1424 = vmatprep.subr.mxu0 0.0
        %1425 = vmatpush1.msra.mxu0 0.0
        %1426 = vmatprep.subr.mxu0 0.0
        %1427 = vmatpush1.msra.mxu0 0.0
        %1428 = vmatprep.subr.mxu0 0.0
        %1429 = vmatpush1.msra.mxu0 0.0
        %1430 = vmatprep.subr.mxu0 0.0
        %1431 = vmatpush1.msra.mxu0 0.0
        %1432 = vmatprep.subr.mxu0 0.0
        %1433 = vmatpush1.msra.mxu0 0.0
        %1434 = vmatprep.subr.mxu0 0.0
        %1435 = vmatpush1.msra.mxu0 0.0
        %1436 = vmatprep.subr.mxu0 0.0
        %1437 = vmatpush1.msra.mxu0 0.0
        %1438 = vmatprep.subr.mxu0 0.0
        %1439 = vmatpush1.msra.mxu0 0.0
        %1440 = vmatprep.subr.mxu0 0.0
        %1441 = vmatpush1.msra.mxu0 0.0
        %1442 = vmatprep.subr.mxu0 0.0
        %1443 = vmatpush1.msra.mxu0 0.0
        %1444 = vmatprep.subr.mxu0 0.0
        %1445 = vmatpush1.msra.mxu0 0.0
        %1446 = vmatprep.subr.mxu0 0.0
        %1447 = vmatpush1.msra.mxu0 0.0
        %1448 = vmatprep.subr.mxu0 0.0
        %1449 = vmatpush1.msra.mxu0 0.0
        %1450 = vmatprep.subr.mxu0 0.0
        %1451 = vmatpush1.msra.mxu0 0.0
        %1452 = vmatprep.subr.mxu0 0.0
        %1453 = vmatpush1.msra.mxu0 0.0
        %1454 = vmatprep.subr.mxu0 0.0
        %1455 = vmatpush1.msra.mxu0 0.0
        %1456 = vmatprep.subr.mxu0 0.0
        %1457 = vmatpush1.msra.mxu0 0.0
        %1458 = vmatprep.subr.mxu0 0.0
        %1459 = vmatpush1.msra.mxu0 0.0
        %1460 = vmatprep.subr.mxu0 0.0
        %1461 = vmatpush1.msra.mxu0 0.0
        %1462 = vmatprep.subr.mxu0 0.0
        %1463 = vmatpush1.msra.mxu0 0.0
        %1464 = vmatprep.subr.mxu0 0.0
        %1465 = vmatpush1.msra.mxu0 0.0
        %1466 = vmatprep.subr.mxu0 0.0
        %1467 = vmatpush1.msra.mxu0 0.0
        %1468 = vmatprep.subr.mxu0 0.0
        %1469 = vmatpush1.msra.mxu0 0.0
        %1470 = vmatprep.subr.mxu0 0.0
        %1471 = vmatpush1.msra.mxu0 0.0
        %1472 = vmatprep.mubr.f32.mxu0 0.0
        %1473 = vmatmul.mubr.f32.gmra.mrb[0].mxu0 %v1406
        %v1474 = vpop.f32.mrb[0].mxu0
        %v1475 = vadd.f32 %v1171, %v1474
        %v1476 = vpop.f32.mrb[0].mxu0
        %1477 = vdwg.mxu0
        %v1479 = vsel %vm391, %v738, 0
        %1481 = vmatprep.subr.mxu0 0.0
        %1482 = vmatpush1.msra.mxu0 %v377
        %1483 = vmatprep.subr.mxu0 0.0
        %1484 = vmatpush1.msra.mxu0 0.0
        %1485 = vmatprep.subr.mxu0 0.0
        %1486 = vmatpush1.msra.mxu0 0.0
        %1487 = vmatprep.subr.mxu0 0.0
        %1488 = vmatpush1.msra.mxu0 0.0
        %1489 = vmatprep.subr.mxu0 0.0
        %1490 = vmatpush1.msra.mxu0 0.0
        %1491 = vmatprep.subr.mxu0 0.0
        %1492 = vmatpush1.msra.mxu0 0.0
        %1493 = vmatprep.subr.mxu0 0.0
        %1494 = vmatpush1.msra.mxu0 0.0
        %1495 = vmatprep.subr.mxu0 0.0
        %1496 = vmatpush1.msra.mxu0 0.0
        %1497 = vmatprep.subr.mxu0 0.0
        %1498 = vmatpush1.msra.mxu0 0.0
        %1499 = vmatprep.subr.mxu0 0.0
        %1500 = vmatpush1.msra.mxu0 0.0
        %1501 = vmatprep.subr.mxu0 0.0
        %1502 = vmatpush1.msra.mxu0 0.0
        %1503 = vmatprep.subr.mxu0 0.0
        %1504 = vmatpush1.msra.mxu0 0.0
        %1505 = vmatprep.subr.mxu0 0.0
        %1506 = vmatpush1.msra.mxu0 0.0
        %1507 = vmatprep.subr.mxu0 0.0
        %1508 = vmatpush1.msra.mxu0 0.0
        %1509 = vmatprep.subr.mxu0 0.0
        %1510 = vmatpush1.msra.mxu0 0.0
        %1511 = vmatprep.subr.mxu0 0.0
        %1512 = vmatpush1.msra.mxu0 0.0
        %1513 = vmatprep.subr.mxu0 0.0
        %1514 = vmatpush1.msra.mxu0 0.0
        %1515 = vmatprep.subr.mxu0 0.0
        %1516 = vmatpush1.msra.mxu0 0.0
        %1517 = vmatprep.subr.mxu0 0.0
        %1518 = vmatpush1.msra.mxu0 0.0
        %1519 = vmatprep.subr.mxu0 0.0
        %1520 = vmatpush1.msra.mxu0 0.0
        %1521 = vmatprep.subr.mxu0 0.0
        %1522 = vmatpush1.msra.mxu0 0.0
        %1523 = vmatprep.subr.mxu0 0.0
        %1524 = vmatpush1.msra.mxu0 0.0
        %1525 = vmatprep.subr.mxu0 0.0
        %1526 = vmatpush1.msra.mxu0 0.0
        %1527 = vmatprep.subr.mxu0 0.0
        %1528 = vmatpush1.msra.mxu0 0.0
        %1529 = vmatprep.subr.mxu0 0.0
        %1530 = vmatpush1.msra.mxu0 0.0
        %1531 = vmatprep.subr.mxu0 0.0
        %1532 = vmatpush1.msra.mxu0 0.0
        %1533 = vmatprep.subr.mxu0 0.0
        %1534 = vmatpush1.msra.mxu0 0.0
        %1535 = vmatprep.subr.mxu0 0.0
        %1536 = vmatpush1.msra.mxu0 0.0
        %1537 = vmatprep.subr.mxu0 0.0
        %1538 = vmatpush1.msra.mxu0 0.0
        %1539 = vmatprep.subr.mxu0 0.0
        %1540 = vmatpush1.msra.mxu0 0.0
        %1541 = vmatprep.subr.mxu0 0.0
        %1542 = vmatpush1.msra.mxu0 0.0
        %1543 = vmatprep.subr.mxu0 0.0
        %1544 = vmatpush1.msra.mxu0 0.0
        %1545 = vmatprep.mubr.f32.mxu0 0.0
        %1546 = vmatmul.mubr.f32.gmra.mrb[0].mxu0 %v1479
        %v1547 = vpop.f32.mrb[0].mxu0
        %v1548 = vadd.f32 %v1248, %v1547
        %v1549 = vpop.f32.mrb[0].mxu0
        %1550 = vdwg.mxu0
        %v1552 = vsel %vm391, %v739, 0
        %1554 = vmatprep.subr.mxu0 0.0
        %1555 = vmatpush1.msra.mxu0 %v382
        %1556 = vmatprep.subr.mxu0 0.0
        %1557 = vmatpush1.msra.mxu0 0.0
        %1558 = vmatprep.subr.mxu0 0.0
        %1559 = vmatpush1.msra.mxu0 0.0
        %1560 = vmatprep.subr.mxu0 0.0
        %1561 = vmatpush1.msra.mxu0 0.0
        %1562 = vmatprep.subr.mxu0 0.0
        %1563 = vmatpush1.msra.mxu0 0.0
        %1564 = vmatprep.subr.mxu0 0.0
        %1565 = vmatpush1.msra.mxu0 0.0
        %1566 = vmatprep.subr.mxu0 0.0
        %1567 = vmatpush1.msra.mxu0 0.0
        %1568 = vmatprep.subr.mxu0 0.0
        %1569 = vmatpush1.msra.mxu0 0.0
        %1570 = vmatprep.subr.mxu0 0.0
        %1571 = vmatpush1.msra.mxu0 0.0
        %1572 = vmatprep.subr.mxu0 0.0
        %1573 = vmatpush1.msra.mxu0 0.0
        %1574 = vmatprep.subr.mxu0 0.0
        %1575 = vmatpush1.msra.mxu0 0.0
        %1576 = vmatprep.subr.mxu0 0.0
        %1577 = vmatpush1.msra.mxu0 0.0
        %1578 = vmatprep.subr.mxu0 0.0
        %1579 = vmatpush1.msra.mxu0 0.0
        %1580 = vmatprep.subr.mxu0 0.0
        %1581 = vmatpush1.msra.mxu0 0.0
        %1582 = vmatprep.subr.mxu0 0.0
        %1583 = vmatpush1.msra.mxu0 0.0
        %1584 = vmatprep.subr.mxu0 0.0
        %1585 = vmatpush1.msra.mxu0 0.0
        %1586 = vmatprep.subr.mxu0 0.0
        %1587 = vmatpush1.msra.mxu0 0.0
        %1588 = vmatprep.subr.mxu0 0.0
        %1589 = vmatpush1.msra.mxu0 0.0
        %1590 = vmatprep.subr.mxu0 0.0
        %1591 = vmatpush1.msra.mxu0 0.0
        %1592 = vmatprep.subr.mxu0 0.0
        %1593 = vmatpush1.msra.mxu0 0.0
        %1594 = vmatprep.subr.mxu0 0.0
        %1595 = vmatpush1.msra.mxu0 0.0
        %1596 = vmatprep.subr.mxu0 0.0
        %1597 = vmatpush1.msra.mxu0 0.0
        %1598 = vmatprep.subr.mxu0 0.0
        %1599 = vmatpush1.msra.mxu0 0.0
        %1600 = vmatprep.subr.mxu0 0.0
        %1601 = vmatpush1.msra.mxu0 0.0
        %1602 = vmatprep.subr.mxu0 0.0
        %1603 = vmatpush1.msra.mxu0 0.0
        %1604 = vmatprep.subr.mxu0 0.0
        %1605 = vmatpush1.msra.mxu0 0.0
        %1606 = vmatprep.subr.mxu0 0.0
        %1607 = vmatpush1.msra.mxu0 0.0
        %1608 = vmatprep.subr.mxu0 0.0
        %1609 = vmatpush1.msra.mxu0 0.0
        %1610 = vmatprep.subr.mxu0 0.0
        %1611 = vmatpush1.msra.mxu0 0.0
        %1612 = vmatprep.subr.mxu0 0.0
        %1613 = vmatpush1.msra.mxu0 0.0
        %1614 = vmatprep.subr.mxu0 0.0
        %1615 = vmatpush1.msra.mxu0 0.0
        %1616 = vmatprep.subr.mxu0 0.0
        %1617 = vmatpush1.msra.mxu0 0.0
        %1618 = vmatprep.mubr.f32.mxu0 0.0
        %1619 = vmatmul.mubr.f32.gmra.mrb[0].mxu0 %v1552
        %v1620 = vpop.f32.mrb[0].mxu0
        %v1621 = vadd.f32 %v1325, %v1620
        %v1622 = vpop.f32.mrb[0].mxu0
        %1623 = vdwg.mxu0
        %v1625 = vsel %vm391, %v740, 0
        %1627 = vmatprep.subr.mxu0 0.0
        %1628 = vmatpush1.msra.mxu0 %v385
        %1629 = vmatprep.subr.mxu0 0.0
        %1630 = vmatpush1.msra.mxu0 0.0
        %1631 = vmatprep.subr.mxu0 0.0
        %1632 = vmatpush1.msra.mxu0 0.0
        %1633 = vmatprep.subr.mxu0 0.0
        %1634 = vmatpush1.msra.mxu0 0.0
        %1635 = vmatprep.subr.mxu0 0.0
        %1636 = vmatpush1.msra.mxu0 0.0
        %1637 = vmatprep.subr.mxu0 0.0
        %1638 = vmatpush1.msra.mxu0 0.0
        %1639 = vmatprep.subr.mxu0 0.0
        %1640 = vmatpush1.msra.mxu0 0.0
        %1641 = vmatprep.subr.mxu0 0.0
        %1642 = vmatpush1.msra.mxu0 0.0
        %1643 = vmatprep.subr.mxu0 0.0
        %1644 = vmatpush1.msra.mxu0 0.0
        %1645 = vmatprep.subr.mxu0 0.0
        %1646 = vmatpush1.msra.mxu0 0.0
        %1647 = vmatprep.subr.mxu0 0.0
        %1648 = vmatpush1.msra.mxu0 0.0
        %1649 = vmatprep.subr.mxu0 0.0
        %1650 = vmatpush1.msra.mxu0 0.0
        %1651 = vmatprep.subr.mxu0 0.0
        %1652 = vmatpush1.msra.mxu0 0.0
        %1653 = vmatprep.subr.mxu0 0.0
        %1654 = vmatpush1.msra.mxu0 0.0
        %1655 = vmatprep.subr.mxu0 0.0
        %1656 = vmatpush1.msra.mxu0 0.0
        %1657 = vmatprep.subr.mxu0 0.0
        %1658 = vmatpush1.msra.mxu0 0.0
        %1659 = vmatprep.subr.mxu0 0.0
        %1660 = vmatpush1.msra.mxu0 0.0
        %1661 = vmatprep.subr.mxu0 0.0
        %1662 = vmatpush1.msra.mxu0 0.0
        %1663 = vmatprep.subr.mxu0 0.0
        %1664 = vmatpush1.msra.mxu0 0.0
        %1665 = vmatprep.subr.mxu0 0.0
        %1666 = vmatpush1.msra.mxu0 0.0
        %1667 = vmatprep.subr.mxu0 0.0
        %1668 = vmatpush1.msra.mxu0 0.0
        %1669 = vmatprep.subr.mxu0 0.0
        %1670 = vmatpush1.msra.mxu0 0.0
        %1671 = vmatprep.subr.mxu0 0.0
        %1672 = vmatpush1.msra.mxu0 0.0
        %1673 = vmatprep.subr.mxu0 0.0
        %1674 = vmatpush1.msra.mxu0 0.0
        %1675 = vmatprep.subr.mxu0 0.0
        %1676 = vmatpush1.msra.mxu0 0.0
        %1677 = vmatprep.subr.mxu0 0.0
        %1678 = vmatpush1.msra.mxu0 0.0
        %1679 = vmatprep.subr.mxu0 0.0
        %1680 = vmatpush1.msra.mxu0 0.0
        %1681 = vmatprep.subr.mxu0 0.0
        %1682 = vmatpush1.msra.mxu0 0.0
        %1683 = vmatprep.subr.mxu0 0.0
        %1684 = vmatpush1.msra.mxu0 0.0
        %1685 = vmatprep.subr.mxu0 0.0
        %1686 = vmatpush1.msra.mxu0 0.0
        %1687 = vmatprep.subr.mxu0 0.0
        %1688 = vmatpush1.msra.mxu0 0.0
        %1689 = vmatprep.subr.mxu0 0.0
        %1690 = vmatpush1.msra.mxu0 0.0
        %1691 = vmatprep.mubr.f32.mxu0 0.0
        %1692 = vmatmul.mubr.f32.gmra.mrb[0].mxu0 %v1625
        %v1693 = vpop.f32.mrb[0].mxu0
        %v1694 = vadd.f32 %v1402, %v1693
        %v1695 = vpop.f32.mrb[0].mxu0
        %1696 = vdwg.mxu0
        %1697 = vrot.lane.b32.xlu0 %v313, 112
        %v1698 = vpop.permute.xlu0 %1697
        %1699 = vrot.lane.b32.xlu0 %v313, 80
        %v1700 = vpop.permute.xlu0 %1699
        %v1701 = vsel %vm391, %v1698, 0
        %v1703 = vsel %vm391, %v1700, 0
        %1705 = vmatprep.subr.mxu0 0.0
        %1706 = vmatpush1.xpose.msra.mxu0 %v1703
        %1707 = vmatprep.subr.mxu0 0.0
        %1708 = vmatpush1.xpose.msra.mxu0 0.0
        %1709 = vmatprep.subr.mxu0 0.0
        %1710 = vmatpush1.xpose.msra.mxu0 0.0
        %1711 = vmatprep.subr.mxu0 0.0
        %1712 = vmatpush1.xpose.msra.mxu0 0.0
        %1713 = vmatprep.subr.mxu0 0.0
        %1714 = vmatpush1.xpose.msra.mxu0 0.0
        %1715 = vmatprep.subr.mxu0 0.0
        %1716 = vmatpush1.xpose.msra.mxu0 0.0
        %1717 = vmatprep.subr.mxu0 0.0
        %1718 = vmatpush1.xpose.msra.mxu0 0.0
        %1719 = vmatprep.subr.mxu0 0.0
        %1720 = vmatpush1.xpose.msra.mxu0 0.0
        %1721 = vmatprep.subr.mxu0 0.0
        %1722 = vmatpush1.xpose.msra.mxu0 0.0
        %1723 = vmatprep.subr.mxu0 0.0
        %1724 = vmatpush1.xpose.msra.mxu0 0.0
        %1725 = vmatprep.subr.mxu0 0.0
        %1726 = vmatpush1.xpose.msra.mxu0 0.0
        %1727 = vmatprep.subr.mxu0 0.0
        %1728 = vmatpush1.xpose.msra.mxu0 0.0
        %1729 = vmatprep.subr.mxu0 0.0
        %1730 = vmatpush1.xpose.msra.mxu0 0.0
        %1731 = vmatprep.subr.mxu0 0.0
        %1732 = vmatpush1.xpose.msra.mxu0 0.0
        %1733 = vmatprep.subr.mxu0 0.0
        %1734 = vmatpush1.xpose.msra.mxu0 0.0
        %1735 = vmatprep.subr.mxu0 0.0
        %1736 = vmatpush1.xpose.msra.mxu0 0.0
        %1737 = vmatprep.subr.mxu0 0.0
        %1738 = vmatpush1.xpose.msra.mxu0 0.0
        %1739 = vmatprep.subr.mxu0 0.0
        %1740 = vmatpush1.xpose.msra.mxu0 0.0
        %1741 = vmatprep.subr.mxu0 0.0
        %1742 = vmatpush1.xpose.msra.mxu0 0.0
        %1743 = vmatprep.subr.mxu0 0.0
        %1744 = vmatpush1.xpose.msra.mxu0 0.0
        %1745 = vmatprep.subr.mxu0 0.0
        %1746 = vmatpush1.xpose.msra.mxu0 0.0
        %1747 = vmatprep.subr.mxu0 0.0
        %1748 = vmatpush1.xpose.msra.mxu0 0.0
        %1749 = vmatprep.subr.mxu0 0.0
        %1750 = vmatpush1.xpose.msra.mxu0 0.0
        %1751 = vmatprep.subr.mxu0 0.0
        %1752 = vmatpush1.xpose.msra.mxu0 0.0
        %1753 = vmatprep.subr.mxu0 0.0
        %1754 = vmatpush1.xpose.msra.mxu0 0.0
        %1755 = vmatprep.subr.mxu0 0.0
        %1756 = vmatpush1.xpose.msra.mxu0 0.0
        %1757 = vmatprep.subr.mxu0 0.0
        %1758 = vmatpush1.xpose.msra.mxu0 0.0
        %1759 = vmatprep.subr.mxu0 0.0
        %1760 = vmatpush1.xpose.msra.mxu0 0.0
        %1761 = vmatprep.subr.mxu0 0.0
        %1762 = vmatpush1.xpose.msra.mxu0 0.0
        %1763 = vmatprep.subr.mxu0 0.0
        %1764 = vmatpush1.xpose.msra.mxu0 0.0
        %1765 = vmatprep.subr.mxu0 0.0
        %1766 = vmatpush1.xpose.msra.mxu0 0.0
        %1767 = vmatprep.subr.mxu0 0.0
        %1768 = vmatpush1.xpose.msra.mxu0 0.0
        %1769 = vmatprep.mubr.f32.mxu0 0.0
        %1770 = vmatmul.mubr.f32.gmra.mrb[0].mxu0 %v1701
        %v1771 = vpop.f32.mrb[0].mxu0
        %v1772 = vadd.f32 0.0, %v1771
        %v1773 = vpop.f32.mrb[0].mxu0
        %1774 = vdwg.mxu0
        %1775 = vrot.lane.b32.xlu0 %v316, 112
        %v1776 = vpop.permute.xlu0 %1775
        %1777 = vrot.lane.b32.xlu0 %v316, 80
        %v1778 = vpop.permute.xlu0 %1777
        %v1779 = vsel %vm391, %v1776, 0
        %v1781 = vsel %vm391, %v1778, 0
        %1783 = vmatprep.subr.mxu0 0.0
        %1784 = vmatpush1.xpose.msra.mxu0 %v1781
        %1785 = vmatprep.subr.mxu0 0.0
        %1786 = vmatpush1.xpose.msra.mxu0 0.0
        %1787 = vmatprep.subr.mxu0 0.0
        %1788 = vmatpush1.xpose.msra.mxu0 0.0
        %1789 = vmatprep.subr.mxu0 0.0
        %1790 = vmatpush1.xpose.msra.mxu0 0.0
        %1791 = vmatprep.subr.mxu0 0.0
        %1792 = vmatpush1.xpose.msra.mxu0 0.0
        %1793 = vmatprep.subr.mxu0 0.0
        %1794 = vmatpush1.xpose.msra.mxu0 0.0
        %1795 = vmatprep.subr.mxu0 0.0
        %1796 = vmatpush1.xpose.msra.mxu0 0.0
        %1797 = vmatprep.subr.mxu0 0.0
        %1798 = vmatpush1.xpose.msra.mxu0 0.0
        %1799 = vmatprep.subr.mxu0 0.0
        %1800 = vmatpush1.xpose.msra.mxu0 0.0
        %1801 = vmatprep.subr.mxu0 0.0
        %1802 = vmatpush1.xpose.msra.mxu0 0.0
        %1803 = vmatprep.subr.mxu0 0.0
        %1804 = vmatpush1.xpose.msra.mxu0 0.0
        %1805 = vmatprep.subr.mxu0 0.0
        %1806 = vmatpush1.xpose.msra.mxu0 0.0
        %1807 = vmatprep.subr.mxu0 0.0
        %1808 = vmatpush1.xpose.msra.mxu0 0.0
        %1809 = vmatprep.subr.mxu0 0.0
        %1810 = vmatpush1.xpose.msra.mxu0 0.0
        %1811 = vmatprep.subr.mxu0 0.0
        %1812 = vmatpush1.xpose.msra.mxu0 0.0
        %1813 = vmatprep.subr.mxu0 0.0
        %1814 = vmatpush1.xpose.msra.mxu0 0.0
        %1815 = vmatprep.subr.mxu0 0.0
        %1816 = vmatpush1.xpose.msra.mxu0 0.0
        %1817 = vmatprep.subr.mxu0 0.0
        %1818 = vmatpush1.xpose.msra.mxu0 0.0
        %1819 = vmatprep.subr.mxu0 0.0
        %1820 = vmatpush1.xpose.msra.mxu0 0.0
        %1821 = vmatprep.subr.mxu0 0.0
        %1822 = vmatpush1.xpose.msra.mxu0 0.0
        %1823 = vmatprep.subr.mxu0 0.0
        %1824 = vmatpush1.xpose.msra.mxu0 0.0
        %1825 = vmatprep.subr.mxu0 0.0
        %1826 = vmatpush1.xpose.msra.mxu0 0.0
        %1827 = vmatprep.subr.mxu0 0.0
        %1828 = vmatpush1.xpose.msra.mxu0 0.0
        %1829 = vmatprep.subr.mxu0 0.0
        %1830 = vmatpush1.xpose.msra.mxu0 0.0
        %1831 = vmatprep.subr.mxu0 0.0
        %1832 = vmatpush1.xpose.msra.mxu0 0.0
        %1833 = vmatprep.subr.mxu0 0.0
        %1834 = vmatpush1.xpose.msra.mxu0 0.0
        %1835 = vmatprep.subr.mxu0 0.0
        %1836 = vmatpush1.xpose.msra.mxu0 0.0
        %1837 = vmatprep.subr.mxu0 0.0
        %1838 = vmatpush1.xpose.msra.mxu0 0.0
        %1839 = vmatprep.subr.mxu0 0.0
        %1840 = vmatpush1.xpose.msra.mxu0 0.0
        %1841 = vmatprep.subr.mxu0 0.0
        %1842 = vmatpush1.xpose.msra.mxu0 0.0
        %1843 = vmatprep.subr.mxu0 0.0
        %1844 = vmatpush1.xpose.msra.mxu0 0.0
        %1845 = vmatprep.subr.mxu0 0.0
        %1846 = vmatpush1.xpose.msra.mxu0 0.0
        %1847 = vmatprep.mubr.f32.mxu0 0.0
        %1848 = vmatmul.mubr.f32.gmra.mrb[0].mxu0 %v1779
        %v1849 = vpop.f32.mrb[0].mxu0
        %v1850 = vadd.f32 0.0, %v1849
        %v1851 = vpop.f32.mrb[0].mxu0
        %1852 = vdwg.mxu0
        %1853 = vrot.lane.b32.xlu0 %v321, 112
        %v1854 = vpop.permute.xlu0 %1853
        %1855 = vrot.lane.b32.xlu0 %v321, 80
        %v1856 = vpop.permute.xlu0 %1855
        %v1857 = vsel %vm391, %v1854, 0
        %v1859 = vsel %vm391, %v1856, 0
        %1861 = vmatprep.subr.mxu0 0.0
        %1862 = vmatpush1.xpose.msra.mxu0 %v1859
        %1863 = vmatprep.subr.mxu0 0.0
        %1864 = vmatpush1.xpose.msra.mxu0 0.0
        %1865 = vmatprep.subr.mxu0 0.0
        %1866 = vmatpush1.xpose.msra.mxu0 0.0
        %1867 = vmatprep.subr.mxu0 0.0
        %1868 = vmatpush1.xpose.msra.mxu0 0.0
        %1869 = vmatprep.subr.mxu0 0.0
        %1870 = vmatpush1.xpose.msra.mxu0 0.0
        %1871 = vmatprep.subr.mxu0 0.0
        %1872 = vmatpush1.xpose.msra.mxu0 0.0
        %1873 = vmatprep.subr.mxu0 0.0
        %1874 = vmatpush1.xpose.msra.mxu0 0.0
        %1875 = vmatprep.subr.mxu0 0.0
        %1876 = vmatpush1.xpose.msra.mxu0 0.0
        %1877 = vmatprep.subr.mxu0 0.0
        %1878 = vmatpush1.xpose.msra.mxu0 0.0
        %1879 = vmatprep.subr.mxu0 0.0
        %1880 = vmatpush1.xpose.msra.mxu0 0.0
        %1881 = vmatprep.subr.mxu0 0.0
        %1882 = vmatpush1.xpose.msra.mxu0 0.0
        %1883 = vmatprep.subr.mxu0 0.0
        %1884 = vmatpush1.xpose.msra.mxu0 0.0
        %1885 = vmatprep.subr.mxu0 0.0
        %1886 = vmatpush1.xpose.msra.mxu0 0.0
        %1887 = vmatprep.subr.mxu0 0.0
        %1888 = vmatpush1.xpose.msra.mxu0 0.0
        %1889 = vmatprep.subr.mxu0 0.0
        %1890 = vmatpush1.xpose.msra.mxu0 0.0
        %1891 = vmatprep.subr.mxu0 0.0
        %1892 = vmatpush1.xpose.msra.mxu0 0.0
        %1893 = vmatprep.subr.mxu0 0.0
        %1894 = vmatpush1.xpose.msra.mxu0 0.0
        %1895 = vmatprep.subr.mxu0 0.0
        %1896 = vmatpush1.xpose.msra.mxu0 0.0
        %1897 = vmatprep.subr.mxu0 0.0
        %1898 = vmatpush1.xpose.msra.mxu0 0.0
        %1899 = vmatprep.subr.mxu0 0.0
        %1900 = vmatpush1.xpose.msra.mxu0 0.0
        %1901 = vmatprep.subr.mxu0 0.0
        %1902 = vmatpush1.xpose.msra.mxu0 0.0
        %1903 = vmatprep.subr.mxu0 0.0
        %1904 = vmatpush1.xpose.msra.mxu0 0.0
        %1905 = vmatprep.subr.mxu0 0.0
        %1906 = vmatpush1.xpose.msra.mxu0 0.0
        %1907 = vmatprep.subr.mxu0 0.0
        %1908 = vmatpush1.xpose.msra.mxu0 0.0
        %1909 = vmatprep.subr.mxu0 0.0
        %1910 = vmatpush1.xpose.msra.mxu0 0.0
        %1911 = vmatprep.subr.mxu0 0.0
        %1912 = vmatpush1.xpose.msra.mxu0 0.0
        %1913 = vmatprep.subr.mxu0 0.0
        %1914 = vmatpush1.xpose.msra.mxu0 0.0
        %1915 = vmatprep.subr.mxu0 0.0
        %1916 = vmatpush1.xpose.msra.mxu0 0.0
        %1917 = vmatprep.subr.mxu0 0.0
        %1918 = vmatpush1.xpose.msra.mxu0 0.0
        %1919 = vmatprep.subr.mxu0 0.0
        %1920 = vmatpush1.xpose.msra.mxu0 0.0
        %1921 = vmatprep.subr.mxu0 0.0
        %1922 = vmatpush1.xpose.msra.mxu0 0.0
        %1923 = vmatprep.subr.mxu0 0.0
        %1924 = vmatpush1.xpose.msra.mxu0 0.0
        %1925 = vmatprep.mubr.f32.mxu0 0.0
        %1926 = vmatmul.mubr.f32.gmra.mrb[0].mxu0 %v1857
        %v1927 = vpop.f32.mrb[0].mxu0
        %v1928 = vadd.f32 0.0, %v1927
        %v1929 = vpop.f32.mrb[0].mxu0
        %1930 = vdwg.mxu0
        %1931 = vrot.lane.b32.xlu0 %v324, 112
        %v1932 = vpop.permute.xlu0 %1931
        %1933 = vrot.lane.b32.xlu0 %v324, 80
        %v1934 = vpop.permute.xlu0 %1933
        %v1935 = vsel %vm391, %v1932, 0
        %v1937 = vsel %vm391, %v1934, 0
        %1939 = vmatprep.subr.mxu0 0.0
        %1940 = vmatpush1.xpose.msra.mxu0 %v1937
        %1941 = vmatprep.subr.mxu0 0.0
        %1942 = vmatpush1.xpose.msra.mxu0 0.0
        %1943 = vmatprep.subr.mxu0 0.0
        %1944 = vmatpush1.xpose.msra.mxu0 0.0
        %1945 = vmatprep.subr.mxu0 0.0
        %1946 = vmatpush1.xpose.msra.mxu0 0.0
        %1947 = vmatprep.subr.mxu0 0.0
        %1948 = vmatpush1.xpose.msra.mxu0 0.0
        %1949 = vmatprep.subr.mxu0 0.0
        %1950 = vmatpush1.xpose.msra.mxu0 0.0
        %1951 = vmatprep.subr.mxu0 0.0
        %1952 = vmatpush1.xpose.msra.mxu0 0.0
        %1953 = vmatprep.subr.mxu0 0.0
        %1954 = vmatpush1.xpose.msra.mxu0 0.0
        %1955 = vmatprep.subr.mxu0 0.0
        %1956 = vmatpush1.xpose.msra.mxu0 0.0
        %1957 = vmatprep.subr.mxu0 0.0
        %1958 = vmatpush1.xpose.msra.mxu0 0.0
        %1959 = vmatprep.subr.mxu0 0.0
        %1960 = vmatpush1.xpose.msra.mxu0 0.0
        %1961 = vmatprep.subr.mxu0 0.0
        %1962 = vmatpush1.xpose.msra.mxu0 0.0
        %1963 = vmatprep.subr.mxu0 0.0
        %1964 = vmatpush1.xpose.msra.mxu0 0.0
        %1965 = vmatprep.subr.mxu0 0.0
        %1966 = vmatpush1.xpose.msra.mxu0 0.0
        %1967 = vmatprep.subr.mxu0 0.0
        %1968 = vmatpush1.xpose.msra.mxu0 0.0
        %1969 = vmatprep.subr.mxu0 0.0
        %1970 = vmatpush1.xpose.msra.mxu0 0.0
        %1971 = vmatprep.subr.mxu0 0.0
        %1972 = vmatpush1.xpose.msra.mxu0 0.0
        %1973 = vmatprep.subr.mxu0 0.0
        %1974 = vmatpush1.xpose.msra.mxu0 0.0
        %1975 = vmatprep.subr.mxu0 0.0
        %1976 = vmatpush1.xpose.msra.mxu0 0.0
        %1977 = vmatprep.subr.mxu0 0.0
        %1978 = vmatpush1.xpose.msra.mxu0 0.0
        %1979 = vmatprep.subr.mxu0 0.0
        %1980 = vmatpush1.xpose.msra.mxu0 0.0
        %1981 = vmatprep.subr.mxu0 0.0
        %1982 = vmatpush1.xpose.msra.mxu0 0.0
        %1983 = vmatprep.subr.mxu0 0.0
        %1984 = vmatpush1.xpose.msra.mxu0 0.0
        %1985 = vmatprep.subr.mxu0 0.0
        %1986 = vmatpush1.xpose.msra.mxu0 0.0
        %1987 = vmatprep.subr.mxu0 0.0
        %1988 = vmatpush1.xpose.msra.mxu0 0.0
        %1989 = vmatprep.subr.mxu0 0.0
        %1990 = vmatpush1.xpose.msra.mxu0 0.0
        %1991 = vmatprep.subr.mxu0 0.0
        %1992 = vmatpush1.xpose.msra.mxu0 0.0
        %1993 = vmatprep.subr.mxu0 0.0
        %1994 = vmatpush1.xpose.msra.mxu0 0.0
        %1995 = vmatprep.subr.mxu0 0.0
        %1996 = vmatpush1.xpose.msra.mxu0 0.0
        %1997 = vmatprep.subr.mxu0 0.0
        %1998 = vmatpush1.xpose.msra.mxu0 0.0
        %1999 = vmatprep.subr.mxu0 0.0
        %2000 = vmatpush1.xpose.msra.mxu0 0.0
        %2001 = vmatprep.subr.mxu0 0.0
        %2002 = vmatpush1.xpose.msra.mxu0 0.0
        %2003 = vmatprep.mubr.f32.mxu0 0.0
        %2004 = vmatmul.mubr.f32.gmra.mrb[0].mxu0 %v1935
        %v2005 = vpop.f32.mrb[0].mxu0
        %v2006 = vadd.f32 0.0, %v2005
        %v2007 = vpop.f32.mrb[0].mxu0
        %2008 = vdwg.mxu0
        %v2009 = vsel %vm391, %v1772, -inf
        %2010 = vmax.xlane.f32.xlu0 %v2009
        %v2011 = vpop.xlane.xlu0 %2010
        %v2012 = vsel %vm391, %v1850, -inf
        %2013 = vmax.xlane.f32.xlu0 %v2012
        %v2014 = vpop.xlane.xlu0 %2013
        %v2015 = vsel %vm391, %v1928, -inf
        %2016 = vmax.xlane.f32.xlu0 %v2015
        %v2017 = vpop.xlane.xlu0 %2016
        %v2018 = vsel %vm391, %v2006, -inf
        %2019 = vmax.xlane.f32.xlu0 %v2018
        %v2020 = vpop.xlane.xlu0 %2019
        %v2021 = vsub.f32 %v1772, %v2011
        %v2022 = vsub.f32 %v1850, %v2014
        %v2023 = vsub.f32 %v1928, %v2017
        %v2024 = vsub.f32 %v2006, %v2020
        %v2025 = vmul.f32 %v2021, 1.442695
        %v2026 = vpow.pop %v2025
        %v2027 = vmul.f32 %v2022, 1.442695
        %v2028 = vpow.pop %v2027
        %v2029 = vmul.f32 %v2023, 1.442695
        %v2030 = vpow.pop %v2029
        %v2031 = vmul.f32 %v2024, 1.442695
        %v2032 = vpow.pop %v2031
        %v2033 = vsel %vm391, %v2026, 0.0
        %2034 = vadd.xlane.f32.xlu0 %v2033
        %v2035 = vpop.xlane.xlu0 %2034
        %v2036 = vsel %vm391, %v2028, 0.0
        %2037 = vadd.xlane.f32.xlu0 %v2036
        %v2038 = vpop.xlane.xlu0 %2037
        %v2039 = vsel %vm391, %v2030, 0.0
        %2040 = vadd.xlane.f32.xlu0 %v2039
        %v2041 = vpop.xlane.xlu0 %2040
        %v2042 = vsel %vm391, %v2032, 0.0
        %2043 = vadd.xlane.f32.xlu0 %v2042
        %v2044 = vpop.xlane.xlu0 %2043
        %v2045 = vrcp.pop %v2035
        %v2046 = vrcp.pop %v2038
        %v2047 = vrcp.pop %v2041
        %v2048 = vrcp.pop %v2044
        %v2049 = vmul.f32 %v2026, %v2045
        %v2050 = vmul.f32 %v2028, %v2046
        %v2051 = vmul.f32 %v2030, %v2047
        %v2052 = vmul.f32 %v2032, %v2048
        %2053 = vrot.lane.b32.xlu0 %v374, 64
        %v2054 = vpop.permute.xlu0 %2053
        %v2057 = vsel %vm391, %v2049, 0
        %2059 = vmatprep.subr.mxu0 0.0
        %2060 = vmatpush1.msra.mxu0 %v2054
        %2061 = vmatprep.subr.mxu0 0.0
        %2062 = vmatpush1.msra.mxu0 0.0
        %2063 = vmatprep.subr.mxu0 0.0
        %2064 = vmatpush1.msra.mxu0 0.0
        %2065 = vmatprep.subr.mxu0 0.0
        %2066 = vmatpush1.msra.mxu0 0.0
        %2067 = vmatprep.subr.mxu0 0.0
        %2068 = vmatpush1.msra.mxu0 0.0
        %2069 = vmatprep.subr.mxu0 0.0
        %2070 = vmatpush1.msra.mxu0 0.0
        %2071 = vmatprep.subr.mxu0 0.0
        %2072 = vmatpush1.msra.mxu0 0.0
        %2073 = vmatprep.subr.mxu0 0.0
        %2074 = vmatpush1.msra.mxu0 0.0
        %2075 = vmatprep.subr.mxu0 0.0
        %2076 = vmatpush1.msra.mxu0 0.0
        %2077 = vmatprep.subr.mxu0 0.0
        %2078 = vmatpush1.msra.mxu0 0.0
        %2079 = vmatprep.subr.mxu0 0.0
        %2080 = vmatpush1.msra.mxu0 0.0
        %2081 = vmatprep.subr.mxu0 0.0
        %2082 = vmatpush1.msra.mxu0 0.0
        %2083 = vmatprep.subr.mxu0 0.0
        %2084 = vmatpush1.msra.mxu0 0.0
        %2085 = vmatprep.subr.mxu0 0.0
        %2086 = vmatpush1.msra.mxu0 0.0
        %2087 = vmatprep.subr.mxu0 0.0
        %2088 = vmatpush1.msra.mxu0 0.0
        %2089 = vmatprep.subr.mxu0 0.0
        %2090 = vmatpush1.msra.mxu0 0.0
        %2091 = vmatprep.subr.mxu0 0.0
        %2092 = vmatpush1.msra.mxu0 0.0
        %2093 = vmatprep.subr.mxu0 0.0
        %2094 = vmatpush1.msra.mxu0 0.0
        %2095 = vmatprep.subr.mxu0 0.0
        %2096 = vmatpush1.msra.mxu0 0.0
        %2097 = vmatprep.subr.mxu0 0.0
        %2098 = vmatpush1.msra.mxu0 0.0
        %2099 = vmatprep.subr.mxu0 0.0
        %2100 = vmatpush1.msra.mxu0 0.0
        %2101 = vmatprep.subr.mxu0 0.0
        %2102 = vmatpush1.msra.mxu0 0.0
        %2103 = vmatprep.subr.mxu0 0.0
        %2104 = vmatpush1.msra.mxu0 0.0
        %2105 = vmatprep.subr.mxu0 0.0
        %2106 = vmatpush1.msra.mxu0 0.0
        %2107 = vmatprep.subr.mxu0 0.0
        %2108 = vmatpush1.msra.mxu0 0.0
        %2109 = vmatprep.subr.mxu0 0.0
        %2110 = vmatpush1.msra.mxu0 0.0
        %2111 = vmatprep.subr.mxu0 0.0
        %2112 = vmatpush1.msra.mxu0 0.0
        %2113 = vmatprep.subr.mxu0 0.0
        %2114 = vmatpush1.msra.mxu0 0.0
        %2115 = vmatprep.subr.mxu0 0.0
        %2116 = vmatpush1.msra.mxu0 0.0
        %2117 = vmatprep.subr.mxu0 0.0
        %2118 = vmatpush1.msra.mxu0 0.0
        %2119 = vmatprep.subr.mxu0 0.0
        %2120 = vmatpush1.msra.mxu0 0.0
        %2121 = vmatprep.subr.mxu0 0.0
        %2122 = vmatpush1.msra.mxu0 0.0
        %2123 = vmatprep.mubr.f32.mxu0 0.0
        %2124 = vmatmul.mubr.f32.gmra.mrb[0].mxu0 %v2057
        %v2125 = vpop.f32.mrb[0].mxu0
        %v2126 = vadd.f32 0.0, %v2125
        %v2127 = vpop.f32.mrb[0].mxu0
        %2128 = vdwg.mxu0
        %2129 = vrot.lane.b32.xlu0 %v377, 64
        %v2130 = vpop.permute.xlu0 %2129
        %v2133 = vsel %vm391, %v2050, 0
        %2135 = vmatprep.subr.mxu0 0.0
        %2136 = vmatpush1.msra.mxu0 %v2130
        %2137 = vmatprep.subr.mxu0 0.0
        %2138 = vmatpush1.msra.mxu0 0.0
        %2139 = vmatprep.subr.mxu0 0.0
        %2140 = vmatpush1.msra.mxu0 0.0
        %2141 = vmatprep.subr.mxu0 0.0
        %2142 = vmatpush1.msra.mxu0 0.0
        %2143 = vmatprep.subr.mxu0 0.0
        %2144 = vmatpush1.msra.mxu0 0.0
        %2145 = vmatprep.subr.mxu0 0.0
        %2146 = vmatpush1.msra.mxu0 0.0
        %2147 = vmatprep.subr.mxu0 0.0
        %2148 = vmatpush1.msra.mxu0 0.0
        %2149 = vmatprep.subr.mxu0 0.0
        %2150 = vmatpush1.msra.mxu0 0.0
        %2151 = vmatprep.subr.mxu0 0.0
        %2152 = vmatpush1.msra.mxu0 0.0
        %2153 = vmatprep.subr.mxu0 0.0
        %2154 = vmatpush1.msra.mxu0 0.0
        %2155 = vmatprep.subr.mxu0 0.0
        %2156 = vmatpush1.msra.mxu0 0.0
        %2157 = vmatprep.subr.mxu0 0.0
        %2158 = vmatpush1.msra.mxu0 0.0
        %2159 = vmatprep.subr.mxu0 0.0
        %2160 = vmatpush1.msra.mxu0 0.0
        %2161 = vmatprep.subr.mxu0 0.0
        %2162 = vmatpush1.msra.mxu0 0.0
        %2163 = vmatprep.subr.mxu0 0.0
        %2164 = vmatpush1.msra.mxu0 0.0
        %2165 = vmatprep.subr.mxu0 0.0
        %2166 = vmatpush1.msra.mxu0 0.0
        %2167 = vmatprep.subr.mxu0 0.0
        %2168 = vmatpush1.msra.mxu0 0.0
        %2169 = vmatprep.subr.mxu0 0.0
        %2170 = vmatpush1.msra.mxu0 0.0
        %2171 = vmatprep.subr.mxu0 0.0
        %2172 = vmatpush1.msra.mxu0 0.0
        %2173 = vmatprep.subr.mxu0 0.0
        %2174 = vmatpush1.msra.mxu0 0.0
        %2175 = vmatprep.subr.mxu0 0.0
        %2176 = vmatpush1.msra.mxu0 0.0
        %2177 = vmatprep.subr.mxu0 0.0
        %2178 = vmatpush1.msra.mxu0 0.0
        %2179 = vmatprep.subr.mxu0 0.0
        %2180 = vmatpush1.msra.mxu0 0.0
        %2181 = vmatprep.subr.mxu0 0.0
        %2182 = vmatpush1.msra.mxu0 0.0
        %2183 = vmatprep.subr.mxu0 0.0
        %2184 = vmatpush1.msra.mxu0 0.0
        %2185 = vmatprep.subr.mxu0 0.0
        %2186 = vmatpush1.msra.mxu0 0.0
        %2187 = vmatprep.subr.mxu0 0.0
        %2188 = vmatpush1.msra.mxu0 0.0
        %2189 = vmatprep.subr.mxu0 0.0
        %2190 = vmatpush1.msra.mxu0 0.0
        %2191 = vmatprep.subr.mxu0 0.0
        %2192 = vmatpush1.msra.mxu0 0.0
        %2193 = vmatprep.subr.mxu0 0.0
        %2194 = vmatpush1.msra.mxu0 0.0
        %2195 = vmatprep.subr.mxu0 0.0
        %2196 = vmatpush1.msra.mxu0 0.0
        %2197 = vmatprep.subr.mxu0 0.0
        %2198 = vmatpush1.msra.mxu0 0.0
        %2199 = vmatprep.mubr.f32.mxu0 0.0
        %2200 = vmatmul.mubr.f32.gmra.mrb[0].mxu0 %v2133
        %v2201 = vpop.f32.mrb[0].mxu0
        %v2202 = vadd.f32 0.0, %v2201
        %v2203 = vpop.f32.mrb[0].mxu0
        %2204 = vdwg.mxu0
        %2205 = vrot.lane.b32.xlu0 %v382, 64
        %v2206 = vpop.permute.xlu0 %2205
        %v2209 = vsel %vm391, %v2051, 0
        %2211 = vmatprep.subr.mxu0 0.0
        %2212 = vmatpush1.msra.mxu0 %v2206
        %2213 = vmatprep.subr.mxu0 0.0
        %2214 = vmatpush1.msra.mxu0 0.0
        %2215 = vmatprep.subr.mxu0 0.0
        %2216 = vmatpush1.msra.mxu0 0.0
        %2217 = vmatprep.subr.mxu0 0.0
        %2218 = vmatpush1.msra.mxu0 0.0
        %2219 = vmatprep.subr.mxu0 0.0
        %2220 = vmatpush1.msra.mxu0 0.0
        %2221 = vmatprep.subr.mxu0 0.0
        %2222 = vmatpush1.msra.mxu0 0.0
        %2223 = vmatprep.subr.mxu0 0.0
        %2224 = vmatpush1.msra.mxu0 0.0
        %2225 = vmatprep.subr.mxu0 0.0
        %2226 = vmatpush1.msra.mxu0 0.0
        %2227 = vmatprep.subr.mxu0 0.0
        %2228 = vmatpush1.msra.mxu0 0.0
        %2229 = vmatprep.subr.mxu0 0.0
        %2230 = vmatpush1.msra.mxu0 0.0
        %2231 = vmatprep.subr.mxu0 0.0
        %2232 = vmatpush1.msra.mxu0 0.0
        %2233 = vmatprep.subr.mxu0 0.0
        %2234 = vmatpush1.msra.mxu0 0.0
        %2235 = vmatprep.subr.mxu0 0.0
        %2236 = vmatpush1.msra.mxu0 0.0
        %2237 = vmatprep.subr.mxu0 0.0
        %2238 = vmatpush1.msra.mxu0 0.0
        %2239 = vmatprep.subr.mxu0 0.0
        %2240 = vmatpush1.msra.mxu0 0.0
        %2241 = vmatprep.subr.mxu0 0.0
        %2242 = vmatpush1.msra.mxu0 0.0
        %2243 = vmatprep.subr.mxu0 0.0
        %2244 = vmatpush1.msra.mxu0 0.0
        %2245 = vmatprep.subr.mxu0 0.0
        %2246 = vmatpush1.msra.mxu0 0.0
        %2247 = vmatprep.subr.mxu0 0.0
        %2248 = vmatpush1.msra.mxu0 0.0
        %2249 = vmatprep.subr.mxu0 0.0
        %2250 = vmatpush1.msra.mxu0 0.0
        %2251 = vmatprep.subr.mxu0 0.0
        %2252 = vmatpush1.msra.mxu0 0.0
        %2253 = vmatprep.subr.mxu0 0.0
        %2254 = vmatpush1.msra.mxu0 0.0
        %2255 = vmatprep.subr.mxu0 0.0
        %2256 = vmatpush1.msra.mxu0 0.0
        %2257 = vmatprep.subr.mxu0 0.0
        %2258 = vmatpush1.msra.mxu0 0.0
        %2259 = vmatprep.subr.mxu0 0.0
        %2260 = vmatpush1.msra.mxu0 0.0
        %2261 = vmatprep.subr.mxu0 0.0
        %2262 = vmatpush1.msra.mxu0 0.0
        %2263 = vmatprep.subr.mxu0 0.0
        %2264 = vmatpush1.msra.mxu0 0.0
        %2265 = vmatprep.subr.mxu0 0.0
        %2266 = vmatpush1.msra.mxu0 0.0
        %2267 = vmatprep.subr.mxu0 0.0
        %2268 = vmatpush1.msra.mxu0 0.0
        %2269 = vmatprep.subr.mxu0 0.0
        %2270 = vmatpush1.msra.mxu0 0.0
        %2271 = vmatprep.subr.mxu0 0.0
        %2272 = vmatpush1.msra.mxu0 0.0
        %2273 = vmatprep.subr.mxu0 0.0
        %2274 = vmatpush1.msra.mxu0 0.0
        %2275 = vmatprep.mubr.f32.mxu0 0.0
        %2276 = vmatmul.mubr.f32.gmra.mrb[0].mxu0 %v2209
        %v2277 = vpop.f32.mrb[0].mxu0
        %v2278 = vadd.f32 0.0, %v2277
        %v2279 = vpop.f32.mrb[0].mxu0
        %2280 = vdwg.mxu0
        %2281 = vrot.lane.b32.xlu0 %v385, 64
        %v2282 = vpop.permute.xlu0 %2281
        %v2285 = vsel %vm391, %v2052, 0
        %2287 = vmatprep.subr.mxu0 0.0
        %2288 = vmatpush1.msra.mxu0 %v2282
        %2289 = vmatprep.subr.mxu0 0.0
        %2290 = vmatpush1.msra.mxu0 0.0
        %2291 = vmatprep.subr.mxu0 0.0
        %2292 = vmatpush1.msra.mxu0 0.0
        %2293 = vmatprep.subr.mxu0 0.0
        %2294 = vmatpush1.msra.mxu0 0.0
        %2295 = vmatprep.subr.mxu0 0.0
        %2296 = vmatpush1.msra.mxu0 0.0
        %2297 = vmatprep.subr.mxu0 0.0
        %2298 = vmatpush1.msra.mxu0 0.0
        %2299 = vmatprep.subr.mxu0 0.0
        %2300 = vmatpush1.msra.mxu0 0.0
        %2301 = vmatprep.subr.mxu0 0.0
        %2302 = vmatpush1.msra.mxu0 0.0
        %2303 = vmatprep.subr.mxu0 0.0
        %2304 = vmatpush1.msra.mxu0 0.0
        %2305 = vmatprep.subr.mxu0 0.0
        %2306 = vmatpush1.msra.mxu0 0.0
        %2307 = vmatprep.subr.mxu0 0.0
        %2308 = vmatpush1.msra.mxu0 0.0
        %2309 = vmatprep.subr.mxu0 0.0
        %2310 = vmatpush1.msra.mxu0 0.0
        %2311 = vmatprep.subr.mxu0 0.0
        %2312 = vmatpush1.msra.mxu0 0.0
        %2313 = vmatprep.subr.mxu0 0.0
        %2314 = vmatpush1.msra.mxu0 0.0
        %2315 = vmatprep.subr.mxu0 0.0
        %2316 = vmatpush1.msra.mxu0 0.0
        %2317 = vmatprep.subr.mxu0 0.0
        %2318 = vmatpush1.msra.mxu0 0.0
        %2319 = vmatprep.subr.mxu0 0.0
        %2320 = vmatpush1.msra.mxu0 0.0
        %2321 = vmatprep.subr.mxu0 0.0
        %2322 = vmatpush1.msra.mxu0 0.0
        %2323 = vmatprep.subr.mxu0 0.0
        %2324 = vmatpush1.msra.mxu0 0.0
        %2325 = vmatprep.subr.mxu0 0.0
        %2326 = vmatpush1.msra.mxu0 0.0
        %2327 = vmatprep.subr.mxu0 0.0
        %2328 = vmatpush1.msra.mxu0 0.0
        %2329 = vmatprep.subr.mxu0 0.0
        %2330 = vmatpush1.msra.mxu0 0.0
        %2331 = vmatprep.subr.mxu0 0.0
        %2332 = vmatpush1.msra.mxu0 0.0
        %2333 = vmatprep.subr.mxu0 0.0
        %2334 = vmatpush1.msra.mxu0 0.0
        %2335 = vmatprep.subr.mxu0 0.0
        %2336 = vmatpush1.msra.mxu0 0.0
        %2337 = vmatprep.subr.mxu0 0.0
        %2338 = vmatpush1.msra.mxu0 0.0
        %2339 = vmatprep.subr.mxu0 0.0
        %2340 = vmatpush1.msra.mxu0 0.0
        %2341 = vmatprep.subr.mxu0 0.0
        %2342 = vmatpush1.msra.mxu0 0.0
        %2343 = vmatprep.subr.mxu0 0.0
        %2344 = vmatpush1.msra.mxu0 0.0
        %2345 = vmatprep.subr.mxu0 0.0
        %2346 = vmatpush1.msra.mxu0 0.0
        %2347 = vmatprep.subr.mxu0 0.0
        %2348 = vmatpush1.msra.mxu0 0.0
        %2349 = vmatprep.subr.mxu0 0.0
        %2350 = vmatpush1.msra.mxu0 0.0
        %2351 = vmatprep.mubr.f32.mxu0 0.0
        %2352 = vmatmul.mubr.f32.gmra.mrb[0].mxu0 %v2285
        %v2353 = vpop.f32.mrb[0].mxu0
        %v2354 = vadd.f32 0.0, %v2353
        %v2355 = vpop.f32.mrb[0].mxu0
        %2356 = vdwg.mxu0
        %v2357 = vadd.f32 %v1475, %v2126
        %v2358 = vadd.f32 %v1548, %v2202
        %v2359 = vadd.f32 %v1621, %v2278
        %v2360 = vadd.f32 %v1694, %v2354
        %2361 = vrot.lane.b32.xlu0 %v313, 104
        %v2362 = vpop.permute.xlu0 %2361
        %2363 = vrot.lane.b32.xlu0 %v313, 72
        %v2364 = vpop.permute.xlu0 %2363
        %v2365 = vsel %vm391, %v2362, 0
        %v2367 = vsel %vm391, %v2364, 0
        %2369 = vmatprep.subr.mxu0 0.0
        %2370 = vmatpush1.xpose.msra.mxu0 %v2367
        %2371 = vmatprep.subr.mxu0 0.0
        %2372 = vmatpush1.xpose.msra.mxu0 0.0
        %2373 = vmatprep.subr.mxu0 0.0
        %2374 = vmatpush1.xpose.msra.mxu0 0.0
        %2375 = vmatprep.subr.mxu0 0.0
        %2376 = vmatpush1.xpose.msra.mxu0 0.0
        %2377 = vmatprep.subr.mxu0 0.0
        %2378 = vmatpush1.xpose.msra.mxu0 0.0
        %2379 = vmatprep.subr.mxu0 0.0
        %2380 = vmatpush1.xpose.msra.mxu0 0.0
        %2381 = vmatprep.subr.mxu0 0.0
        %2382 = vmatpush1.xpose.msra.mxu0 0.0
        %2383 = vmatprep.subr.mxu0 0.0
        %2384 = vmatpush1.xpose.msra.mxu0 0.0
        %2385 = vmatprep.subr.mxu0 0.0
        %2386 = vmatpush1.xpose.msra.mxu0 0.0
        %2387 = vmatprep.subr.mxu0 0.0
        %2388 = vmatpush1.xpose.msra.mxu0 0.0
        %2389 = vmatprep.subr.mxu0 0.0
        %2390 = vmatpush1.xpose.msra.mxu0 0.0
        %2391 = vmatprep.subr.mxu0 0.0
        %2392 = vmatpush1.xpose.msra.mxu0 0.0
        %2393 = vmatprep.subr.mxu0 0.0
        %2394 = vmatpush1.xpose.msra.mxu0 0.0
        %2395 = vmatprep.subr.mxu0 0.0
        %2396 = vmatpush1.xpose.msra.mxu0 0.0
        %2397 = vmatprep.subr.mxu0 0.0
        %2398 = vmatpush1.xpose.msra.mxu0 0.0
        %2399 = vmatprep.subr.mxu0 0.0
        %2400 = vmatpush1.xpose.msra.mxu0 0.0
        %2401 = vmatprep.subr.mxu0 0.0
        %2402 = vmatpush1.xpose.msra.mxu0 0.0
        %2403 = vmatprep.subr.mxu0 0.0
        %2404 = vmatpush1.xpose.msra.mxu0 0.0
        %2405 = vmatprep.subr.mxu0 0.0
        %2406 = vmatpush1.xpose.msra.mxu0 0.0
        %2407 = vmatprep.subr.mxu0 0.0
        %2408 = vmatpush1.xpose.msra.mxu0 0.0
        %2409 = vmatprep.subr.mxu0 0.0
        %2410 = vmatpush1.xpose.msra.mxu0 0.0
        %2411 = vmatprep.subr.mxu0 0.0
        %2412 = vmatpush1.xpose.msra.mxu0 0.0
        %2413 = vmatprep.subr.mxu0 0.0
        %2414 = vmatpush1.xpose.msra.mxu0 0.0
        %2415 = vmatprep.subr.mxu0 0.0
        %2416 = vmatpush1.xpose.msra.mxu0 0.0
        %2417 = vmatprep.subr.mxu0 0.0
        %2418 = vmatpush1.xpose.msra.mxu0 0.0
        %2419 = vmatprep.subr.mxu0 0.0
        %2420 = vmatpush1.xpose.msra.mxu0 0.0
        %2421 = vmatprep.subr.mxu0 0.0
        %2422 = vmatpush1.xpose.msra.mxu0 0.0
        %2423 = vmatprep.subr.mxu0 0.0
        %2424 = vmatpush1.xpose.msra.mxu0 0.0
        %2425 = vmatprep.subr.mxu0 0.0
        %2426 = vmatpush1.xpose.msra.mxu0 0.0
        %2427 = vmatprep.subr.mxu0 0.0
        %2428 = vmatpush1.xpose.msra.mxu0 0.0
        %2429 = vmatprep.subr.mxu0 0.0
        %2430 = vmatpush1.xpose.msra.mxu0 0.0
        %2431 = vmatprep.subr.mxu0 0.0
        %2432 = vmatpush1.xpose.msra.mxu0 0.0
        %2433 = vmatprep.mubr.f32.mxu0 0.0
        %2434 = vmatmul.mubr.f32.gmra.mrb[0].mxu0 %v2365
        %v2435 = vpop.f32.mrb[0].mxu0
        %v2436 = vadd.f32 0.0, %v2435
        %v2437 = vpop.f32.mrb[0].mxu0
        %2438 = vdwg.mxu0
        %2439 = vrot.lane.b32.xlu0 %v316, 104
        %v2440 = vpop.permute.xlu0 %2439
        %2441 = vrot.lane.b32.xlu0 %v316, 72
        %v2442 = vpop.permute.xlu0 %2441
        %v2443 = vsel %vm391, %v2440, 0
        %v2445 = vsel %vm391, %v2442, 0
        %2447 = vmatprep.subr.mxu0 0.0
        %2448 = vmatpush1.xpose.msra.mxu0 %v2445
        %2449 = vmatprep.subr.mxu0 0.0
        %2450 = vmatpush1.xpose.msra.mxu0 0.0
        %2451 = vmatprep.subr.mxu0 0.0
        %2452 = vmatpush1.xpose.msra.mxu0 0.0
        %2453 = vmatprep.subr.mxu0 0.0
        %2454 = vmatpush1.xpose.msra.mxu0 0.0
        %2455 = vmatprep.subr.mxu0 0.0
        %2456 = vmatpush1.xpose.msra.mxu0 0.0
        %2457 = vmatprep.subr.mxu0 0.0
        %2458 = vmatpush1.xpose.msra.mxu0 0.0
        %2459 = vmatprep.subr.mxu0 0.0
        %2460 = vmatpush1.xpose.msra.mxu0 0.0
        %2461 = vmatprep.subr.mxu0 0.0
        %2462 = vmatpush1.xpose.msra.mxu0 0.0
        %2463 = vmatprep.subr.mxu0 0.0
        %2464 = vmatpush1.xpose.msra.mxu0 0.0
        %2465 = vmatprep.subr.mxu0 0.0
        %2466 = vmatpush1.xpose.msra.mxu0 0.0
        %2467 = vmatprep.subr.mxu0 0.0
        %2468 = vmatpush1.xpose.msra.mxu0 0.0
        %2469 = vmatprep.subr.mxu0 0.0
        %2470 = vmatpush1.xpose.msra.mxu0 0.0
        %2471 = vmatprep.subr.mxu0 0.0
        %2472 = vmatpush1.xpose.msra.mxu0 0.0
        %2473 = vmatprep.subr.mxu0 0.0
        %2474 = vmatpush1.xpose.msra.mxu0 0.0
        %2475 = vmatprep.subr.mxu0 0.0
        %2476 = vmatpush1.xpose.msra.mxu0 0.0
        %2477 = vmatprep.subr.mxu0 0.0
        %2478 = vmatpush1.xpose.msra.mxu0 0.0
        %2479 = vmatprep.subr.mxu0 0.0
        %2480 = vmatpush1.xpose.msra.mxu0 0.0
        %2481 = vmatprep.subr.mxu0 0.0
        %2482 = vmatpush1.xpose.msra.mxu0 0.0
        %2483 = vmatprep.subr.mxu0 0.0
        %2484 = vmatpush1.xpose.msra.mxu0 0.0
        %2485 = vmatprep.subr.mxu0 0.0
        %2486 = vmatpush1.xpose.msra.mxu0 0.0
        %2487 = vmatprep.subr.mxu0 0.0
        %2488 = vmatpush1.xpose.msra.mxu0 0.0
        %2489 = vmatprep.subr.mxu0 0.0
        %2490 = vmatpush1.xpose.msra.mxu0 0.0
        %2491 = vmatprep.subr.mxu0 0.0
        %2492 = vmatpush1.xpose.msra.mxu0 0.0
        %2493 = vmatprep.subr.mxu0 0.0
        %2494 = vmatpush1.xpose.msra.mxu0 0.0
        %2495 = vmatprep.subr.mxu0 0.0
        %2496 = vmatpush1.xpose.msra.mxu0 0.0
        %2497 = vmatprep.subr.mxu0 0.0
        %2498 = vmatpush1.xpose.msra.mxu0 0.0
        %2499 = vmatprep.subr.mxu0 0.0
        %2500 = vmatpush1.xpose.msra.mxu0 0.0
        %2501 = vmatprep.subr.mxu0 0.0
        %2502 = vmatpush1.xpose.msra.mxu0 0.0
        %2503 = vmatprep.subr.mxu0 0.0
        %2504 = vmatpush1.xpose.msra.mxu0 0.0
        %2505 = vmatprep.subr.mxu0 0.0
        %2506 = vmatpush1.xpose.msra.mxu0 0.0
        %2507 = vmatprep.subr.mxu0 0.0
        %2508 = vmatpush1.xpose.msra.mxu0 0.0
        %2509 = vmatprep.subr.mxu0 0.0
        %2510 = vmatpush1.xpose.msra.mxu0 0.0
        %2511 = vmatprep.mubr.f32.mxu0 0.0
        %2512 = vmatmul.mubr.f32.gmra.mrb[0].mxu0 %v2443
        %v2513 = vpop.f32.mrb[0].mxu0
        %v2514 = vadd.f32 0.0, %v2513
        %v2515 = vpop.f32.mrb[0].mxu0
        %2516 = vdwg.mxu0
        %2517 = vrot.lane.b32.xlu0 %v321, 104
        %v2518 = vpop.permute.xlu0 %2517
        %2519 = vrot.lane.b32.xlu0 %v321, 72
        %v2520 = vpop.permute.xlu0 %2519
        %v2521 = vsel %vm391, %v2518, 0
        %v2523 = vsel %vm391, %v2520, 0
        %2525 = vmatprep.subr.mxu0 0.0
        %2526 = vmatpush1.xpose.msra.mxu0 %v2523
        %2527 = vmatprep.subr.mxu0 0.0
        %2528 = vmatpush1.xpose.msra.mxu0 0.0
        %2529 = vmatprep.subr.mxu0 0.0
        %2530 = vmatpush1.xpose.msra.mxu0 0.0
        %2531 = vmatprep.subr.mxu0 0.0
        %2532 = vmatpush1.xpose.msra.mxu0 0.0
        %2533 = vmatprep.subr.mxu0 0.0
        %2534 = vmatpush1.xpose.msra.mxu0 0.0
        %2535 = vmatprep.subr.mxu0 0.0
        %2536 = vmatpush1.xpose.msra.mxu0 0.0
        %2537 = vmatprep.subr.mxu0 0.0
        %2538 = vmatpush1.xpose.msra.mxu0 0.0
        %2539 = vmatprep.subr.mxu0 0.0
        %2540 = vmatpush1.xpose.msra.mxu0 0.0
        %2541 = vmatprep.subr.mxu0 0.0
        %2542 = vmatpush1.xpose.msra.mxu0 0.0
        %2543 = vmatprep.subr.mxu0 0.0
        %2544 = vmatpush1.xpose.msra.mxu0 0.0
        %2545 = vmatprep.subr.mxu0 0.0
        %2546 = vmatpush1.xpose.msra.mxu0 0.0
        %2547 = vmatprep.subr.mxu0 0.0
        %2548 = vmatpush1.xpose.msra.mxu0 0.0
        %2549 = vmatprep.subr.mxu0 0.0
        %2550 = vmatpush1.xpose.msra.mxu0 0.0
        %2551 = vmatprep.subr.mxu0 0.0
        %2552 = vmatpush1.xpose.msra.mxu0 0.0
        %2553 = vmatprep.subr.mxu0 0.0
        %2554 = vmatpush1.xpose.msra.mxu0 0.0
        %2555 = vmatprep.subr.mxu0 0.0
        %2556 = vmatpush1.xpose.msra.mxu0 0.0
        %2557 = vmatprep.subr.mxu0 0.0
        %2558 = vmatpush1.xpose.msra.mxu0 0.0
        %2559 = vmatprep.subr.mxu0 0.0
        %2560 = vmatpush1.xpose.msra.mxu0 0.0
        %2561 = vmatprep.subr.mxu0 0.0
        %2562 = vmatpush1.xpose.msra.mxu0 0.0
        %2563 = vmatprep.subr.mxu0 0.0
        %2564 = vmatpush1.xpose.msra.mxu0 0.0
        %2565 = vmatprep.subr.mxu0 0.0
        %2566 = vmatpush1.xpose.msra.mxu0 0.0
        %2567 = vmatprep.subr.mxu0 0.0
        %2568 = vmatpush1.xpose.msra.mxu0 0.0
        %2569 = vmatprep.subr.mxu0 0.0
        %2570 = vmatpush1.xpose.msra.mxu0 0.0
        %2571 = vmatprep.subr.mxu0 0.0
        %2572 = vmatpush1.xpose.msra.mxu0 0.0
        %2573 = vmatprep.subr.mxu0 0.0
        %2574 = vmatpush1.xpose.msra.mxu0 0.0
        %2575 = vmatprep.subr.mxu0 0.0
        %2576 = vmatpush1.xpose.msra.mxu0 0.0
        %2577 = vmatprep.subr.mxu0 0.0
        %2578 = vmatpush1.xpose.msra.mxu0 0.0
        %2579 = vmatprep.subr.mxu0 0.0
        %2580 = vmatpush1.xpose.msra.mxu0 0.0
        %2581 = vmatprep.subr.mxu0 0.0
        %2582 = vmatpush1.xpose.msra.mxu0 0.0
        %2583 = vmatprep.subr.mxu0 0.0
        %2584 = vmatpush1.xpose.msra.mxu0 0.0
        %2585 = vmatprep.subr.mxu0 0.0
        %2586 = vmatpush1.xpose.msra.mxu0 0.0
        %2587 = vmatprep.subr.mxu0 0.0
        %2588 = vmatpush1.xpose.msra.mxu0 0.0
        %2589 = vmatprep.mubr.f32.mxu0 0.0
        %2590 = vmatmul.mubr.f32.gmra.mrb[0].mxu0 %v2521
        %v2591 = vpop.f32.mrb[0].mxu0
        %v2592 = vadd.f32 0.0, %v2591
        %v2593 = vpop.f32.mrb[0].mxu0
        %2594 = vdwg.mxu0
        %2595 = vrot.lane.b32.xlu0 %v324, 104
        %v2596 = vpop.permute.xlu0 %2595
        %2597 = vrot.lane.b32.xlu0 %v324, 72
        %v2598 = vpop.permute.xlu0 %2597
        %v2599 = vsel %vm391, %v2596, 0
        %v2601 = vsel %vm391, %v2598, 0
        %2603 = vmatprep.subr.mxu0 0.0
        %2604 = vmatpush1.xpose.msra.mxu0 %v2601
        %2605 = vmatprep.subr.mxu0 0.0
        %2606 = vmatpush1.xpose.msra.mxu0 0.0
        %2607 = vmatprep.subr.mxu0 0.0
        %2608 = vmatpush1.xpose.msra.mxu0 0.0
        %2609 = vmatprep.subr.mxu0 0.0
        %2610 = vmatpush1.xpose.msra.mxu0 0.0
        %2611 = vmatprep.subr.mxu0 0.0
        %2612 = vmatpush1.xpose.msra.mxu0 0.0
        %2613 = vmatprep.subr.mxu0 0.0
        %2614 = vmatpush1.xpose.msra.mxu0 0.0
        %2615 = vmatprep.subr.mxu0 0.0
        %2616 = vmatpush1.xpose.msra.mxu0 0.0
        %2617 = vmatprep.subr.mxu0 0.0
        %2618 = vmatpush1.xpose.msra.mxu0 0.0
        %2619 = vmatprep.subr.mxu0 0.0
        %2620 = vmatpush1.xpose.msra.mxu0 0.0
        %2621 = vmatprep.subr.mxu0 0.0
        %2622 = vmatpush1.xpose.msra.mxu0 0.0
        %2623 = vmatprep.subr.mxu0 0.0
        %2624 = vmatpush1.xpose.msra.mxu0 0.0
        %2625 = vmatprep.subr.mxu0 0.0
        %2626 = vmatpush1.xpose.msra.mxu0 0.0
        %2627 = vmatprep.subr.mxu0 0.0
        %2628 = vmatpush1.xpose.msra.mxu0 0.0
        %2629 = vmatprep.subr.mxu0 0.0
        %2630 = vmatpush1.xpose.msra.mxu0 0.0
        %2631 = vmatprep.subr.mxu0 0.0
        %2632 = vmatpush1.xpose.msra.mxu0 0.0
        %2633 = vmatprep.subr.mxu0 0.0
        %2634 = vmatpush1.xpose.msra.mxu0 0.0
        %2635 = vmatprep.subr.mxu0 0.0
        %2636 = vmatpush1.xpose.msra.mxu0 0.0
        %2637 = vmatprep.subr.mxu0 0.0
        %2638 = vmatpush1.xpose.msra.mxu0 0.0
        %2639 = vmatprep.subr.mxu0 0.0
        %2640 = vmatpush1.xpose.msra.mxu0 0.0
        %2641 = vmatprep.subr.mxu0 0.0
        %2642 = vmatpush1.xpose.msra.mxu0 0.0
        %2643 = vmatprep.subr.mxu0 0.0
        %2644 = vmatpush1.xpose.msra.mxu0 0.0
        %2645 = vmatprep.subr.mxu0 0.0
        %2646 = vmatpush1.xpose.msra.mxu0 0.0
        %2647 = vmatprep.subr.mxu0 0.0
        %2648 = vmatpush1.xpose.msra.mxu0 0.0
        %2649 = vmatprep.subr.mxu0 0.0
        %2650 = vmatpush1.xpose.msra.mxu0 0.0
        %2651 = vmatprep.subr.mxu0 0.0
        %2652 = vmatpush1.xpose.msra.mxu0 0.0
        %2653 = vmatprep.subr.mxu0 0.0
        %2654 = vmatpush1.xpose.msra.mxu0 0.0
        %2655 = vmatprep.subr.mxu0 0.0
        %2656 = vmatpush1.xpose.msra.mxu0 0.0
        %2657 = vmatprep.subr.mxu0 0.0
        %2658 = vmatpush1.xpose.msra.mxu0 0.0
        %2659 = vmatprep.subr.mxu0 0.0
        %2660 = vmatpush1.xpose.msra.mxu0 0.0
        %2661 = vmatprep.subr.mxu0 0.0
        %2662 = vmatpush1.xpose.msra.mxu0 0.0
        %2663 = vmatprep.subr.mxu0 0.0
        %2664 = vmatpush1.xpose.msra.mxu0 0.0
        %2665 = vmatprep.subr.mxu0 0.0
        %2666 = vmatpush1.xpose.msra.mxu0 0.0
        %2667 = vmatprep.mubr.f32.mxu0 0.0
        %2668 = vmatmul.mubr.f32.gmra.mrb[0].mxu0 %v2599
        %v2669 = vpop.f32.mrb[0].mxu0
        %v2670 = vadd.f32 0.0, %v2669
        %v2671 = vpop.f32.mrb[0].mxu0
        %2672 = vdwg.mxu0
        %v2673 = vsel %vm391, %v2436, -inf
        %2674 = vmax.xlane.f32.xlu0 %v2673
        %v2675 = vpop.xlane.xlu0 %2674
        %v2676 = vsel %vm391, %v2514, -inf
        %2677 = vmax.xlane.f32.xlu0 %v2676
        %v2678 = vpop.xlane.xlu0 %2677
        %v2679 = vsel %vm391, %v2592, -inf
        %2680 = vmax.xlane.f32.xlu0 %v2679
        %v2681 = vpop.xlane.xlu0 %2680
        %v2682 = vsel %vm391, %v2670, -inf
        %2683 = vmax.xlane.f32.xlu0 %v2682
        %v2684 = vpop.xlane.xlu0 %2683
        %v2685 = vsub.f32 %v2436, %v2675
        %v2686 = vsub.f32 %v2514, %v2678
        %v2687 = vsub.f32 %v2592, %v2681
        %v2688 = vsub.f32 %v2670, %v2684
        %v2689 = vmul.f32 %v2685, 1.442695
        %v2690 = vpow.pop %v2689
        %v2691 = vmul.f32 %v2686, 1.442695
        %v2692 = vpow.pop %v2691
        %v2693 = vmul.f32 %v2687, 1.442695
        %v2694 = vpow.pop %v2693
        %v2695 = vmul.f32 %v2688, 1.442695
        %v2696 = vpow.pop %v2695
        %v2697 = vsel %vm391, %v2690, 0.0
        %2698 = vadd.xlane.f32.xlu0 %v2697
        %v2699 = vpop.xlane.xlu0 %2698
        %v2700 = vsel %vm391, %v2692, 0.0
        %2701 = vadd.xlane.f32.xlu0 %v2700
        %v2702 = vpop.xlane.xlu0 %2701
        %v2703 = vsel %vm391, %v2694, 0.0
        %2704 = vadd.xlane.f32.xlu0 %v2703
        %v2705 = vpop.xlane.xlu0 %2704
        %v2706 = vsel %vm391, %v2696, 0.0
        %2707 = vadd.xlane.f32.xlu0 %v2706
        %v2708 = vpop.xlane.xlu0 %2707
        %v2709 = vrcp.pop %v2699
        %v2710 = vrcp.pop %v2702
        %v2711 = vrcp.pop %v2705
        %v2712 = vrcp.pop %v2708
        %v2713 = vmul.f32 %v2690, %v2709
        %v2714 = vmul.f32 %v2692, %v2710
        %v2715 = vmul.f32 %v2694, %v2711
        %v2716 = vmul.f32 %v2696, %v2712
        %2717 = vrot.lane.b32.xlu0 %v374, 32
        %v2718 = vpop.permute.xlu0 %2717
        %v2721 = vsel %vm391, %v2713, 0
        %2723 = vmatprep.subr.mxu0 0.0
        %2724 = vmatpush1.msra.mxu0 %v2718
        %2725 = vmatprep.subr.mxu0 0.0
        %2726 = vmatpush1.msra.mxu0 0.0
        %2727 = vmatprep.subr.mxu0 0.0
        %2728 = vmatpush1.msra.mxu0 0.0
        %2729 = vmatprep.subr.mxu0 0.0
        %2730 = vmatpush1.msra.mxu0 0.0
        %2731 = vmatprep.subr.mxu0 0.0
        %2732 = vmatpush1.msra.mxu0 0.0
        %2733 = vmatprep.subr.mxu0 0.0
        %2734 = vmatpush1.msra.mxu0 0.0
        %2735 = vmatprep.subr.mxu0 0.0
        %2736 = vmatpush1.msra.mxu0 0.0
        %2737 = vmatprep.subr.mxu0 0.0
        %2738 = vmatpush1.msra.mxu0 0.0
        %2739 = vmatprep.subr.mxu0 0.0
        %2740 = vmatpush1.msra.mxu0 0.0
        %2741 = vmatprep.subr.mxu0 0.0
        %2742 = vmatpush1.msra.mxu0 0.0
        %2743 = vmatprep.subr.mxu0 0.0
        %2744 = vmatpush1.msra.mxu0 0.0
        %2745 = vmatprep.subr.mxu0 0.0
        %2746 = vmatpush1.msra.mxu0 0.0
        %2747 = vmatprep.subr.mxu0 0.0
        %2748 = vmatpush1.msra.mxu0 0.0
        %2749 = vmatprep.subr.mxu0 0.0
        %2750 = vmatpush1.msra.mxu0 0.0
        %2751 = vmatprep.subr.mxu0 0.0
        %2752 = vmatpush1.msra.mxu0 0.0
        %2753 = vmatprep.subr.mxu0 0.0
        %2754 = vmatpush1.msra.mxu0 0.0
        %2755 = vmatprep.subr.mxu0 0.0
        %2756 = vmatpush1.msra.mxu0 0.0
        %2757 = vmatprep.subr.mxu0 0.0
        %2758 = vmatpush1.msra.mxu0 0.0
        %2759 = vmatprep.subr.mxu0 0.0
        %2760 = vmatpush1.msra.mxu0 0.0
        %2761 = vmatprep.subr.mxu0 0.0
        %2762 = vmatpush1.msra.mxu0 0.0
        %2763 = vmatprep.subr.mxu0 0.0
        %2764 = vmatpush1.msra.mxu0 0.0
        %2765 = vmatprep.subr.mxu0 0.0
        %2766 = vmatpush1.msra.mxu0 0.0
        %2767 = vmatprep.subr.mxu0 0.0
        %2768 = vmatpush1.msra.mxu0 0.0
        %2769 = vmatprep.subr.mxu0 0.0
        %2770 = vmatpush1.msra.mxu0 0.0
        %2771 = vmatprep.subr.mxu0 0.0
        %2772 = vmatpush1.msra.mxu0 0.0
        %2773 = vmatprep.subr.mxu0 0.0
        %2774 = vmatpush1.msra.mxu0 0.0
        %2775 = vmatprep.subr.mxu0 0.0
        %2776 = vmatpush1.msra.mxu0 0.0
        %2777 = vmatprep.subr.mxu0 0.0
        %2778 = vmatpush1.msra.mxu0 0.0
        %2779 = vmatprep.subr.mxu0 0.0
        %2780 = vmatpush1.msra.mxu0 0.0
        %2781 = vmatprep.subr.mxu0 0.0
        %2782 = vmatpush1.msra.mxu0 0.0
        %2783 = vmatprep.subr.mxu0 0.0
        %2784 = vmatpush1.msra.mxu0 0.0
        %2785 = vmatprep.subr.mxu0 0.0
        %2786 = vmatpush1.msra.mxu0 0.0
        %2787 = vmatprep.mubr.f32.mxu0 0.0
        %2788 = vmatmul.mubr.f32.gmra.mrb[0].mxu0 %v2721
        %v2789 = vpop.f32.mrb[0].mxu0
        %v2790 = vadd.f32 0.0, %v2789
        %v2791 = vpop.f32.mrb[0].mxu0
        %2792 = vdwg.mxu0
        %2793 = vrot.lane.b32.xlu0 %v377, 32
        %v2794 = vpop.permute.xlu0 %2793
        %v2797 = vsel %vm391, %v2714, 0
        %2799 = vmatprep.subr.mxu0 0.0
        %2800 = vmatpush1.msra.mxu0 %v2794
        %2801 = vmatprep.subr.mxu0 0.0
        %2802 = vmatpush1.msra.mxu0 0.0
        %2803 = vmatprep.subr.mxu0 0.0
        %2804 = vmatpush1.msra.mxu0 0.0
        %2805 = vmatprep.subr.mxu0 0.0
        %2806 = vmatpush1.msra.mxu0 0.0
        %2807 = vmatprep.subr.mxu0 0.0
        %2808 = vmatpush1.msra.mxu0 0.0
        %2809 = vmatprep.subr.mxu0 0.0
        %2810 = vmatpush1.msra.mxu0 0.0
        %2811 = vmatprep.subr.mxu0 0.0
        %2812 = vmatpush1.msra.mxu0 0.0
        %2813 = vmatprep.subr.mxu0 0.0
        %2814 = vmatpush1.msra.mxu0 0.0
        %2815 = vmatprep.subr.mxu0 0.0
        %2816 = vmatpush1.msra.mxu0 0.0
        %2817 = vmatprep.subr.mxu0 0.0
        %2818 = vmatpush1.msra.mxu0 0.0
        %2819 = vmatprep.subr.mxu0 0.0
        %2820 = vmatpush1.msra.mxu0 0.0
        %2821 = vmatprep.subr.mxu0 0.0
        %2822 = vmatpush1.msra.mxu0 0.0
        %2823 = vmatprep.subr.mxu0 0.0
        %2824 = vmatpush1.msra.mxu0 0.0
        %2825 = vmatprep.subr.mxu0 0.0
        %2826 = vmatpush1.msra.mxu0 0.0
        %2827 = vmatprep.subr.mxu0 0.0
        %2828 = vmatpush1.msra.mxu0 0.0
        %2829 = vmatprep.subr.mxu0 0.0
        %2830 = vmatpush1.msra.mxu0 0.0
        %2831 = vmatprep.subr.mxu0 0.0
        %2832 = vmatpush1.msra.mxu0 0.0
        %2833 = vmatprep.subr.mxu0 0.0
        %2834 = vmatpush1.msra.mxu0 0.0
        %2835 = vmatprep.subr.mxu0 0.0
        %2836 = vmatpush1.msra.mxu0 0.0
        %2837 = vmatprep.subr.mxu0 0.0
        %2838 = vmatpush1.msra.mxu0 0.0
        %2839 = vmatprep.subr.mxu0 0.0
        %2840 = vmatpush1.msra.mxu0 0.0
        %2841 = vmatprep.subr.mxu0 0.0
        %2842 = vmatpush1.msra.mxu0 0.0
        %2843 = vmatprep.subr.mxu0 0.0
        %2844 = vmatpush1.msra.mxu0 0.0
        %2845 = vmatprep.subr.mxu0 0.0
        %2846 = vmatpush1.msra.mxu0 0.0
        %2847 = vmatprep.subr.mxu0 0.0
        %2848 = vmatpush1.msra.mxu0 0.0
        %2849 = vmatprep.subr.mxu0 0.0
        %2850 = vmatpush1.msra.mxu0 0.0
        %2851 = vmatprep.subr.mxu0 0.0
        %2852 = vmatpush1.msra.mxu0 0.0
        %2853 = vmatprep.subr.mxu0 0.0
        %2854 = vmatpush1.msra.mxu0 0.0
        %2855 = vmatprep.subr.mxu0 0.0
        %2856 = vmatpush1.msra.mxu0 0.0
        %2857 = vmatprep.subr.mxu0 0.0
        %2858 = vmatpush1.msra.mxu0 0.0
        %2859 = vmatprep.subr.mxu0 0.0
        %2860 = vmatpush1.msra.mxu0 0.0
        %2861 = vmatprep.subr.mxu0 0.0
        %2862 = vmatpush1.msra.mxu0 0.0
        %2863 = vmatprep.mubr.f32.mxu0 0.0
        %2864 = vmatmul.mubr.f32.gmra.mrb[0].mxu0 %v2797
        %v2865 = vpop.f32.mrb[0].mxu0
        %v2866 = vadd.f32 0.0, %v2865
        %v2867 = vpop.f32.mrb[0].mxu0
        %2868 = vdwg.mxu0
        %2869 = vrot.lane.b32.xlu0 %v382, 32
        %v2870 = vpop.permute.xlu0 %2869
        %v2873 = vsel %vm391, %v2715, 0
        %2875 = vmatprep.subr.mxu0 0.0
        %2876 = vmatpush1.msra.mxu0 %v2870
        %2877 = vmatprep.subr.mxu0 0.0
        %2878 = vmatpush1.msra.mxu0 0.0
        %2879 = vmatprep.subr.mxu0 0.0
        %2880 = vmatpush1.msra.mxu0 0.0
        %2881 = vmatprep.subr.mxu0 0.0
        %2882 = vmatpush1.msra.mxu0 0.0
        %2883 = vmatprep.subr.mxu0 0.0
        %2884 = vmatpush1.msra.mxu0 0.0
        %2885 = vmatprep.subr.mxu0 0.0
        %2886 = vmatpush1.msra.mxu0 0.0
        %2887 = vmatprep.subr.mxu0 0.0
        %2888 = vmatpush1.msra.mxu0 0.0
        %2889 = vmatprep.subr.mxu0 0.0
        %2890 = vmatpush1.msra.mxu0 0.0
        %2891 = vmatprep.subr.mxu0 0.0
        %2892 = vmatpush1.msra.mxu0 0.0
        %2893 = vmatprep.subr.mxu0 0.0
        %2894 = vmatpush1.msra.mxu0 0.0
        %2895 = vmatprep.subr.mxu0 0.0
        %2896 = vmatpush1.msra.mxu0 0.0
        %2897 = vmatprep.subr.mxu0 0.0
        %2898 = vmatpush1.msra.mxu0 0.0
        %2899 = vmatprep.subr.mxu0 0.0
        %2900 = vmatpush1.msra.mxu0 0.0
        %2901 = vmatprep.subr.mxu0 0.0
        %2902 = vmatpush1.msra.mxu0 0.0
        %2903 = vmatprep.subr.mxu0 0.0
        %2904 = vmatpush1.msra.mxu0 0.0
        %2905 = vmatprep.subr.mxu0 0.0
        %2906 = vmatpush1.msra.mxu0 0.0
        %2907 = vmatprep.subr.mxu0 0.0
        %2908 = vmatpush1.msra.mxu0 0.0
        %2909 = vmatprep.subr.mxu0 0.0
        %2910 = vmatpush1.msra.mxu0 0.0
        %2911 = vmatprep.subr.mxu0 0.0
        %2912 = vmatpush1.msra.mxu0 0.0
        %2913 = vmatprep.subr.mxu0 0.0
        %2914 = vmatpush1.msra.mxu0 0.0
        %2915 = vmatprep.subr.mxu0 0.0
        %2916 = vmatpush1.msra.mxu0 0.0
        %2917 = vmatprep.subr.mxu0 0.0
        %2918 = vmatpush1.msra.mxu0 0.0
        %2919 = vmatprep.subr.mxu0 0.0
        %2920 = vmatpush1.msra.mxu0 0.0
        %2921 = vmatprep.subr.mxu0 0.0
        %2922 = vmatpush1.msra.mxu0 0.0
        %2923 = vmatprep.subr.mxu0 0.0
        %2924 = vmatpush1.msra.mxu0 0.0
        %2925 = vmatprep.subr.mxu0 0.0
        %2926 = vmatpush1.msra.mxu0 0.0
        %2927 = vmatprep.subr.mxu0 0.0
        %2928 = vmatpush1.msra.mxu0 0.0
        %2929 = vmatprep.subr.mxu0 0.0
        %2930 = vmatpush1.msra.mxu0 0.0
        %2931 = vmatprep.subr.mxu0 0.0
        %2932 = vmatpush1.msra.mxu0 0.0
        %2933 = vmatprep.subr.mxu0 0.0
        %2934 = vmatpush1.msra.mxu0 0.0
        %2935 = vmatprep.subr.mxu0 0.0
        %2936 = vmatpush1.msra.mxu0 0.0
        %2937 = vmatprep.subr.mxu0 0.0
        %2938 = vmatpush1.msra.mxu0 0.0
        %2939 = vmatprep.mubr.f32.mxu0 0.0
        %2940 = vmatmul.mubr.f32.gmra.mrb[0].mxu0 %v2873
        %v2941 = vpop.f32.mrb[0].mxu0
        %v2942 = vadd.f32 0.0, %v2941
        %v2943 = vpop.f32.mrb[0].mxu0
        %2944 = vdwg.mxu0
        %2945 = vrot.lane.b32.xlu0 %v385, 32
        %v2946 = vpop.permute.xlu0 %2945
        %v2949 = vsel %vm391, %v2716, 0
        %2951 = vmatprep.subr.mxu0 0.0
        %2952 = vmatpush1.msra.mxu0 %v2946
        %2953 = vmatprep.subr.mxu0 0.0
        %2954 = vmatpush1.msra.mxu0 0.0
        %2955 = vmatprep.subr.mxu0 0.0
        %2956 = vmatpush1.msra.mxu0 0.0
        %2957 = vmatprep.subr.mxu0 0.0
        %2958 = vmatpush1.msra.mxu0 0.0
        %2959 = vmatprep.subr.mxu0 0.0
        %2960 = vmatpush1.msra.mxu0 0.0
        %2961 = vmatprep.subr.mxu0 0.0
        %2962 = vmatpush1.msra.mxu0 0.0
        %2963 = vmatprep.subr.mxu0 0.0
        %2964 = vmatpush1.msra.mxu0 0.0
        %2965 = vmatprep.subr.mxu0 0.0
        %2966 = vmatpush1.msra.mxu0 0.0
        %2967 = vmatprep.subr.mxu0 0.0
        %2968 = vmatpush1.msra.mxu0 0.0
        %2969 = vmatprep.subr.mxu0 0.0
        %2970 = vmatpush1.msra.mxu0 0.0
        %2971 = vmatprep.subr.mxu0 0.0
        %2972 = vmatpush1.msra.mxu0 0.0
        %2973 = vmatprep.subr.mxu0 0.0
        %2974 = vmatpush1.msra.mxu0 0.0
        %2975 = vmatprep.subr.mxu0 0.0
        %2976 = vmatpush1.msra.mxu0 0.0
        %2977 = vmatprep.subr.mxu0 0.0
        %2978 = vmatpush1.msra.mxu0 0.0
        %2979 = vmatprep.subr.mxu0 0.0
        %2980 = vmatpush1.msra.mxu0 0.0
        %2981 = vmatprep.subr.mxu0 0.0
        %2982 = vmatpush1.msra.mxu0 0.0
        %2983 = vmatprep.subr.mxu0 0.0
        %2984 = vmatpush1.msra.mxu0 0.0
        %2985 = vmatprep.subr.mxu0 0.0
        %2986 = vmatpush1.msra.mxu0 0.0
        %2987 = vmatprep.subr.mxu0 0.0
        %2988 = vmatpush1.msra.mxu0 0.0
        %2989 = vmatprep.subr.mxu0 0.0
        %2990 = vmatpush1.msra.mxu0 0.0
        %2991 = vmatprep.subr.mxu0 0.0
        %2992 = vmatpush1.msra.mxu0 0.0
        %2993 = vmatprep.subr.mxu0 0.0
        %2994 = vmatpush1.msra.mxu0 0.0
        %2995 = vmatprep.subr.mxu0 0.0
        %2996 = vmatpush1.msra.mxu0 0.0
        %2997 = vmatprep.subr.mxu0 0.0
        %2998 = vmatpush1.msra.mxu0 0.0
        %2999 = vmatprep.subr.mxu0 0.0
        %3000 = vmatpush1.msra.mxu0 0.0
        %3001 = vmatprep.subr.mxu0 0.0
        %3002 = vmatpush1.msra.mxu0 0.0
        %3003 = vmatprep.subr.mxu0 0.0
        %3004 = vmatpush1.msra.mxu0 0.0
        %3005 = vmatprep.subr.mxu0 0.0
        %3006 = vmatpush1.msra.mxu0 0.0
        %3007 = vmatprep.subr.mxu0 0.0
        %3008 = vmatpush1.msra.mxu0 0.0
        %3009 = vmatprep.subr.mxu0 0.0
        %3010 = vmatpush1.msra.mxu0 0.0
        %3011 = vmatprep.subr.mxu0 0.0
        %3012 = vmatpush1.msra.mxu0 0.0
        %3013 = vmatprep.subr.mxu0 0.0
        %3014 = vmatpush1.msra.mxu0 0.0
        %3015 = vmatprep.mubr.f32.mxu0 0.0
        %3016 = vmatmul.mubr.f32.gmra.mrb[0].mxu0 %v2949
        %v3017 = vpop.f32.mrb[0].mxu0
        %v3018 = vadd.f32 0.0, %v3017
        %v3019 = vpop.f32.mrb[0].mxu0
        %3020 = vdwg.mxu0
        %v3021 = vadd.f32 %v2357, %v2790
        %v3022 = vadd.f32 %v2358, %v2866
        %v3023 = vadd.f32 %v2359, %v2942
        %v3024 = vadd.f32 %v2360, %v3018
        %v3025 = vadd.f32 %v3021, %v225
        %v3026 = vadd.f32 %v3022, %v226
        %v3027 = vadd.f32 %v3023, %v227
        %v3028 = vadd.f32 %v3024, %v228
        %v3029 = vsel %vm271, %v3025, 0.0
        %3030 = vadd.xlane.f32.xlu0 %v3029
        %v3031 = vpop.xlane.xlu0 %3030
        %v3032 = vsel %vm271, %v3026, 0.0
        %3033 = vadd.xlane.f32.xlu0 %v3032
        %v3034 = vpop.xlane.xlu0 %3033
        %v3035 = vsel %vm271, %v3027, 0.0
        %3036 = vadd.xlane.f32.xlu0 %v3035
        %v3037 = vpop.xlane.xlu0 %3036
        %v3038 = vsel %vm271, %v3028, 0.0
        %3039 = vadd.xlane.f32.xlu0 %v3038
        %v3040 = vpop.xlane.xlu0 %3039
        %v3041 = vrcp.pop 32.0
        %v3042 = vmul.f32 %v3031, %v3041
        %v3043 = vmul.f32 %v3034, %v3041
        %v3044 = vmul.f32 %v3037, %v3041
        %v3045 = vmul.f32 %v3040, %v3041
        %v3046 = vsub.f32 %v3025, %v3042
        %v3047 = vsub.f32 %v3026, %v3043
        %v3048 = vsub.f32 %v3027, %v3044
        %v3049 = vsub.f32 %v3028, %v3045
        %v3050 = vmul.f32 %v3046, %v3046
        %v3051 = vmul.f32 %v3047, %v3047
        %v3052 = vmul.f32 %v3048, %v3048
        %v3053 = vmul.f32 %v3049, %v3049
        %v3054 = vsel %vm271, %v3050, 0.0
        %3055 = vadd.xlane.f32.xlu0 %v3054
        %v3056 = vpop.xlane.xlu0 %3055
        %v3057 = vsel %vm271, %v3051, 0.0
        %3058 = vadd.xlane.f32.xlu0 %v3057
        %v3059 = vpop.xlane.xlu0 %3058
        %v3060 = vsel %vm271, %v3052, 0.0
        %3061 = vadd.xlane.f32.xlu0 %v3060
        %v3062 = vpop.xlane.xlu0 %3061
        %v3063 = vsel %vm271, %v3053, 0.0
        %3064 = vadd.xlane.f32.xlu0 %v3063
        %v3065 = vpop.xlane.xlu0 %3064
        %v3066 = vmul.f32 %v3056, %v3041
        %v3067 = vmul.f32 %v3059, %v3041
        %v3068 = vmul.f32 %v3062, %v3041
        %v3069 = vmul.f32 %v3065, %v3041
        %v3070 = vadd.f32 %v3066, 1e-05
        %v3071 = vadd.f32 %v3067, 1e-05
        %v3072 = vadd.f32 %v3068, 1e-05
        %v3073 = vadd.f32 %v3069, 1e-05
        %v3074 = vrsqrt.pop %v3070
        %v3075 = vrsqrt.pop %v3071
        %v3076 = vrsqrt.pop %v3072
        %v3077 = vrsqrt.pop %v3073
        %v3078 = vmul.f32 %v3046, %v3074
        %v3079 = vmul.f32 %v3047, %v3075
        %v3080 = vmul.f32 %v3048, %v3076
        %v3081 = vmul.f32 %v3049, %v3077
        %v3082 = vlaneseq
        %v3083 = vshrl.u32 %v3082, 7
        %v3084 = vsub.s32 0, %v3083
        %v3085 = vrot.slane %v255, %v3084
        %v3086 = vmul.f32 %v3078, %v3085
        %v3087 = vmul.f32 %v3079, %v3085
        %v3088 = vmul.f32 %v3080, %v3085
        %v3089 = vmul.f32 %v3081, %v3085
        %v3090 = vlaneseq
        %v3091 = vshrl.u32 %v3090, 7
        %v3092 = vsub.s32 0, %v3091
        %v3093 = vrot.slane %v256, %v3092
        %v3094 = vadd.f32 %v3086, %v3093
        %v3095 = vadd.f32 %v3087, %v3093
        %v3096 = vadd.f32 %v3088, %v3093
        %v3097 = vadd.f32 %v3089, %v3093
        %v3099 = vsel %vm271, %v247, 0
        %v3102 = vsel %vm271, %v248, 0
        %v3105 = vsel %vm271, %v249, 0
        %v3108 = vsel %vm271, %v250, 0
        %v3111 = vsel %vm271, %v251, 0
        %v3114 = vsel %vm271, %v252, 0
        %v3117 = vsel %vm271, %v253, 0
        %v3120 = vsel %vm271, %v254, 0
        %3122 = vmatprep.subr.mxu0 0.0
        %3123 = vmatpush1.msra.mxu0 %v3094
        %3124 = vmatprep.subr.mxu0 0.0
        %3125 = vmatpush1.msra.mxu0 %v3095
        %3126 = vmatprep.subr.mxu0 0.0
        %3127 = vmatpush1.msra.mxu0 %v3096
        %3128 = vmatprep.subr.mxu0 0.0
        %3129 = vmatpush1.msra.mxu0 %v3097
        %3130 = vmatprep.subr.mxu0 0.0
        %3131 = vmatpush1.msra.mxu0 0.0
        %3132 = vmatprep.subr.mxu0 0.0
        %3133 = vmatpush1.msra.mxu0 0.0
        %3134 = vmatprep.subr.mxu0 0.0
        %3135 = vmatpush1.msra.mxu0 0.0
        %3136 = vmatprep.subr.mxu0 0.0
        %3137 = vmatpush1.msra.mxu0 0.0
        %3138 = vmatprep.subr.mxu0 0.0
        %3139 = vmatpush1.msra.mxu0 0.0
        %3140 = vmatprep.subr.mxu0 0.0
        %3141 = vmatpush1.msra.mxu0 0.0
        %3142 = vmatprep.subr.mxu0 0.0
        %3143 = vmatpush1.msra.mxu0 0.0
        %3144 = vmatprep.subr.mxu0 0.0
        %3145 = vmatpush1.msra.mxu0 0.0
        %3146 = vmatprep.subr.mxu0 0.0
        %3147 = vmatpush1.msra.mxu0 0.0
        %3148 = vmatprep.subr.mxu0 0.0
        %3149 = vmatpush1.msra.mxu0 0.0
        %3150 = vmatprep.subr.mxu0 0.0
        %3151 = vmatpush1.msra.mxu0 0.0
        %3152 = vmatprep.subr.mxu0 0.0
        %3153 = vmatpush1.msra.mxu0 0.0
        %3154 = vmatprep.subr.mxu0 0.0
        %3155 = vmatpush1.msra.mxu0 0.0
        %3156 = vmatprep.subr.mxu0 0.0
        %3157 = vmatpush1.msra.mxu0 0.0
        %3158 = vmatprep.subr.mxu0 0.0
        %3159 = vmatpush1.msra.mxu0 0.0
        %3160 = vmatprep.subr.mxu0 0.0
        %3161 = vmatpush1.msra.mxu0 0.0
        %3162 = vmatprep.subr.mxu0 0.0
        %3163 = vmatpush1.msra.mxu0 0.0
        %3164 = vmatprep.subr.mxu0 0.0
        %3165 = vmatpush1.msra.mxu0 0.0
        %3166 = vmatprep.subr.mxu0 0.0
        %3167 = vmatpush1.msra.mxu0 0.0
        %3168 = vmatprep.subr.mxu0 0.0
        %3169 = vmatpush1.msra.mxu0 0.0
        %3170 = vmatprep.subr.mxu0 0.0
        %3171 = vmatpush1.msra.mxu0 0.0
        %3172 = vmatprep.subr.mxu0 0.0
        %3173 = vmatpush1.msra.mxu0 0.0
        %3174 = vmatprep.subr.mxu0 0.0
        %3175 = vmatpush1.msra.mxu0 0.0
        %3176 = vmatprep.subr.mxu0 0.0
        %3177 = vmatpush1.msra.mxu0 0.0
        %3178 = vmatprep.subr.mxu0 0.0
        %3179 = vmatpush1.msra.mxu0 0.0
        %3180 = vmatprep.subr.mxu0 0.0
        %3181 = vmatpush1.msra.mxu0 0.0
        %3182 = vmatprep.subr.mxu0 0.0
        %3183 = vmatpush1.msra.mxu0 0.0
        %3184 = vmatprep.subr.mxu0 0.0
        %3185 = vmatpush1.msra.mxu0 0.0
        %3186 = vmatprep.mubr.f32.mxu0 0.0
        %3187 = vmatmul.mubr.f32.gmra.mrb[0].mxu0 %v3099
        %v3188 = vpop.f32.mrb[0].mxu0
        %v3189 = vadd.f32 0.0, %v3188
        %v3190 = vpop.f32.mrb[0].mxu0
        %3191 = vmatprep.mubr.f32.mxu0 0.0
        %3192 = vmatmul.mubr.f32.gmra.mrb[0].mxu0 %v3102
        %v3193 = vpop.f32.mrb[0].mxu0
        %v3194 = vadd.f32 0.0, %v3193
        %v3195 = vpop.f32.mrb[0].mxu0
        %3196 = vmatprep.mubr.f32.mxu0 0.0
        %3197 = vmatmul.mubr.f32.gmra.mrb[0].mxu0 %v3105
        %v3198 = vpop.f32.mrb[0].mxu0
        %v3199 = vadd.f32 0.0, %v3198
        %v3200 = vpop.f32.mrb[0].mxu0
        %3201 = vmatprep.mubr.f32.mxu0 0.0
        %3202 = vmatmul.mubr.f32.gmra.mrb[0].mxu0 %v3108
        %v3203 = vpop.f32.mrb[0].mxu0
        %v3204 = vadd.f32 0.0, %v3203
        %v3205 = vpop.f32.mrb[0].mxu0
        %3206 = vmatprep.mubr.f32.mxu0 0.0
        %3207 = vmatmul.mubr.f32.gmra.mrb[0].mxu0 %v3111
        %v3208 = vpop.f32.mrb[0].mxu0
        %v3209 = vadd.f32 0.0, %v3208
        %v3210 = vpop.f32.mrb[0].mxu0
        %3211 = vmatprep.mubr.f32.mxu0 0.0
        %3212 = vmatmul.mubr.f32.gmra.mrb[0].mxu0 %v3114
        %v3213 = vpop.f32.mrb[0].mxu0
        %v3214 = vadd.f32 0.0, %v3213
        %v3215 = vpop.f32.mrb[0].mxu0
        %3216 = vmatprep.mubr.f32.mxu0 0.0
        %3217 = vmatmul.mubr.f32.gmra.mrb[0].mxu0 %v3117
        %v3218 = vpop.f32.mrb[0].mxu0
        %v3219 = vadd.f32 0.0, %v3218
        %v3220 = vpop.f32.mrb[0].mxu0
        %3221 = vmatprep.mubr.f32.mxu0 0.0
        %3222 = vmatmul.mubr.f32.gmra.mrb[0].mxu0 %v3120
        %v3223 = vpop.f32.mrb[0].mxu0
        %v3224 = vadd.f32 0.0, %v3223
        %v3225 = vpop.f32.mrb[0].mxu0
        %3226 = vdwg.mxu0
        %v3227 = vpack.c.bf16 %v3194, %v3189
        %v3228 = vpack.c.bf16 %v3204, %v3199
        %v3229 = vpack.c.bf16 %v3214, %v3209
        %v3230 = vpack.c.bf16 %v3224, %v3219
        %v3231 = vlaneseq
        %v3232 = vshrl.u32 %v3231, 7
        %v3233 = vsub.s32 0, %v3232
        %v3234 = vrot.slane %v257, %v3233
        %v3239 = vunpack.c.l.b16 %v239
        %v3240 = vunpack.c.l.b16 %v240
        %v3241 = vunpack.c.l.b16 %v241
        %v3242 = vunpack.c.l.b16 %v242
        %v3243 = vpack.c.b16 %v3240, %v3239
        %v3244 = vpack.c.b16 %v3242, %v3241
        %v3248 = vsel %vm271, %v3227, 0
        %v3251 = vsel %vm271, %v3228, 0
        %v3254 = vsel %vm271, %v3229, 0
        %v3257 = vsel %vm271, %v3230, 0
        %3259 = vmatprep.subr.bf16.mxu0 0
        %3260 = vmatpush1.bf16.msra.mxu0 %v3243
        %3261 = vmatprep.subr.bf16.mxu0 0
        %3262 = vmatpush1.bf16.msra.mxu0 %v3244
        %3263 = vmatprep.subr.bf16.mxu0 0
        %3264 = vmatpush1.bf16.msra.mxu0 0
        %3265 = vmatprep.subr.bf16.mxu0 0
        %3266 = vmatpush1.bf16.msra.mxu0 0
        %3267 = vmatprep.subr.bf16.mxu0 0
        %3268 = vmatpush1.bf16.msra.mxu0 0
        %3269 = vmatprep.subr.bf16.mxu0 0
        %3270 = vmatpush1.bf16.msra.mxu0 0
        %3271 = vmatprep.subr.bf16.mxu0 0
        %3272 = vmatpush1.bf16.msra.mxu0 0
        %3273 = vmatprep.subr.bf16.mxu0 0
        %3274 = vmatpush1.bf16.msra.mxu0 0
        %3275 = vmatprep.subr.bf16.mxu0 0
        %3276 = vmatpush1.bf16.msra.mxu0 0
        %3277 = vmatprep.subr.bf16.mxu0 0
        %3278 = vmatpush1.bf16.msra.mxu0 0
        %3279 = vmatprep.subr.bf16.mxu0 0
        %3280 = vmatpush1.bf16.msra.mxu0 0
        %3281 = vmatprep.subr.bf16.mxu0 0
        %3282 = vmatpush1.bf16.msra.mxu0 0
        %3283 = vmatprep.subr.bf16.mxu0 0
        %3284 = vmatpush1.bf16.msra.mxu0 0
        %3285 = vmatprep.subr.bf16.mxu0 0
        %3286 = vmatpush1.bf16.msra.mxu0 0
        %3287 = vmatprep.subr.bf16.mxu0 0
        %3288 = vmatpush1.bf16.msra.mxu0 0
        %3289 = vmatprep.subr.bf16.mxu0 0
        %3290 = vmatpush1.bf16.msra.mxu0 0
        %3291 = vmatprep.mubr.bf16.mxu0 0
        %3292 = vmatmul.mubr.bf16.gmra.mrb[0].mxu0 %v3248
        %v3293 = vpop.f32.mrb[0].mxu0
        %v3294 = vadd.f32 %v3234, %v3293
        %v3295 = vpop.f32.mrb[0].mxu0
        %v3296 = vpop.f32.mrb[0].mxu0
        %v3297 = vadd.f32 %v3234, %v3296
        %v3298 = vpop.f32.mrb[0].mxu0
        %3299 = vmatprep.mubr.bf16.mxu0 0
        %3300 = vmatmul.mubr.bf16.gmra.mrb[0].mxu0 %v3251
        %v3301 = vpop.f32.mrb[0].mxu0
        %v3302 = vadd.f32 %v3234, %v3301
        %v3303 = vpop.f32.mrb[0].mxu0
        %v3304 = vpop.f32.mrb[0].mxu0
        %v3305 = vadd.f32 %v3234, %v3304
        %v3306 = vpop.f32.mrb[0].mxu0
        %3307 = vmatprep.mubr.bf16.mxu0 0
        %3308 = vmatmul.mubr.bf16.gmra.mrb[0].mxu0 %v3254
        %v3309 = vpop.f32.mrb[0].mxu0
        %v3310 = vadd.f32 %v3234, %v3309
        %v3311 = vpop.f32.mrb[0].mxu0
        %v3312 = vpop.f32.mrb[0].mxu0
        %v3313 = vadd.f32 %v3234, %v3312
        %v3314 = vpop.f32.mrb[0].mxu0
        %3315 = vmatprep.mubr.bf16.mxu0 0
        %3316 = vmatmul.mubr.bf16.gmra.mrb[0].mxu0 %v3257
        %v3317 = vpop.f32.mrb[0].mxu0
        %v3318 = vadd.f32 %v3234, %v3317
        %v3319 = vpop.f32.mrb[0].mxu0
        %v3320 = vpop.f32.mrb[0].mxu0
        %v3321 = vadd.f32 %v3234, %v3320
        %v3322 = vpop.f32.mrb[0].mxu0
        %3323 = vdwg.mxu0
        %v3324 = vtanh.pop %v3294
        %v3325 = vtanh.pop %v3297
        %v3326 = vtanh.pop %v3302
        %v3327 = vtanh.pop %v3305
        %v3328 = vtanh.pop %v3310
        %v3329 = vtanh.pop %v3313
        %v3330 = vtanh.pop %v3318
        %v3331 = vtanh.pop %v3321
        %v3332 = vsel %vm271, %v3324, 0.0
        %3333 = vadd.xlane.f32.xlu0 %v3332
        %v3334 = vpop.xlane.xlu0 %3333
        %v3335 = vsel %vm271, %v3325, 0.0
        %3336 = vadd.xlane.f32.xlu0 %v3335
        %v3337 = vpop.xlane.xlu0 %3336
        %v3338 = vsel %vm271, %v3326, 0.0
        %3339 = vadd.xlane.f32.xlu0 %v3338
        %v3340 = vpop.xlane.xlu0 %3339
        %v3341 = vsel %vm271, %v3327, 0.0
        %3342 = vadd.xlane.f32.xlu0 %v3341
        %v3343 = vpop.xlane.xlu0 %3342
        %v3344 = vsel %vm271, %v3328, 0.0
        %3345 = vadd.xlane.f32.xlu0 %v3344
        %v3346 = vpop.xlane.xlu0 %3345
        %v3347 = vsel %vm271, %v3329, 0.0
        %3348 = vadd.xlane.f32.xlu0 %v3347
        %v3349 = vpop.xlane.xlu0 %3348
        %v3350 = vsel %vm271, %v3330, 0.0
        %3351 = vadd.xlane.f32.xlu0 %v3350
        %v3352 = vpop.xlane.xlu0 %3351
        %v3353 = vsel %vm271, %v3331, 0.0
        %3354 = vadd.xlane.f32.xlu0 %v3353
        %v3355 = vpop.xlane.xlu0 %3354
        %v3356 = vmul.f32 %v3334, %v3041
        %v3357 = vmul.f32 %v3337, %v3041
        %v3358 = vmul.f32 %v3340, %v3041
        %v3359 = vmul.f32 %v3343, %v3041
        %v3360 = vmul.f32 %v3346, %v3041
        %v3361 = vmul.f32 %v3349, %v3041
        %v3362 = vmul.f32 %v3352, %v3041
        %v3363 = vmul.f32 %v3355, %v3041
        %v3364 = vsub.f32 %v3324, %v3356
        %v3365 = vsub.f32 %v3325, %v3357
        %v3366 = vsub.f32 %v3326, %v3358
        %v3367 = vsub.f32 %v3327, %v3359
        %v3368 = vsub.f32 %v3328, %v3360
        %v3369 = vsub.f32 %v3329, %v3361
        %v3370 = vsub.f32 %v3330, %v3362
        %v3371 = vsub.f32 %v3331, %v3363
        %v3372 = vmul.f32 %v3364, %v3364
        %v3373 = vmul.f32 %v3365, %v3365
        %v3374 = vmul.f32 %v3366, %v3366
        %v3375 = vmul.f32 %v3367, %v3367
        %v3376 = vmul.f32 %v3368, %v3368
        %v3377 = vmul.f32 %v3369, %v3369
        %v3378 = vmul.f32 %v3370, %v3370
        %v3379 = vmul.f32 %v3371, %v3371
        %v3380 = vsel %vm271, %v3372, 0.0
        %3381 = vadd.xlane.f32.xlu0 %v3380
        %v3382 = vpop.xlane.xlu0 %3381
        %v3383 = vsel %vm271, %v3373, 0.0
        %3384 = vadd.xlane.f32.xlu0 %v3383
        %v3385 = vpop.xlane.xlu0 %3384
        %v3386 = vsel %vm271, %v3374, 0.0
        %3387 = vadd.xlane.f32.xlu0 %v3386
        %v3388 = vpop.xlane.xlu0 %3387
        %v3389 = vsel %vm271, %v3375, 0.0
        %3390 = vadd.xlane.f32.xlu0 %v3389
        %v3391 = vpop.xlane.xlu0 %3390
        %v3392 = vsel %vm271, %v3376, 0.0
        %3393 = vadd.xlane.f32.xlu0 %v3392
        %v3394 = vpop.xlane.xlu0 %3393
        %v3395 = vsel %vm271, %v3377, 0.0
        %3396 = vadd.xlane.f32.xlu0 %v3395
        %v3397 = vpop.xlane.xlu0 %3396
        %v3398 = vsel %vm271, %v3378, 0.0
        %3399 = vadd.xlane.f32.xlu0 %v3398
        %v3400 = vpop.xlane.xlu0 %3399
        %v3401 = vsel %vm271, %v3379, 0.0
        %3402 = vadd.xlane.f32.xlu0 %v3401
        %v3403 = vpop.xlane.xlu0 %3402
        %v3404 = vmul.f32 %v3382, %v3041
        %v3405 = vmul.f32 %v3385, %v3041
        %v3406 = vmul.f32 %v3388, %v3041
        %v3407 = vmul.f32 %v3391, %v3041
        %v3408 = vmul.f32 %v3394, %v3041
        %v3409 = vmul.f32 %v3397, %v3041
        %v3410 = vmul.f32 %v3400, %v3041
        %v3411 = vmul.f32 %v3403, %v3041
        %v3412 = vadd.f32 %v3404, 1e-05
        %v3413 = vadd.f32 %v3405, 1e-05
        %v3414 = vadd.f32 %v3406, 1e-05
        %v3415 = vadd.f32 %v3407, 1e-05
        %v3416 = vadd.f32 %v3408, 1e-05
        %v3417 = vadd.f32 %v3409, 1e-05
        %v3418 = vadd.f32 %v3410, 1e-05
        %v3419 = vadd.f32 %v3411, 1e-05
        %v3420 = vrsqrt.pop %v3412
        %v3421 = vrsqrt.pop %v3413
        %v3422 = vrsqrt.pop %v3414
        %v3423 = vrsqrt.pop %v3415
        %v3424 = vrsqrt.pop %v3416
        %v3425 = vrsqrt.pop %v3417
        %v3426 = vrsqrt.pop %v3418
        %v3427 = vrsqrt.pop %v3419
        %v3428 = vmul.f32 %v3364, %v3420
        %v3429 = vmul.f32 %v3365, %v3421
        %v3430 = vmul.f32 %v3366, %v3422
        %v3431 = vmul.f32 %v3367, %v3423
        %v3432 = vmul.f32 %v3368, %v3424
        %v3433 = vmul.f32 %v3369, %v3425
        %v3434 = vmul.f32 %v3370, %v3426
        %v3435 = vmul.f32 %v3371, %v3427
        %v3436 = vpack.c.bf16 %v3429, %v3428
        %v3437 = vpack.c.bf16 %v3431, %v3430
        %v3438 = vpack.c.bf16 %v3433, %v3432
        %v3439 = vpack.c.bf16 %v3435, %v3434
        %v3440 = vlaneseq
        %v3441 = vshrl.u32 %v3440, 7
        %v3442 = vsub.s32 0, %v3441
        %v3443 = vrot.slane %v258, %v3442
        %v3448 = vunpack.c.l.b16 %v243
        %v3449 = vunpack.c.l.b16 %v244
        %v3450 = vunpack.c.l.b16 %v245
        %v3451 = vunpack.c.l.b16 %v246
        %v3452 = vpack.c.b16 %v3449, %v3448
        %v3453 = vpack.c.b16 %v3451, %v3450
        %v3457 = vsel %vm271, %v3436, 0
        %v3460 = vsel %vm271, %v3437, 0
        %v3463 = vsel %vm271, %v3438, 0
        %v3466 = vsel %vm271, %v3439, 0
        %3468 = vmatprep.subr.bf16.mxu0 0
        %3469 = vmatpush1.bf16.msra.mxu0 %v3452
        %3470 = vmatprep.subr.bf16.mxu0 0
        %3471 = vmatpush1.bf16.msra.mxu0 %v3453
        %3472 = vmatprep.subr.bf16.mxu0 0
        %3473 = vmatpush1.bf16.msra.mxu0 0
        %3474 = vmatprep.subr.bf16.mxu0 0
        %3475 = vmatpush1.bf16.msra.mxu0 0
        %3476 = vmatprep.subr.bf16.mxu0 0
        %3477 = vmatpush1.bf16.msra.mxu0 0
        %3478 = vmatprep.subr.bf16.mxu0 0
        %3479 = vmatpush1.bf16.msra.mxu0 0
        %3480 = vmatprep.subr.bf16.mxu0 0
        %3481 = vmatpush1.bf16.msra.mxu0 0
        %3482 = vmatprep.subr.bf16.mxu0 0
        %3483 = vmatpush1.bf16.msra.mxu0 0
        %3484 = vmatprep.subr.bf16.mxu0 0
        %3485 = vmatpush1.bf16.msra.mxu0 0
        %3486 = vmatprep.subr.bf16.mxu0 0
        %3487 = vmatpush1.bf16.msra.mxu0 0
        %3488 = vmatprep.subr.bf16.mxu0 0
        %3489 = vmatpush1.bf16.msra.mxu0 0
        %3490 = vmatprep.subr.bf16.mxu0 0
        %3491 = vmatpush1.bf16.msra.mxu0 0
        %3492 = vmatprep.subr.bf16.mxu0 0
        %3493 = vmatpush1.bf16.msra.mxu0 0
        %3494 = vmatprep.subr.bf16.mxu0 0
        %3495 = vmatpush1.bf16.msra.mxu0 0
        %3496 = vmatprep.subr.bf16.mxu0 0
        %3497 = vmatpush1.bf16.msra.mxu0 0
        %3498 = vmatprep.subr.bf16.mxu0 0
        %3499 = vmatpush1.bf16.msra.mxu0 0
        %3500 = vmatprep.mubr.bf16.mxu0 0
        %3501 = vmatmul.mubr.bf16.gmra.mrb[0].mxu0 %v3457
        %v3502 = vpop.f32.mrb[0].mxu0
        %v3503 = vadd.f32 %v3443, %v3502
        %v3504 = vpop.f32.mrb[0].mxu0
        %v3505 = vpop.f32.mrb[0].mxu0
        %v3506 = vadd.f32 %v3443, %v3505
        %v3507 = vpop.f32.mrb[0].mxu0
        %3508 = vmatprep.mubr.bf16.mxu0 0
        %3509 = vmatmul.mubr.bf16.gmra.mrb[0].mxu0 %v3460
        %v3510 = vpop.f32.mrb[0].mxu0
        %v3511 = vadd.f32 %v3443, %v3510
        %v3512 = vpop.f32.mrb[0].mxu0
        %v3513 = vpop.f32.mrb[0].mxu0
        %v3514 = vadd.f32 %v3443, %v3513
        %v3515 = vpop.f32.mrb[0].mxu0
        %3516 = vmatprep.mubr.bf16.mxu0 0
        %3517 = vmatmul.mubr.bf16.gmra.mrb[0].mxu0 %v3463
        %v3518 = vpop.f32.mrb[0].mxu0
        %v3519 = vadd.f32 %v3443, %v3518
        %v3520 = vpop.f32.mrb[0].mxu0
        %v3521 = vpop.f32.mrb[0].mxu0
        %v3522 = vadd.f32 %v3443, %v3521
        %v3523 = vpop.f32.mrb[0].mxu0
        %3524 = vmatprep.mubr.bf16.mxu0 0
        %3525 = vmatmul.mubr.bf16.gmra.mrb[0].mxu0 %v3466
        %v3526 = vpop.f32.mrb[0].mxu0
        %v3527 = vadd.f32 %v3443, %v3526
        %v3528 = vpop.f32.mrb[0].mxu0
        %v3529 = vpop.f32.mrb[0].mxu0
        %v3530 = vadd.f32 %v3443, %v3529
        %v3531 = vpop.f32.mrb[0].mxu0
        %3532 = vdwg.mxu0
        %3533 = vst [vmem:[%s222] sm:$0xff] %v3503
        %3534 = vst [vmem:[%s222 + $0x8] sm:$0xff] %v3506
        %3535 = vst [vmem:[%s222 + $0x10] sm:$0xff] %v3511
        %3536 = vst [vmem:[%s222 + $0x18] sm:$0xff] %v3514
        %3537 = vst [vmem:[%s222 + $0x20] sm:$0xff] %v3519
        %3538 = vst [vmem:[%s222 + $0x28] sm:$0xff] %v3522
        %3539 = vst [vmem:[%s222 + $0x30] sm:$0xff] %v3527
        %3540 = vst [vmem:[%s222 + $0x38] sm:$0xff] %v3530
        %s3541 = smul.u32 4, %s18
        %p3542 = scmp.lt.s32.totalorder %s3541, 7
        %s3543 = scalar_select %p3542, %s3541, 7
        %s3544 = smul.addr %s3543, 2
        %s3545 = smul.addr %s3544, 8
        %s3546 = scalar_lea.vmem %s3, %s3545
        // Predicated region
        $region45: #{dsnet_forward.1} parent=31 // pred_check
          %p3547 = pneg %p104
        $region46: #{dsnet_forward.1} parent=31 // pred_check_branch
          %3549 = sbr.rel (%p3547) target = $region48
        $region47: #{dsnet_forward.1} parent=31 // pred_region
          %s3550 = smul.u32 4, %s18
        $region48: #{dsnet_forward.1} parent=31 // pred_fallthru
          _
      $region32: #{dsnet_forward.1} parent=5 // pred_fallthru
        _
      %p3551 = scmp.le.s32.totalorder 2, %s13
      // Predicated region
      $region49: #{dsnet_forward.1} parent=5 // pred_check
        %p3552 = pneg %p3551
      $region50: #{dsnet_forward.1} parent=5 // pred_check_branch
        %3554 = sbr.rel (%p3552) target = $region52
      $region51: #{dsnet_forward.1} parent=5 // pred_region
        %s3555 = ssub.s32 %s13, 2
        // Predicated region
        $region53: #{dsnet_forward.1} parent=51 // pred_check
          %p3556 = pneg %p110
        $region54: #{dsnet_forward.1} parent=51 // pred_check_branch
          %3558 = sbr.rel (%p3556) target = $region56
        $region55: #{dsnet_forward.1} parent=51 // pred_region
          %s3559 = smul.u32 4, %s19
          %p3560 = scmp.lt.s32.totalorder %s3559, 7
          %s3561 = scalar_select %p3560, %s3559, 7
          %s3562 = smul.addr %s3561, 2
          %s3563 = smul.addr %s3562, 8
          %s3564 = scalar_lea.vmem %s3, %s3563
        $region56: #{dsnet_forward.1} parent=51 // pred_fallthru
          _
      $region52: #{dsnet_forward.1} parent=5 // pred_fallthru
        _
    $region6: #{dsnet_forward.1} parent=1 // loop_footer
      %s17 = sadd.s32 1, %s13
    $region7: #{dsnet_forward.1} parent=1 // loop_footer_branch
      %12 = sbr.rel target = $region3
    $region8: #{dsnet_forward.1} parent=1 // loop_exit
      _
    %3565 = vsyncpa [#allocation3], 1
    %s3566 = scalar_lea.sflag [#allocation3], 1
    %3567 = vsyncpa %s3566, 1
    %3568 = vsyncpa [#allocation5], 1

</llo_original>
